<compile_context>
chip_gen: v7x
topology: tpu7x:2x2x1
jax: 0.10.0
libtpu: 0.0.40
codegen_flags: <defaults>
</compile_context>

<pallas_src>
import math

import jax
import jax.numpy as jnp
from jax.experimental import pallas as pl
from jax.experimental.pallas import tpu as pltpu

# ----------------------------- configuration -------------------------------
SEQ_HIDDEN = 24        # seq_hidden_dim
STRUCT_HIDDEN = 16     # struct_hidden_dim
HIDDEN = 32            # denoiser_config.hidden_dim
NUM_HEADS = 4          # denoiser_config.num_heads
HEAD_DIM = HIDDEN // NUM_HEADS
NUM_LAYERS = 2         # denoiser_config.num_layers
COND_DIM = HIDDEN // 2
FFN_DIM = HIDDEN * 4
LN_EPS = 1e-5
NUM_LN = 3 * NUM_LAYERS + 1          # [sa0, ca0, ffn0, sa1, ca1, ffn1, out]
# dropout = 0 (inference)

# --------------------- packed weight-slab layout (static) -------------------
# w_main: [MAIN_ROWS, 128] bf16 -- every weight sits at lane 0 of an 8-aligned
#         row block.
# w_wide: [NUM_LAYERS*HIDDEN, 256] bf16 -- fused SwiGLU w1|w3 per layer.
# b_slab: [NUM_BIAS, 1, 256] f32 -- one row per bias vector.
O_QKV, O_SAO, O_CAQ, O_CAKV, O_CAO, O_FF2 = 0, 32, 64, 96, 128, 160
LAYER_ROWS = O_FF2 + FFN_DIM                       # 288
R_IN = 0                                           # block-diag [wseq | wstr]
R_LAYER0 = SEQ_HIDDEN + STRUCT_HIDDEN              # 40
R_OP = R_LAYER0 + NUM_LAYERS * LAYER_ROWS          # 616
MAIN_ROWS = R_OP + HIDDEN                          # 648
MAIN_COLS = 128
WIDE_COLS = 2 * FFN_DIM                            # 256
BR_IN = 0
BR_LAYER0 = 1                                      # 7 bias rows per layer
BR_OP = 1 + 7 * NUM_LAYERS                         # 15
NUM_BIAS = BR_OP + 1                               # 16


# ------------------------------ fused kernel --------------------------------
def _make_kernel(have_struct: bool, n_rows: int):
    D, H, DH, F, NL = HIDDEN, NUM_HEADS, HEAD_DIM, FFN_DIM, NUM_LAYERS
    inv_sqrt_dh = 1.0 / math.sqrt(DH)
    bf16 = jnp.bfloat16

    def kernel(*refs):
        if have_struct:
            (feat_ref, add_ref, gamma_ref, beta_ref, gate_ref, amask_ref,
             wmain_ref, wwide_ref, bias_ref, out_ref, cw_ref) = refs
        else:
            (feat_ref, add_ref, gamma_ref, beta_ref, gate_ref, amask_ref,
             wmain_ref, wwide_ref, bias_ref, out_ref) = refs

        def wm(r, rows, cols):                      # bf16 [rows, cols]
            return wmain_ref[pl.ds(r, rows), pl.ds(0, cols)]

        def bias(r, cols):                          # f32 [1, cols]
            return bias_ref[r][:, :cols]

        def mm(x, w):                               # bf16 MXU, f32 accumulate
            return jnp.dot(x.astype(bf16), w, preferred_element_type=jnp.float32)

        def silu(z):
            return z * jax.nn.sigmoid(z)

        def cond_ln(x, idx):
            # gamma/beta precomputed per-row on the host (conditioning hoisted)
            mu = jnp.mean(x, axis=-1, keepdims=True)
            xc = x - mu
            var = jnp.mean(xc * xc, axis=-1, keepdims=True)
            return xc * jax.lax.rsqrt(var + LN_EPS) * gamma_ref[idx] + beta_ref[idx]

        amask = amask_ref[...]                      # [N, N] additive (block-diag + keys)

        # Per-head lane masks, built once and reused by every attention call.
        lane = jax.lax.broadcasted_iota(jnp.int32, (1, D), 1)
        head_mask = [((lane >= h * DH) & (lane < (h + 1) * DH)).astype(jnp.float32)
                     for h in range(H)]

        def mh_attention(q, k, v, exact):
            # q/k/v: [N, D] f32 with heads as contiguous 8-lane groups.
            # Lane-masking q and v per head keeps every MXU operand full width
            # (no sub-128-lane slices, no head concat); per-head outputs land
            # in disjoint lanes and are accumulated into `out`.
            kb = k.astype(bf16)
            out = jnp.zeros((n_rows, D), jnp.float32)
            probs = []
            for h in range(H):
                qh = (q * head_mask[h]).astype(bf16)
                s = jax.lax.dot_general(qh, kb, (((1,), (1,)), ((), ())),
                                        preferred_element_type=jnp.float32)
                s = s * inv_sqrt_dh + amask
                s = s - jnp.max(s, axis=-1, keepdims=True)
                e = jnp.exp(s)
                den = jnp.sum(e, axis=-1, keepdims=True)
                # exact divide for the returned cross-attn weights; approx EUP
                # reciprocal for the purely internal self-attention.
                p = e / den if exact else e * pl.reciprocal(den, approx=True)
                probs.append(p)
                vh = (v * head_mask[h]).astype(bf16)
                out = out + jnp.dot(p.astype(bf16), vh,
                                    preferred_element_type=jnp.float32)
            return out, probs

        # ---- input projection(s): one block-diagonal matmul -> [x | struct] ----
        if have_struct:
            xs = mm(feat_ref[...], wm(R_IN, SEQ_HIDDEN + STRUCT_HIDDEN, 2 * D)) \
                + bias(BR_IN, 2 * D)
            x = xs[:, :D] + add_ref[...]            # + (time_emb + cond_emb) rows
            struct = xs[:, D:]
        else:
            x = mm(feat_ref[...], wm(R_IN, SEQ_HIDDEN, D)) + bias(BR_IN, D) \
                + add_ref[...]

        for l in range(NL):
            rb = R_LAYER0 + l * LAYER_ROWS
            bb = BR_LAYER0 + 7 * l

            # --- self-attention (probs never leave the kernel) ---
            xn = cond_ln(x, 3 * l)
            qkv = mm(xn, wm(rb + O_QKV, D, 3 * D)) + bias(bb + 0, 3 * D)
            attn, _ = mh_attention(qkv[:, :D], qkv[:, D:2 * D], qkv[:, 2 * D:],
                                   exact=False)
            x = mm(attn, wm(rb + O_SAO, D, D)) + bias(bb + 1, D) + x

            # --- cross-modal attention (statically omitted without structure) ---
            if have_struct:
                xn = cond_ln(x, 3 * l + 1)
                qc = mm(xn, wm(rb + O_CAQ, D, D)) + bias(bb + 2, D)
                kv = mm(struct, wm(rb + O_CAKV, D, 2 * D)) + bias(bb + 3, 2 * D)
                attn, probs = mh_attention(qc, kv[:, :D], kv[:, D:], exact=True)
                cw_ref[l] = jnp.concatenate(probs, axis=-1)   # one [N, H*N] store
                x = mm(attn, wm(rb + O_CAO, D, D)) + bias(bb + 4, D) + x

            # --- gated SwiGLU FFN (w1|w3 fused, split is on a vreg boundary) ---
            xn = cond_ln(x, 3 * l + 2)
            h13 = mm(xn, wwide_ref[pl.ds(l * D, D), :]) + bias(bb + 5, 2 * F)
            x = mm(silu(h13[:, :F]) * h13[:, F:], wm(rb + O_FF2, F, D)) \
                + bias(bb + 6, D) + x

        # ---- output norm + conditional gated projection (AF3ConditionalZeroInit) ----
        xn = cond_ln(x, 3 * NL)
        y = mm(xn, wm(R_OP, D, SEQ_HIDDEN)) + bias(BR_OP, SEQ_HIDDEN)
        out_ref[...] = y * gate_ref[...]

    return kernel


# ------------------------------ host-side helpers ----------------------------
def timestep_sinusoid(timesteps, dim):
    half = dim // 2
    freqs = jnp.exp(-math.log(10000.0) * jnp.arange(half, dtype=jnp.float32) / half)
    args = timesteps.astype(jnp.float32)[:, None] * freqs[None, :]
    return jnp.concatenate([jnp.sin(args), jnp.cos(args)], axis=-1)


def _mlp_silu(x, w1, b1, w2, b2):
    h = x @ w1 + b1
    h = h * jax.nn.sigmoid(h)
    return h @ w2 + b2


def structure_aware_denoiser_forward(params, noisy_embeddings, timesteps, attention_mask,
                                     structure_features=None, conditions=None):
    f32 = jnp.float32
    B, L, _ = noisy_embeddings.shape
    N = B * L
    D, C = HIDDEN, COND_DIM
    have_struct = structure_features is not None

    # ---- tiny XLA precompute: every M=1 matmul is hoisted out of the kernel ----
    t_emb = _mlp_silu(timestep_sinusoid(timesteps, D),
                      params["tw1"], params["tb1"], params["tw2"], params["tb2"])   # [B, D]

    if conditions is not None and "peptide_type" in conditions:
        pt = conditions["peptide_type"]
        cond = _mlp_silu(params["adapt_embed"][pt], params["aw1"], params["ab1"],
                         params["aw2"], params["ab2"])                              # [B, C]
        strength = conditions.get("condition_strength", None)
        if strength is not None:
            cond = cond * strength.astype(f32).reshape(B, 1)
        ce = params["cond_embed"][pt]                                               # [B, D]
        # TODO(synk): ConditionEmbedding's training-time classifier-free label
        # dropout (p=0.1) is a no-op at inference and is omitted.
    else:
        cond = jnp.zeros((B, C), f32)     # conditional LNs fall back to plain affine
        ce = jnp.zeros((B, D), f32)

    # conditional-LN gamma/beta for the 7 norms, expanded to one row per token
    ss = jnp.einsum("bc,kcd->kbd", cond, params["ln_wss"]) + params["ln_bss"][:, None, :]
    gamma_rows = jnp.repeat(params["ln_g"][:, None, :] * (1.0 + ss[..., :D]), L, axis=1)
    beta_rows = jnp.repeat(params["ln_b"][:, None, :] + ss[..., D:], L, axis=1)

    # AF3ConditionalZeroInit output gate, per row
    gate_rows = jnp.repeat(jax.nn.sigmoid(cond @ params["op_wg"] + params["op_bg"]),
                           L, axis=0)                                               # [N, SEQ]

    add_rows = jnp.repeat(t_emb + ce, L, axis=0)                                    # [N, D]

    # additive attention mask: block-diagonal over batch + key padding (-1e9)
    same_batch = jnp.arange(B)[:, None, None, None] == jnp.arange(B)[None, None, :, None]
    keep = same_batch & (attention_mask.astype(f32) > 0.5)[None, None, :, :]
    amask = jnp.broadcast_to(jnp.where(keep, 0.0, -1e9).astype(f32),
                             (B, L, B, L)).reshape(N, N)

    if have_struct:
        feat_rows = jnp.concatenate(
            [noisy_embeddings.reshape(N, SEQ_HIDDEN).astype(f32),
             structure_features.reshape(N, STRUCT_HIDDEN).astype(f32)], axis=-1)
    else:
        feat_rows = noisy_embeddings.reshape(N, SEQ_HIDDEN).astype(f32)

    inputs = [feat_rows, add_rows, gamma_rows, beta_rows, gate_rows, amask,
              params["w_main"], params["w_wide"], params["b_slab"]]

    vmem = pl.BlockSpec(memory_space=pltpu.MemorySpace.VMEM)
    in_specs = [vmem] * len(inputs)

    if have_struct:
        out_shape = (jax.ShapeDtypeStruct((N, SEQ_HIDDEN), f32),
                     jax.ShapeDtypeStruct((NUM_LAYERS, N, NUM_HEADS * N), f32))
        out_specs = (vmem, vmem)
    else:
        out_shape = jax.ShapeDtypeStruct((N, SEQ_HIDDEN), f32)
        out_specs = vmem

    # advisory cost hint so XLA schedules the small host prep around the call
    kn = SEQ_HIDDEN * D + D * SEQ_HIDDEN
    per_layer = D * 3 * D + D * D + D * 2 * FFN_DIM + FFN_DIM * D + NUM_HEADS * 2 * D * N
    if have_struct:
        kn += STRUCT_HIDDEN * D
        per_layer += 2 * D * D + D * 2 * D + NUM_HEADS * 2 * D * N
    flops = 2 * N * (kn + NUM_LAYERS * per_layer)
    transc = NUM_LAYERS * (1 + int(have_struct)) * NUM_HEADS * N * N \
        + NUM_LAYERS * N * FFN_DIM
    bytes_acc = sum(int(a.size) * a.dtype.itemsize for a in inputs) \
        + N * SEQ_HIDDEN * 4 + (NUM_LAYERS * N * NUM_HEADS * N * 4 if have_struct else 0)

    result = pl.pallas_call(
        _make_kernel(have_struct, N),
        out_shape=out_shape,
        in_specs=in_specs,
        out_specs=out_specs,
        cost_estimate=pl.CostEstimate(flops=int(flops), transcendentals=int(transc),
                                      bytes_accessed=int(bytes_acc)),
    )(*inputs)

    if have_struct:
        out_rows, cw = result
        # unpack the folded-batch cross-attn weights -> [B, NL, H, L, L]
        cw = cw.reshape(NUM_LAYERS, B, L, NUM_HEADS, B, L)
        cross = jnp.stack([cw[:, b, :, :, b, :] for b in range(B)], axis=0)
        cross = cross.transpose(0, 1, 3, 2, 4)
    else:
        out_rows, cross = result, None

    return out_rows.reshape(B, L, SEQ_HIDDEN), cross


# --------------------------- parameter construction --------------------------
def init_params(key):
    keys = iter(jax.random.split(key, 64))
    f32 = jnp.float32
    D, C, F, NL = HIDDEN, COND_DIM, FFN_DIM, NUM_LAYERS

    def rnd(shape, scale=0.05):
        return jax.random.normal(next(keys), shape, f32) * scale

    def zeros(shape):
        return jnp.zeros(shape, f32)

    params = {
        # AF3TimestepEmbedding MLP (hoisted to XLA precompute)
        "tw1": rnd((D, D)), "tb1": zeros((D,)),
        "tw2": rnd((D, D)), "tb2": zeros((D,)),
        # AF3AdaptiveConditioning (embedding + SiLU MLP, hoisted)
        "adapt_embed": rnd((4, C)),
        "aw1": rnd((C, C)), "ab1": zeros((C,)),
        "aw2": rnd((C, C)), "ab2": zeros((C,)),
        # ConditionEmbedding
        "cond_embed": rnd((4, D)),
        # 7 conditional LayerNorms: affine + scale/shift projections (hoisted)
        "ln_wss": jnp.stack([rnd((C, 2 * D)) for _ in range(NUM_LN)]),
        "ln_bss": zeros((NUM_LN, 2 * D)),
        "ln_g": jnp.ones((NUM_LN, D), f32),
        "ln_b": zeros((NUM_LN, D)),
        # AF3ConditionalZeroInit gate projection (hoisted)
        "op_wg": rnd((C, SEQ_HIDDEN)), "op_bg": zeros((SEQ_HIDDEN,)),
    }

    # ---- weights used inside the kernel, packed into 3 slabs ----
    wseq, bseq = rnd((SEQ_HIDDEN, D)), zeros((D,))
    wstr, bstr = rnd((STRUCT_HIDDEN, D)), zeros((D,))
    sa_wqkv = [rnd((D, 3 * D)) for _ in range(NL)]
    sa_bqkv = [zeros((3 * D,)) for _ in range(NL)]
    sa_wo = [rnd((D, D)) for _ in range(NL)]
    sa_bo = [zeros((D,)) for _ in range(NL)]
    ca_wq = [rnd((D, D)) for _ in range(NL)]
    ca_bq = [zeros((D,)) for _ in range(NL)]
    ca_wkv = [rnd((D, 2 * D)) for _ in range(NL)]
    ca_bkv = [zeros((2 * D,)) for _ in range(NL)]
    ca_wo = [rnd((D, D)) for _ in range(NL)]
    ca_bo = [zeros((D,)) for _ in range(NL)]
    ff_w13 = [rnd((D, 2 * F)) for _ in range(NL)]
    ff_b13 = [zeros((2 * F,)) for _ in range(NL)]
    ff_w2 = [rnd((F, D)) for _ in range(NL)]
    ff_b2 = [zeros((D,)) for _ in range(NL)]
    # TODO(synk): a faithful AF3ConditionalZeroInit zero-inits op_w/op_b; small
    # deterministic nonzero values are used so the demo output is non-trivial.
    op_w, op_b = rnd((D, SEQ_HIDDEN)), zeros((SEQ_HIDDEN,))

    def place(slab, r, c, mat):
        return slab.at[r:r + mat.shape[0], c:c + mat.shape[1]].set(mat)

    w_main = jnp.zeros((MAIN_ROWS, MAIN_COLS), f32)
    w_wide = jnp.zeros((NL * D, WIDE_COLS), f32)
    b_slab = jnp.zeros((NUM_BIAS, WIDE_COLS), f32)

    # block-diagonal input projection: [noisy | struct] @ W_in -> [x | struct]
    w_main = place(w_main, R_IN, 0, wseq)
    w_main = place(w_main, R_IN + SEQ_HIDDEN, D, wstr)
    b_slab = place(b_slab, BR_IN, 0, jnp.concatenate([bseq, bstr])[None, :])
    for l in range(NL):
        rb, bb = R_LAYER0 + l * LAYER_ROWS, BR_LAYER0 + 7 * l
        w_main = place(w_main, rb + O_QKV, 0, sa_wqkv[l])
        w_main = place(w_main, rb + O_SAO, 0, sa_wo[l])
        w_main = place(w_main, rb + O_CAQ, 0, ca_wq[l])
        w_main = place(w_main, rb + O_CAKV, 0, ca_wkv[l])
        w_main = place(w_main, rb + O_CAO, 0, ca_wo[l])
        w_main = place(w_main, rb + O_FF2, 0, ff_w2[l])
        w_wide = place(w_wide, l * D, 0, ff_w13[l])
        b_slab = place(b_slab, bb + 0, 0, sa_bqkv[l][None, :])
        b_slab = place(b_slab, bb + 1, 0, sa_bo[l][None, :])
        b_slab = place(b_slab, bb + 2, 0, ca_bq[l][None, :])
        b_slab = place(b_slab, bb + 3, 0, ca_bkv[l][None, :])
        b_slab = place(b_slab, bb + 4, 0, ca_bo[l][None, :])
        b_slab = place(b_slab, bb + 5, 0, ff_b13[l][None, :])
        b_slab = place(b_slab, bb + 6, 0, ff_b2[l][None, :])
    w_main = place(w_main, R_OP, 0, op_w)
    b_slab = place(b_slab, BR_OP, 0, op_b[None, :])

    params["w_main"] = w_main.astype(jnp.bfloat16)   # bf16 operands for the MXU
    params["w_wide"] = w_wide.astype(jnp.bfloat16)
    params["b_slab"] = b_slab.reshape(NUM_BIAS, 1, WIDE_COLS)   # f32 bias rows
    return params


# ----------------------------------- main -------------------------------------
if __name__ == "__main__":
    B, L = 2, 8
    root = jax.random.PRNGKey(0)
    k_params, k_noisy, k_struct = jax.random.split(root, 3)

    params = init_params(k_params)
    noisy_embeddings = jax.random.normal(k_noisy, (B, L, SEQ_HIDDEN), jnp.float32)
    timesteps = jnp.array([3, 17], dtype=jnp.int32)
    attention_mask = jnp.ones((B, L), jnp.float32).at[1, 6:].set(0.0)
    structure_features = jax.random.normal(k_struct, (B, L, STRUCT_HIDDEN), jnp.float32)
    conditions = {"peptide_type": jnp.array([1, 3], dtype=jnp.int32)}

    fwd = jax.jit(lambda p, n, t, m, s, c: structure_aware_denoiser_forward(
        p, n, t, m, structure_features=s, conditions=c))
    denoised, cross_w = fwd(params, noisy_embeddings, timesteps, attention_mask,
                            structure_features, conditions)

    jax.block_until_ready(denoised)
    jax.block_until_ready(cross_w)

    assert denoised.shape == (B, L, SEQ_HIDDEN)
    assert cross_w.shape == (B, NUM_LAYERS, NUM_HEADS, L, L)
    print("KERNEL_OK")
</pallas_src>

<mosaic_0001>
module attributes {stable_mosaic.version = 11 : i64} {
  func.func @kernel(%arg0: memref<16x40xf32, #tpu.memory_space<vmem>>, %arg1: memref<16x32xf32, #tpu.memory_space<vmem>>, %arg2: memref<7x16x32xf32, #tpu.memory_space<vmem>>, %arg3: memref<7x16x32xf32, #tpu.memory_space<vmem>>, %arg4: memref<16x24xf32, #tpu.memory_space<vmem>>, %arg5: memref<16x16xf32, #tpu.memory_space<vmem>>, %arg6: memref<648x128xbf16, #tpu.memory_space<vmem>>, %arg7: memref<64x256xbf16, #tpu.memory_space<vmem>>, %arg8: memref<16x1x256xf32, #tpu.memory_space<vmem>>, %arg9: memref<16x24xf32, #tpu.memory_space<vmem>>, %arg10: memref<2x16x64xf32, #tpu.memory_space<vmem>>) attributes {dimension_semantics = [], scalar_prefetch = 0 : i64, scratch_operands = 0 : i64, tpu.core_type = #tpu.core_type<tc>} {
    %c0 = arith.constant 0 : index
    %c0_0 = arith.constant 0 : index
    %0 = vector.load %arg5[%c0, %c0_0] : memref<16x16xf32, #tpu.memory_space<vmem>>, vector<16x16xf32>
    %1 = tpu.iota {dimensions = array<i32: 1>} : vector<1x32xi32>
    %c0_i32 = arith.constant 0 : i32
    %2 = vector.broadcast %c0_i32 : i32 to vector<1x32xi32>
    %3 = arith.cmpi sge, %1, %2 : vector<1x32xi32>
    %c8_i32 = arith.constant 8 : i32
    %4 = vector.broadcast %c8_i32 : i32 to vector<1x32xi32>
    %5 = arith.cmpi slt, %1, %4 : vector<1x32xi32>
    %6 = arith.andi %3, %5 : vector<1x32xi1>
    %7 = arith.extui %6 : vector<1x32xi1> to vector<1x32xi32>
    %8 = arith.sitofp %7 : vector<1x32xi32> to vector<1x32xf32>
    %c8_i32_1 = arith.constant 8 : i32
    %9 = vector.broadcast %c8_i32_1 : i32 to vector<1x32xi32>
    %10 = arith.cmpi sge, %1, %9 : vector<1x32xi32>
    %c16_i32 = arith.constant 16 : i32
    %11 = vector.broadcast %c16_i32 : i32 to vector<1x32xi32>
    %12 = arith.cmpi slt, %1, %11 : vector<1x32xi32>
    %13 = arith.andi %10, %12 : vector<1x32xi1>
    %14 = arith.extui %13 : vector<1x32xi1> to vector<1x32xi32>
    %15 = arith.sitofp %14 : vector<1x32xi32> to vector<1x32xf32>
    %c16_i32_2 = arith.constant 16 : i32
    %16 = vector.broadcast %c16_i32_2 : i32 to vector<1x32xi32>
    %17 = arith.cmpi sge, %1, %16 : vector<1x32xi32>
    %c24_i32 = arith.constant 24 : i32
    %18 = vector.broadcast %c24_i32 : i32 to vector<1x32xi32>
    %19 = arith.cmpi slt, %1, %18 : vector<1x32xi32>
    %20 = arith.andi %17, %19 : vector<1x32xi1>
    %21 = arith.extui %20 : vector<1x32xi1> to vector<1x32xi32>
    %22 = arith.sitofp %21 : vector<1x32xi32> to vector<1x32xf32>
    %c24_i32_3 = arith.constant 24 : i32
    %23 = vector.broadcast %c24_i32_3 : i32 to vector<1x32xi32>
    %24 = arith.cmpi sge, %1, %23 : vector<1x32xi32>
    %c32_i32 = arith.constant 32 : i32
    %25 = vector.broadcast %c32_i32 : i32 to vector<1x32xi32>
    %26 = arith.cmpi slt, %1, %25 : vector<1x32xi32>
    %27 = arith.andi %24, %26 : vector<1x32xi1>
    %28 = arith.extui %27 : vector<1x32xi1> to vector<1x32xi32>
    %29 = arith.sitofp %28 : vector<1x32xi32> to vector<1x32xf32>
    %c0_4 = arith.constant 0 : index
    %c0_5 = arith.constant 0 : index
    %30 = vector.load %arg0[%c0_4, %c0_5] : memref<16x40xf32, #tpu.memory_space<vmem>>, vector<16x40xf32>
    %c0_6 = arith.constant 0 : index
    %c0_7 = arith.constant 0 : index
    %31 = vector.load %arg6[%c0_6, %c0_7] : memref<648x128xbf16, #tpu.memory_space<vmem>>, vector<40x64xbf16>
    %32 = arith.truncf %30 : vector<16x40xf32> to vector<16x40xbf16>
    %cst = arith.constant dense<0.000000e+00> : vector<16x64xf32>
    %33 = tpu.matmul %32, %31, %cst {dimension_numbers = #tpu.dot_dimension_numbers<[1], [0], [0], [1], [0, 0, 1, 1], [], []>} : vector<16x40xbf16>, vector<40x64xbf16>, vector<16x64xf32> -> vector<16x64xf32>
    %c0_8 = arith.constant 0 : index
    %c0_9 = arith.constant 0 : index
    %c0_10 = arith.constant 0 : index
    %34 = vector.load %arg8[%c0_8, %c0_9, %c0_10] : memref<16x1x256xf32, #tpu.memory_space<vmem>>, vector<1x1x256xf32>
    %35 = vector.shape_cast %34 : vector<1x1x256xf32> to vector<1x256xf32>
    %36 = vector.extract_strided_slice %35 {offsets = [0, 0], sizes = [1, 64], strides = [1, 1]} : vector<1x256xf32> to vector<1x64xf32>
    %37 = vector.broadcast %36 : vector<1x64xf32> to vector<16x64xf32>
    %38 = arith.addf %33, %37 : vector<16x64xf32>
    %39 = vector.extract_strided_slice %38 {offsets = [0, 0], sizes = [16, 32], strides = [1, 1]} : vector<16x64xf32> to vector<16x32xf32>
    %c0_11 = arith.constant 0 : index
    %c0_12 = arith.constant 0 : index
    %40 = vector.load %arg1[%c0_11, %c0_12] : memref<16x32xf32, #tpu.memory_space<vmem>>, vector<16x32xf32>
    %41 = arith.addf %39, %40 : vector<16x32xf32>
    %42 = vector.extract_strided_slice %38 {offsets = [0, 32], sizes = [16, 32], strides = [1, 1]} : vector<16x64xf32> to vector<16x32xf32>
    %cst_13 = arith.constant dense<0.000000e+00> : vector<16xf32>
    %43 = vector.multi_reduction <add>, %41, %cst_13 [1] : vector<16x32xf32> to vector<16xf32>
    %44 = vector.shape_cast %43 : vector<16xf32> to vector<16x1xf32>
    %cst_14 = arith.constant 3.200000e+01 : f32
    %45 = vector.broadcast %cst_14 : f32 to vector<16x1xf32>
    %46 = arith.divf %44, %45 : vector<16x1xf32>
    %47 = vector.broadcast %46 : vector<16x1xf32> to vector<16x32xf32>
    %48 = arith.subf %41, %47 : vector<16x32xf32>
    %49 = arith.mulf %48, %48 : vector<16x32xf32>
    %cst_15 = arith.constant dense<0.000000e+00> : vector<16xf32>
    %50 = vector.multi_reduction <add>, %49, %cst_15 [1] : vector<16x32xf32> to vector<16xf32>
    %51 = vector.shape_cast %50 : vector<16xf32> to vector<16x1xf32>
    %cst_16 = arith.constant 3.200000e+01 : f32
    %52 = vector.broadcast %cst_16 : f32 to vector<16x1xf32>
    %53 = arith.divf %51, %52 : vector<16x1xf32>
    %cst_17 = arith.constant 9.99999974E-6 : f32
    %54 = vector.broadcast %cst_17 : f32 to vector<16x1xf32>
    %55 = arith.addf %53, %54 : vector<16x1xf32>
    %56 = math.rsqrt %55 : vector<16x1xf32>
    %57 = vector.broadcast %56 : vector<16x1xf32> to vector<16x32xf32>
    %58 = arith.mulf %48, %57 : vector<16x32xf32>
    %c0_18 = arith.constant 0 : index
    %c0_19 = arith.constant 0 : index
    %c0_20 = arith.constant 0 : index
    %59 = vector.load %arg2[%c0_18, %c0_19, %c0_20] : memref<7x16x32xf32, #tpu.memory_space<vmem>>, vector<1x16x32xf32>
    %60 = vector.shape_cast %59 : vector<1x16x32xf32> to vector<16x32xf32>
    %61 = arith.mulf %58, %60 : vector<16x32xf32>
    %c0_21 = arith.constant 0 : index
    %c0_22 = arith.constant 0 : index
    %c0_23 = arith.constant 0 : index
    %62 = vector.load %arg3[%c0_21, %c0_22, %c0_23] : memref<7x16x32xf32, #tpu.memory_space<vmem>>, vector<1x16x32xf32>
    %63 = vector.shape_cast %62 : vector<1x16x32xf32> to vector<16x32xf32>
    %64 = arith.addf %61, %63 : vector<16x32xf32>
    %c40 = arith.constant 40 : index
    %c0_24 = arith.constant 0 : index
    %65 = vector.load %arg6[%c40, %c0_24] : memref<648x128xbf16, #tpu.memory_space<vmem>>, vector<32x96xbf16>
    %66 = arith.truncf %64 : vector<16x32xf32> to vector<16x32xbf16>
    %cst_25 = arith.constant dense<0.000000e+00> : vector<16x96xf32>
    %67 = tpu.matmul %66, %65, %cst_25 {dimension_numbers = #tpu.dot_dimension_numbers<[1], [0], [0], [1], [0, 0, 1, 1], [], []>} : vector<16x32xbf16>, vector<32x96xbf16>, vector<16x96xf32> -> vector<16x96xf32>
    %c1 = arith.constant 1 : index
    %c0_26 = arith.constant 0 : index
    %c0_27 = arith.constant 0 : index
    %68 = vector.load %arg8[%c1, %c0_26, %c0_27] : memref<16x1x256xf32, #tpu.memory_space<vmem>>, vector<1x1x256xf32>
    %69 = vector.shape_cast %68 : vector<1x1x256xf32> to vector<1x256xf32>
    %70 = vector.extract_strided_slice %69 {offsets = [0, 0], sizes = [1, 96], strides = [1, 1]} : vector<1x256xf32> to vector<1x96xf32>
    %71 = vector.broadcast %70 : vector<1x96xf32> to vector<16x96xf32>
    %72 = arith.addf %67, %71 : vector<16x96xf32>
    %73 = vector.extract_strided_slice %72 {offsets = [0, 0], sizes = [16, 32], strides = [1, 1]} : vector<16x96xf32> to vector<16x32xf32>
    %74 = vector.extract_strided_slice %72 {offsets = [0, 32], sizes = [16, 32], strides = [1, 1]} : vector<16x96xf32> to vector<16x32xf32>
    %75 = vector.extract_strided_slice %72 {offsets = [0, 64], sizes = [16, 32], strides = [1, 1]} : vector<16x96xf32> to vector<16x32xf32>
    %76 = arith.truncf %74 : vector<16x32xf32> to vector<16x32xbf16>
    %cst_28 = arith.constant 0.000000e+00 : f32
    %77 = vector.broadcast %cst_28 : f32 to vector<16x32xf32>
    %78 = vector.broadcast %8 : vector<1x32xf32> to vector<16x32xf32>
    %79 = arith.mulf %73, %78 : vector<16x32xf32>
    %80 = arith.truncf %79 : vector<16x32xf32> to vector<16x32xbf16>
    %cst_29 = arith.constant dense<0.000000e+00> : vector<16x16xf32>
    %81 = tpu.matmul %80, %76, %cst_29 {dimension_numbers = #tpu.dot_dimension_numbers<[1], [1], [0], [0], [0, 0, 1, 0], [], []>} : vector<16x32xbf16>, vector<16x32xbf16>, vector<16x16xf32> -> vector<16x16xf32>
    %cst_30 = arith.constant 0.353553385 : f32
    %82 = vector.broadcast %cst_30 : f32 to vector<16x16xf32>
    %83 = arith.mulf %81, %82 : vector<16x16xf32>
    %84 = arith.addf %83, %0 : vector<16x16xf32>
    %cst_31 = arith.constant dense<0xFF800000> : vector<16xf32>
    %85 = vector.multi_reduction <maximumf>, %84, %cst_31 [1] : vector<16x16xf32> to vector<16xf32>
    %86 = vector.shape_cast %85 : vector<16xf32> to vector<16x1xf32>
    %87 = vector.broadcast %86 : vector<16x1xf32> to vector<16x16xf32>
    %88 = arith.subf %84, %87 : vector<16x16xf32>
    %89 = math.exp %88 : vector<16x16xf32>
    %cst_32 = arith.constant dense<0.000000e+00> : vector<16xf32>
    %90 = vector.multi_reduction <add>, %89, %cst_32 [1] : vector<16x16xf32> to vector<16xf32>
    %91 = vector.shape_cast %90 : vector<16xf32> to vector<16x1xf32>
    %92 = tpu.reciprocal %91 {approx = true} : vector<16x1xf32> -> vector<16x1xf32>
    %93 = vector.broadcast %92 : vector<16x1xf32> to vector<16x16xf32>
    %94 = arith.mulf %89, %93 : vector<16x16xf32>
    %95 = vector.broadcast %8 : vector<1x32xf32> to vector<16x32xf32>
    %96 = arith.mulf %75, %95 : vector<16x32xf32>
    %97 = arith.truncf %96 : vector<16x32xf32> to vector<16x32xbf16>
    %98 = arith.truncf %94 : vector<16x16xf32> to vector<16x16xbf16>
    %cst_33 = arith.constant dense<0.000000e+00> : vector<16x32xf32>
    %99 = tpu.matmul %98, %97, %cst_33 {dimension_numbers = #tpu.dot_dimension_numbers<[1], [0], [0], [1], [0, 0, 1, 1], [], []>} : vector<16x16xbf16>, vector<16x32xbf16>, vector<16x32xf32> -> vector<16x32xf32>
    %100 = arith.addf %77, %99 : vector<16x32xf32>
    %101 = vector.broadcast %15 : vector<1x32xf32> to vector<16x32xf32>
    %102 = arith.mulf %73, %101 : vector<16x32xf32>
    %103 = arith.truncf %102 : vector<16x32xf32> to vector<16x32xbf16>
    %cst_34 = arith.constant dense<0.000000e+00> : vector<16x16xf32>
    %104 = tpu.matmul %103, %76, %cst_34 {dimension_numbers = #tpu.dot_dimension_numbers<[1], [1], [0], [0], [0, 0, 1, 0], [], []>} : vector<16x32xbf16>, vector<16x32xbf16>, vector<16x16xf32> -> vector<16x16xf32>
    %cst_35 = arith.constant 0.353553385 : f32
    %105 = vector.broadcast %cst_35 : f32 to vector<16x16xf32>
    %106 = arith.mulf %104, %105 : vector<16x16xf32>
    %107 = arith.addf %106, %0 : vector<16x16xf32>
    %cst_36 = arith.constant dense<0xFF800000> : vector<16xf32>
    %108 = vector.multi_reduction <maximumf>, %107, %cst_36 [1] : vector<16x16xf32> to vector<16xf32>
    %109 = vector.shape_cast %108 : vector<16xf32> to vector<16x1xf32>
    %110 = vector.broadcast %109 : vector<16x1xf32> to vector<16x16xf32>
    %111 = arith.subf %107, %110 : vector<16x16xf32>
    %112 = math.exp %111 : vector<16x16xf32>
    %cst_37 = arith.constant dense<0.000000e+00> : vector<16xf32>
    %113 = vector.multi_reduction <add>, %112, %cst_37 [1] : vector<16x16xf32> to vector<16xf32>
    %114 = vector.shape_cast %113 : vector<16xf32> to vector<16x1xf32>
    %115 = tpu.reciprocal %114 {approx = true} : vector<16x1xf32> -> vector<16x1xf32>
    %116 = vector.broadcast %115 : vector<16x1xf32> to vector<16x16xf32>
    %117 = arith.mulf %112, %116 : vector<16x16xf32>
    %118 = vector.broadcast %15 : vector<1x32xf32> to vector<16x32xf32>
    %119 = arith.mulf %75, %118 : vector<16x32xf32>
    %120 = arith.truncf %119 : vector<16x32xf32> to vector<16x32xbf16>
    %121 = arith.truncf %117 : vector<16x16xf32> to vector<16x16xbf16>
    %cst_38 = arith.constant dense<0.000000e+00> : vector<16x32xf32>
    %122 = tpu.matmul %121, %120, %cst_38 {dimension_numbers = #tpu.dot_dimension_numbers<[1], [0], [0], [1], [0, 0, 1, 1], [], []>} : vector<16x16xbf16>, vector<16x32xbf16>, vector<16x32xf32> -> vector<16x32xf32>
    %123 = arith.addf %100, %122 : vector<16x32xf32>
    %124 = vector.broadcast %22 : vector<1x32xf32> to vector<16x32xf32>
    %125 = arith.mulf %73, %124 : vector<16x32xf32>
    %126 = arith.truncf %125 : vector<16x32xf32> to vector<16x32xbf16>
    %cst_39 = arith.constant dense<0.000000e+00> : vector<16x16xf32>
    %127 = tpu.matmul %126, %76, %cst_39 {dimension_numbers = #tpu.dot_dimension_numbers<[1], [1], [0], [0], [0, 0, 1, 0], [], []>} : vector<16x32xbf16>, vector<16x32xbf16>, vector<16x16xf32> -> vector<16x16xf32>
    %cst_40 = arith.constant 0.353553385 : f32
    %128 = vector.broadcast %cst_40 : f32 to vector<16x16xf32>
    %129 = arith.mulf %127, %128 : vector<16x16xf32>
    %130 = arith.addf %129, %0 : vector<16x16xf32>
    %cst_41 = arith.constant dense<0xFF800000> : vector<16xf32>
    %131 = vector.multi_reduction <maximumf>, %130, %cst_41 [1] : vector<16x16xf32> to vector<16xf32>
    %132 = vector.shape_cast %131 : vector<16xf32> to vector<16x1xf32>
    %133 = vector.broadcast %132 : vector<16x1xf32> to vector<16x16xf32>
    %134 = arith.subf %130, %133 : vector<16x16xf32>
    %135 = math.exp %134 : vector<16x16xf32>
    %cst_42 = arith.constant dense<0.000000e+00> : vector<16xf32>
    %136 = vector.multi_reduction <add>, %135, %cst_42 [1] : vector<16x16xf32> to vector<16xf32>
    %137 = vector.shape_cast %136 : vector<16xf32> to vector<16x1xf32>
    %138 = tpu.reciprocal %137 {approx = true} : vector<16x1xf32> -> vector<16x1xf32>
    %139 = vector.broadcast %138 : vector<16x1xf32> to vector<16x16xf32>
    %140 = arith.mulf %135, %139 : vector<16x16xf32>
    %141 = vector.broadcast %22 : vector<1x32xf32> to vector<16x32xf32>
    %142 = arith.mulf %75, %141 : vector<16x32xf32>
    %143 = arith.truncf %142 : vector<16x32xf32> to vector<16x32xbf16>
    %144 = arith.truncf %140 : vector<16x16xf32> to vector<16x16xbf16>
    %cst_43 = arith.constant dense<0.000000e+00> : vector<16x32xf32>
    %145 = tpu.matmul %144, %143, %cst_43 {dimension_numbers = #tpu.dot_dimension_numbers<[1], [0], [0], [1], [0, 0, 1, 1], [], []>} : vector<16x16xbf16>, vector<16x32xbf16>, vector<16x32xf32> -> vector<16x32xf32>
    %146 = arith.addf %123, %145 : vector<16x32xf32>
    %147 = vector.broadcast %29 : vector<1x32xf32> to vector<16x32xf32>
    %148 = arith.mulf %73, %147 : vector<16x32xf32>
    %149 = arith.truncf %148 : vector<16x32xf32> to vector<16x32xbf16>
    %cst_44 = arith.constant dense<0.000000e+00> : vector<16x16xf32>
    %150 = tpu.matmul %149, %76, %cst_44 {dimension_numbers = #tpu.dot_dimension_numbers<[1], [1], [0], [0], [0, 0, 1, 0], [], []>} : vector<16x32xbf16>, vector<16x32xbf16>, vector<16x16xf32> -> vector<16x16xf32>
    %cst_45 = arith.constant 0.353553385 : f32
    %151 = vector.broadcast %cst_45 : f32 to vector<16x16xf32>
    %152 = arith.mulf %150, %151 : vector<16x16xf32>
    %153 = arith.addf %152, %0 : vector<16x16xf32>
    %cst_46 = arith.constant dense<0xFF800000> : vector<16xf32>
    %154 = vector.multi_reduction <maximumf>, %153, %cst_46 [1] : vector<16x16xf32> to vector<16xf32>
    %155 = vector.shape_cast %154 : vector<16xf32> to vector<16x1xf32>
    %156 = vector.broadcast %155 : vector<16x1xf32> to vector<16x16xf32>
    %157 = arith.subf %153, %156 : vector<16x16xf32>
    %158 = math.exp %157 : vector<16x16xf32>
    %cst_47 = arith.constant dense<0.000000e+00> : vector<16xf32>
    %159 = vector.multi_reduction <add>, %158, %cst_47 [1] : vector<16x16xf32> to vector<16xf32>
    %160 = vector.shape_cast %159 : vector<16xf32> to vector<16x1xf32>
    %161 = tpu.reciprocal %160 {approx = true} : vector<16x1xf32> -> vector<16x1xf32>
    %162 = vector.broadcast %161 : vector<16x1xf32> to vector<16x16xf32>
    %163 = arith.mulf %158, %162 : vector<16x16xf32>
    %164 = vector.broadcast %29 : vector<1x32xf32> to vector<16x32xf32>
    %165 = arith.mulf %75, %164 : vector<16x32xf32>
    %166 = arith.truncf %165 : vector<16x32xf32> to vector<16x32xbf16>
    %167 = arith.truncf %163 : vector<16x16xf32> to vector<16x16xbf16>
    %cst_48 = arith.constant dense<0.000000e+00> : vector<16x32xf32>
    %168 = tpu.matmul %167, %166, %cst_48 {dimension_numbers = #tpu.dot_dimension_numbers<[1], [0], [0], [1], [0, 0, 1, 1], [], []>} : vector<16x16xbf16>, vector<16x32xbf16>, vector<16x32xf32> -> vector<16x32xf32>
    %169 = arith.addf %146, %168 : vector<16x32xf32>
    %c72 = arith.constant 72 : index
    %c0_49 = arith.constant 0 : index
    %170 = vector.load %arg6[%c72, %c0_49] : memref<648x128xbf16, #tpu.memory_space<vmem>>, vector<32x32xbf16>
    %171 = arith.truncf %169 : vector<16x32xf32> to vector<16x32xbf16>
    %cst_50 = arith.constant dense<0.000000e+00> : vector<16x32xf32>
    %172 = tpu.matmul %171, %170, %cst_50 {dimension_numbers = #tpu.dot_dimension_numbers<[1], [0], [0], [1], [0, 0, 1, 1], [], []>} : vector<16x32xbf16>, vector<32x32xbf16>, vector<16x32xf32> -> vector<16x32xf32>
    %c2 = arith.constant 2 : index
    %c0_51 = arith.constant 0 : index
    %c0_52 = arith.constant 0 : index
    %173 = vector.load %arg8[%c2, %c0_51, %c0_52] : memref<16x1x256xf32, #tpu.memory_space<vmem>>, vector<1x1x256xf32>
    %174 = vector.shape_cast %173 : vector<1x1x256xf32> to vector<1x256xf32>
    %175 = vector.extract_strided_slice %174 {offsets = [0, 0], sizes = [1, 32], strides = [1, 1]} : vector<1x256xf32> to vector<1x32xf32>
    %176 = vector.broadcast %175 : vector<1x32xf32> to vector<16x32xf32>
    %177 = arith.addf %172, %176 : vector<16x32xf32>
    %178 = arith.addf %177, %41 : vector<16x32xf32>
    %cst_53 = arith.constant dense<0.000000e+00> : vector<16xf32>
    %179 = vector.multi_reduction <add>, %178, %cst_53 [1] : vector<16x32xf32> to vector<16xf32>
    %180 = vector.shape_cast %179 : vector<16xf32> to vector<16x1xf32>
    %cst_54 = arith.constant 3.200000e+01 : f32
    %181 = vector.broadcast %cst_54 : f32 to vector<16x1xf32>
    %182 = arith.divf %180, %181 : vector<16x1xf32>
    %183 = vector.broadcast %182 : vector<16x1xf32> to vector<16x32xf32>
    %184 = arith.subf %178, %183 : vector<16x32xf32>
    %185 = arith.mulf %184, %184 : vector<16x32xf32>
    %cst_55 = arith.constant dense<0.000000e+00> : vector<16xf32>
    %186 = vector.multi_reduction <add>, %185, %cst_55 [1] : vector<16x32xf32> to vector<16xf32>
    %187 = vector.shape_cast %186 : vector<16xf32> to vector<16x1xf32>
    %cst_56 = arith.constant 3.200000e+01 : f32
    %188 = vector.broadcast %cst_56 : f32 to vector<16x1xf32>
    %189 = arith.divf %187, %188 : vector<16x1xf32>
    %cst_57 = arith.constant 9.99999974E-6 : f32
    %190 = vector.broadcast %cst_57 : f32 to vector<16x1xf32>
    %191 = arith.addf %189, %190 : vector<16x1xf32>
    %192 = math.rsqrt %191 : vector<16x1xf32>
    %193 = vector.broadcast %192 : vector<16x1xf32> to vector<16x32xf32>
    %194 = arith.mulf %184, %193 : vector<16x32xf32>
    %c1_58 = arith.constant 1 : index
    %c0_59 = arith.constant 0 : index
    %c0_60 = arith.constant 0 : index
    %195 = vector.load %arg2[%c1_58, %c0_59, %c0_60] : memref<7x16x32xf32, #tpu.memory_space<vmem>>, vector<1x16x32xf32>
    %196 = vector.shape_cast %195 : vector<1x16x32xf32> to vector<16x32xf32>
    %197 = arith.mulf %194, %196 : vector<16x32xf32>
    %c1_61 = arith.constant 1 : index
    %c0_62 = arith.constant 0 : index
    %c0_63 = arith.constant 0 : index
    %198 = vector.load %arg3[%c1_61, %c0_62, %c0_63] : memref<7x16x32xf32, #tpu.memory_space<vmem>>, vector<1x16x32xf32>
    %199 = vector.shape_cast %198 : vector<1x16x32xf32> to vector<16x32xf32>
    %200 = arith.addf %197, %199 : vector<16x32xf32>
    %c104 = arith.constant 104 : index
    %c0_64 = arith.constant 0 : index
    %201 = vector.load %arg6[%c104, %c0_64] : memref<648x128xbf16, #tpu.memory_space<vmem>>, vector<32x32xbf16>
    %202 = arith.truncf %200 : vector<16x32xf32> to vector<16x32xbf16>
    %cst_65 = arith.constant dense<0.000000e+00> : vector<16x32xf32>
    %203 = tpu.matmul %202, %201, %cst_65 {dimension_numbers = #tpu.dot_dimension_numbers<[1], [0], [0], [1], [0, 0, 1, 1], [], []>} : vector<16x32xbf16>, vector<32x32xbf16>, vector<16x32xf32> -> vector<16x32xf32>
    %c3 = arith.constant 3 : index
    %c0_66 = arith.constant 0 : index
    %c0_67 = arith.constant 0 : index
    %204 = vector.load %arg8[%c3, %c0_66, %c0_67] : memref<16x1x256xf32, #tpu.memory_space<vmem>>, vector<1x1x256xf32>
    %205 = vector.shape_cast %204 : vector<1x1x256xf32> to vector<1x256xf32>
    %206 = vector.extract_strided_slice %205 {offsets = [0, 0], sizes = [1, 32], strides = [1, 1]} : vector<1x256xf32> to vector<1x32xf32>
    %207 = vector.broadcast %206 : vector<1x32xf32> to vector<16x32xf32>
    %208 = arith.addf %203, %207 : vector<16x32xf32>
    %c136 = arith.constant 136 : index
    %c0_68 = arith.constant 0 : index
    %209 = vector.load %arg6[%c136, %c0_68] : memref<648x128xbf16, #tpu.memory_space<vmem>>, vector<32x64xbf16>
    %210 = arith.truncf %42 : vector<16x32xf32> to vector<16x32xbf16>
    %cst_69 = arith.constant dense<0.000000e+00> : vector<16x64xf32>
    %211 = tpu.matmul %210, %209, %cst_69 {dimension_numbers = #tpu.dot_dimension_numbers<[1], [0], [0], [1], [0, 0, 1, 1], [], []>} : vector<16x32xbf16>, vector<32x64xbf16>, vector<16x64xf32> -> vector<16x64xf32>
    %c4 = arith.constant 4 : index
    %c0_70 = arith.constant 0 : index
    %c0_71 = arith.constant 0 : index
    %212 = vector.load %arg8[%c4, %c0_70, %c0_71] : memref<16x1x256xf32, #tpu.memory_space<vmem>>, vector<1x1x256xf32>
    %213 = vector.shape_cast %212 : vector<1x1x256xf32> to vector<1x256xf32>
    %214 = vector.extract_strided_slice %213 {offsets = [0, 0], sizes = [1, 64], strides = [1, 1]} : vector<1x256xf32> to vector<1x64xf32>
    %215 = vector.broadcast %214 : vector<1x64xf32> to vector<16x64xf32>
    %216 = arith.addf %211, %215 : vector<16x64xf32>
    %217 = vector.extract_strided_slice %216 {offsets = [0, 0], sizes = [16, 32], strides = [1, 1]} : vector<16x64xf32> to vector<16x32xf32>
    %218 = vector.extract_strided_slice %216 {offsets = [0, 32], sizes = [16, 32], strides = [1, 1]} : vector<16x64xf32> to vector<16x32xf32>
    %219 = arith.truncf %217 : vector<16x32xf32> to vector<16x32xbf16>
    %cst_72 = arith.constant 0.000000e+00 : f32
    %220 = vector.broadcast %cst_72 : f32 to vector<16x32xf32>
    %221 = vector.broadcast %8 : vector<1x32xf32> to vector<16x32xf32>
    %222 = arith.mulf %208, %221 : vector<16x32xf32>
    %223 = arith.truncf %222 : vector<16x32xf32> to vector<16x32xbf16>
    %cst_73 = arith.constant dense<0.000000e+00> : vector<16x16xf32>
    %224 = tpu.matmul %223, %219, %cst_73 {dimension_numbers = #tpu.dot_dimension_numbers<[1], [1], [0], [0], [0, 0, 1, 0], [], []>} : vector<16x32xbf16>, vector<16x32xbf16>, vector<16x16xf32> -> vector<16x16xf32>
    %cst_74 = arith.constant 0.353553385 : f32
    %225 = vector.broadcast %cst_74 : f32 to vector<16x16xf32>
    %226 = arith.mulf %224, %225 : vector<16x16xf32>
    %227 = arith.addf %226, %0 : vector<16x16xf32>
    %cst_75 = arith.constant dense<0xFF800000> : vector<16xf32>
    %228 = vector.multi_reduction <maximumf>, %227, %cst_75 [1] : vector<16x16xf32> to vector<16xf32>
    %229 = vector.shape_cast %228 : vector<16xf32> to vector<16x1xf32>
    %230 = vector.broadcast %229 : vector<16x1xf32> to vector<16x16xf32>
    %231 = arith.subf %227, %230 : vector<16x16xf32>
    %232 = math.exp %231 : vector<16x16xf32>
    %cst_76 = arith.constant dense<0.000000e+00> : vector<16xf32>
    %233 = vector.multi_reduction <add>, %232, %cst_76 [1] : vector<16x16xf32> to vector<16xf32>
    %234 = vector.shape_cast %233 : vector<16xf32> to vector<16x1xf32>
    %235 = vector.broadcast %234 : vector<16x1xf32> to vector<16x16xf32>
    %236 = arith.divf %232, %235 : vector<16x16xf32>
    %237 = vector.broadcast %8 : vector<1x32xf32> to vector<16x32xf32>
    %238 = arith.mulf %218, %237 : vector<16x32xf32>
    %239 = arith.truncf %238 : vector<16x32xf32> to vector<16x32xbf16>
    %240 = arith.truncf %236 : vector<16x16xf32> to vector<16x16xbf16>
    %cst_77 = arith.constant dense<0.000000e+00> : vector<16x32xf32>
    %241 = tpu.matmul %240, %239, %cst_77 {dimension_numbers = #tpu.dot_dimension_numbers<[1], [0], [0], [1], [0, 0, 1, 1], [], []>} : vector<16x16xbf16>, vector<16x32xbf16>, vector<16x32xf32> -> vector<16x32xf32>
    %242 = arith.addf %220, %241 : vector<16x32xf32>
    %243 = vector.broadcast %15 : vector<1x32xf32> to vector<16x32xf32>
    %244 = arith.mulf %208, %243 : vector<16x32xf32>
    %245 = arith.truncf %244 : vector<16x32xf32> to vector<16x32xbf16>
    %cst_78 = arith.constant dense<0.000000e+00> : vector<16x16xf32>
    %246 = tpu.matmul %245, %219, %cst_78 {dimension_numbers = #tpu.dot_dimension_numbers<[1], [1], [0], [0], [0, 0, 1, 0], [], []>} : vector<16x32xbf16>, vector<16x32xbf16>, vector<16x16xf32> -> vector<16x16xf32>
    %cst_79 = arith.constant 0.353553385 : f32
    %247 = vector.broadcast %cst_79 : f32 to vector<16x16xf32>
    %248 = arith.mulf %246, %247 : vector<16x16xf32>
    %249 = arith.addf %248, %0 : vector<16x16xf32>
    %cst_80 = arith.constant dense<0xFF800000> : vector<16xf32>
    %250 = vector.multi_reduction <maximumf>, %249, %cst_80 [1] : vector<16x16xf32> to vector<16xf32>
    %251 = vector.shape_cast %250 : vector<16xf32> to vector<16x1xf32>
    %252 = vector.broadcast %251 : vector<16x1xf32> to vector<16x16xf32>
    %253 = arith.subf %249, %252 : vector<16x16xf32>
    %254 = math.exp %253 : vector<16x16xf32>
    %cst_81 = arith.constant dense<0.000000e+00> : vector<16xf32>
    %255 = vector.multi_reduction <add>, %254, %cst_81 [1] : vector<16x16xf32> to vector<16xf32>
    %256 = vector.shape_cast %255 : vector<16xf32> to vector<16x1xf32>
    %257 = vector.broadcast %256 : vector<16x1xf32> to vector<16x16xf32>
    %258 = arith.divf %254, %257 : vector<16x16xf32>
    %259 = vector.broadcast %15 : vector<1x32xf32> to vector<16x32xf32>
    %260 = arith.mulf %218, %259 : vector<16x32xf32>
    %261 = arith.truncf %260 : vector<16x32xf32> to vector<16x32xbf16>
    %262 = arith.truncf %258 : vector<16x16xf32> to vector<16x16xbf16>
    %cst_82 = arith.constant dense<0.000000e+00> : vector<16x32xf32>
    %263 = tpu.matmul %262, %261, %cst_82 {dimension_numbers = #tpu.dot_dimension_numbers<[1], [0], [0], [1], [0, 0, 1, 1], [], []>} : vector<16x16xbf16>, vector<16x32xbf16>, vector<16x32xf32> -> vector<16x32xf32>
    %264 = arith.addf %242, %263 : vector<16x32xf32>
    %265 = vector.broadcast %22 : vector<1x32xf32> to vector<16x32xf32>
    %266 = arith.mulf %208, %265 : vector<16x32xf32>
    %267 = arith.truncf %266 : vector<16x32xf32> to vector<16x32xbf16>
    %cst_83 = arith.constant dense<0.000000e+00> : vector<16x16xf32>
    %268 = tpu.matmul %267, %219, %cst_83 {dimension_numbers = #tpu.dot_dimension_numbers<[1], [1], [0], [0], [0, 0, 1, 0], [], []>} : vector<16x32xbf16>, vector<16x32xbf16>, vector<16x16xf32> -> vector<16x16xf32>
    %cst_84 = arith.constant 0.353553385 : f32
    %269 = vector.broadcast %cst_84 : f32 to vector<16x16xf32>
    %270 = arith.mulf %268, %269 : vector<16x16xf32>
    %271 = arith.addf %270, %0 : vector<16x16xf32>
    %cst_85 = arith.constant dense<0xFF800000> : vector<16xf32>
    %272 = vector.multi_reduction <maximumf>, %271, %cst_85 [1] : vector<16x16xf32> to vector<16xf32>
    %273 = vector.shape_cast %272 : vector<16xf32> to vector<16x1xf32>
    %274 = vector.broadcast %273 : vector<16x1xf32> to vector<16x16xf32>
    %275 = arith.subf %271, %274 : vector<16x16xf32>
    %276 = math.exp %275 : vector<16x16xf32>
    %cst_86 = arith.constant dense<0.000000e+00> : vector<16xf32>
    %277 = vector.multi_reduction <add>, %276, %cst_86 [1] : vector<16x16xf32> to vector<16xf32>
    %278 = vector.shape_cast %277 : vector<16xf32> to vector<16x1xf32>
    %279 = vector.broadcast %278 : vector<16x1xf32> to vector<16x16xf32>
    %280 = arith.divf %276, %279 : vector<16x16xf32>
    %281 = vector.broadcast %22 : vector<1x32xf32> to vector<16x32xf32>
    %282 = arith.mulf %218, %281 : vector<16x32xf32>
    %283 = arith.truncf %282 : vector<16x32xf32> to vector<16x32xbf16>
    %284 = arith.truncf %280 : vector<16x16xf32> to vector<16x16xbf16>
    %cst_87 = arith.constant dense<0.000000e+00> : vector<16x32xf32>
    %285 = tpu.matmul %284, %283, %cst_87 {dimension_numbers = #tpu.dot_dimension_numbers<[1], [0], [0], [1], [0, 0, 1, 1], [], []>} : vector<16x16xbf16>, vector<16x32xbf16>, vector<16x32xf32> -> vector<16x32xf32>
    %286 = arith.addf %264, %285 : vector<16x32xf32>
    %287 = vector.broadcast %29 : vector<1x32xf32> to vector<16x32xf32>
    %288 = arith.mulf %208, %287 : vector<16x32xf32>
    %289 = arith.truncf %288 : vector<16x32xf32> to vector<16x32xbf16>
    %cst_88 = arith.constant dense<0.000000e+00> : vector<16x16xf32>
    %290 = tpu.matmul %289, %219, %cst_88 {dimension_numbers = #tpu.dot_dimension_numbers<[1], [1], [0], [0], [0, 0, 1, 0], [], []>} : vector<16x32xbf16>, vector<16x32xbf16>, vector<16x16xf32> -> vector<16x16xf32>
    %cst_89 = arith.constant 0.353553385 : f32
    %291 = vector.broadcast %cst_89 : f32 to vector<16x16xf32>
    %292 = arith.mulf %290, %291 : vector<16x16xf32>
    %293 = arith.addf %292, %0 : vector<16x16xf32>
    %cst_90 = arith.constant dense<0xFF800000> : vector<16xf32>
    %294 = vector.multi_reduction <maximumf>, %293, %cst_90 [1] : vector<16x16xf32> to vector<16xf32>
    %295 = vector.shape_cast %294 : vector<16xf32> to vector<16x1xf32>
    %296 = vector.broadcast %295 : vector<16x1xf32> to vector<16x16xf32>
    %297 = arith.subf %293, %296 : vector<16x16xf32>
    %298 = math.exp %297 : vector<16x16xf32>
    %cst_91 = arith.constant dense<0.000000e+00> : vector<16xf32>
    %299 = vector.multi_reduction <add>, %298, %cst_91 [1] : vector<16x16xf32> to vector<16xf32>
    %300 = vector.shape_cast %299 : vector<16xf32> to vector<16x1xf32>
    %301 = vector.broadcast %300 : vector<16x1xf32> to vector<16x16xf32>
    %302 = arith.divf %298, %301 : vector<16x16xf32>
    %303 = vector.broadcast %29 : vector<1x32xf32> to vector<16x32xf32>
    %304 = arith.mulf %218, %303 : vector<16x32xf32>
    %305 = arith.truncf %304 : vector<16x32xf32> to vector<16x32xbf16>
    %306 = arith.truncf %302 : vector<16x16xf32> to vector<16x16xbf16>
    %cst_92 = arith.constant dense<0.000000e+00> : vector<16x32xf32>
    %307 = tpu.matmul %306, %305, %cst_92 {dimension_numbers = #tpu.dot_dimension_numbers<[1], [0], [0], [1], [0, 0, 1, 1], [], []>} : vector<16x16xbf16>, vector<16x32xbf16>, vector<16x32xf32> -> vector<16x32xf32>
    %308 = arith.addf %286, %307 : vector<16x32xf32>
    %309 = tpu.concatenate %236, %258, %280, %302 in 1 : vector<16x16xf32>, vector<16x16xf32>, vector<16x16xf32>, vector<16x16xf32> -> vector<16x64xf32>
    %c0_93 = arith.constant 0 : index
    %c0_94 = arith.constant 0 : index
    %c0_95 = arith.constant 0 : index
    %310 = vector.load %arg10[%c0_93, %c0_94, %c0_95] : memref<2x16x64xf32, #tpu.memory_space<vmem>>, vector<1x16x64xf32>
    %311 = vector.shape_cast %310 : vector<1x16x64xf32> to vector<16x64xf32>
    %312 = vector.shape_cast %309 : vector<16x64xf32> to vector<1x16x64xf32>
    tpu.vector_store %arg10[%c0_93, %c0_94, %c0_95], %312 {strides = array<i32>} : memref<2x16x64xf32, #tpu.memory_space<vmem>>, vector<1x16x64xf32>,
    %c168 = arith.constant 168 : index
    %c0_96 = arith.constant 0 : index
    %313 = vector.load %arg6[%c168, %c0_96] : memref<648x128xbf16, #tpu.memory_space<vmem>>, vector<32x32xbf16>
    %314 = arith.truncf %308 : vector<16x32xf32> to vector<16x32xbf16>
    %cst_97 = arith.constant dense<0.000000e+00> : vector<16x32xf32>
    %315 = tpu.matmul %314, %313, %cst_97 {dimension_numbers = #tpu.dot_dimension_numbers<[1], [0], [0], [1], [0, 0, 1, 1], [], []>} : vector<16x32xbf16>, vector<32x32xbf16>, vector<16x32xf32> -> vector<16x32xf32>
    %c5 = arith.constant 5 : index
    %c0_98 = arith.constant 0 : index
    %c0_99 = arith.constant 0 : index
    %316 = vector.load %arg8[%c5, %c0_98, %c0_99] : memref<16x1x256xf32, #tpu.memory_space<vmem>>, vector<1x1x256xf32>
    %317 = vector.shape_cast %316 : vector<1x1x256xf32> to vector<1x256xf32>
    %318 = vector.extract_strided_slice %317 {offsets = [0, 0], sizes = [1, 32], strides = [1, 1]} : vector<1x256xf32> to vector<1x32xf32>
    %319 = vector.broadcast %318 : vector<1x32xf32> to vector<16x32xf32>
    %320 = arith.addf %315, %319 : vector<16x32xf32>
    %321 = arith.addf %320, %178 : vector<16x32xf32>
    %cst_100 = arith.constant dense<0.000000e+00> : vector<16xf32>
    %322 = vector.multi_reduction <add>, %321, %cst_100 [1] : vector<16x32xf32> to vector<16xf32>
    %323 = vector.shape_cast %322 : vector<16xf32> to vector<16x1xf32>
    %cst_101 = arith.constant 3.200000e+01 : f32
    %324 = vector.broadcast %cst_101 : f32 to vector<16x1xf32>
    %325 = arith.divf %323, %324 : vector<16x1xf32>
    %326 = vector.broadcast %325 : vector<16x1xf32> to vector<16x32xf32>
    %327 = arith.subf %321, %326 : vector<16x32xf32>
    %328 = arith.mulf %327, %327 : vector<16x32xf32>
    %cst_102 = arith.constant dense<0.000000e+00> : vector<16xf32>
    %329 = vector.multi_reduction <add>, %328, %cst_102 [1] : vector<16x32xf32> to vector<16xf32>
    %330 = vector.shape_cast %329 : vector<16xf32> to vector<16x1xf32>
    %cst_103 = arith.constant 3.200000e+01 : f32
    %331 = vector.broadcast %cst_103 : f32 to vector<16x1xf32>
    %332 = arith.divf %330, %331 : vector<16x1xf32>
    %cst_104 = arith.constant 9.99999974E-6 : f32
    %333 = vector.broadcast %cst_104 : f32 to vector<16x1xf32>
    %334 = arith.addf %332, %333 : vector<16x1xf32>
    %335 = math.rsqrt %334 : vector<16x1xf32>
    %336 = vector.broadcast %335 : vector<16x1xf32> to vector<16x32xf32>
    %337 = arith.mulf %327, %336 : vector<16x32xf32>
    %c2_105 = arith.constant 2 : index
    %c0_106 = arith.constant 0 : index
    %c0_107 = arith.constant 0 : index
    %338 = vector.load %arg2[%c2_105, %c0_106, %c0_107] : memref<7x16x32xf32, #tpu.memory_space<vmem>>, vector<1x16x32xf32>
    %339 = vector.shape_cast %338 : vector<1x16x32xf32> to vector<16x32xf32>
    %340 = arith.mulf %337, %339 : vector<16x32xf32>
    %c2_108 = arith.constant 2 : index
    %c0_109 = arith.constant 0 : index
    %c0_110 = arith.constant 0 : index
    %341 = vector.load %arg3[%c2_108, %c0_109, %c0_110] : memref<7x16x32xf32, #tpu.memory_space<vmem>>, vector<1x16x32xf32>
    %342 = vector.shape_cast %341 : vector<1x16x32xf32> to vector<16x32xf32>
    %343 = arith.addf %340, %342 : vector<16x32xf32>
    %c0_111 = arith.constant 0 : index
    %c0_112 = arith.constant 0 : index
    %344 = vector.load %arg7[%c0_111, %c0_112] : memref<64x256xbf16, #tpu.memory_space<vmem>>, vector<32x256xbf16>
    %345 = arith.truncf %343 : vector<16x32xf32> to vector<16x32xbf16>
    %cst_113 = arith.constant dense<0.000000e+00> : vector<16x256xf32>
    %346 = tpu.matmul %345, %344, %cst_113 {dimension_numbers = #tpu.dot_dimension_numbers<[1], [0], [0], [1], [0, 0, 1, 1], [], []>} : vector<16x32xbf16>, vector<32x256xbf16>, vector<16x256xf32> -> vector<16x256xf32>
    %c6 = arith.constant 6 : index
    %c0_114 = arith.constant 0 : index
    %c0_115 = arith.constant 0 : index
    %347 = vector.load %arg8[%c6, %c0_114, %c0_115] : memref<16x1x256xf32, #tpu.memory_space<vmem>>, vector<1x1x256xf32>
    %348 = vector.shape_cast %347 : vector<1x1x256xf32> to vector<1x256xf32>
    %349 = vector.broadcast %348 : vector<1x256xf32> to vector<16x256xf32>
    %350 = arith.addf %346, %349 : vector<16x256xf32>
    %351 = vector.extract_strided_slice %350 {offsets = [0, 0], sizes = [16, 128], strides = [1, 1]} : vector<16x256xf32> to vector<16x128xf32>
    %352 = arith.negf %351 : vector<16x128xf32>
    %353 = math.exp %352 : vector<16x128xf32>
    %cst_116 = arith.constant 1.000000e+00 : f32
    %354 = vector.broadcast %cst_116 : f32 to vector<16x128xf32>
    %355 = arith.addf %354, %353 : vector<16x128xf32>
    %356 = arith.divf %354, %355 : vector<16x128xf32>
    %357 = arith.mulf %351, %356 : vector<16x128xf32>
    %358 = vector.extract_strided_slice %350 {offsets = [0, 128], sizes = [16, 128], strides = [1, 1]} : vector<16x256xf32> to vector<16x128xf32>
    %359 = arith.mulf %357, %358 : vector<16x128xf32>
    %c200 = arith.constant 200 : index
    %c0_117 = arith.constant 0 : index
    %360 = vector.load %arg6[%c200, %c0_117] : memref<648x128xbf16, #tpu.memory_space<vmem>>, vector<128x32xbf16>
    %361 = arith.truncf %359 : vector<16x128xf32> to vector<16x128xbf16>
    %cst_118 = arith.constant dense<0.000000e+00> : vector<16x32xf32>
    %362 = tpu.matmul %361, %360, %cst_118 {dimension_numbers = #tpu.dot_dimension_numbers<[1], [0], [0], [1], [0, 0, 1, 1], [], []>} : vector<16x128xbf16>, vector<128x32xbf16>, vector<16x32xf32> -> vector<16x32xf32>
    %c7 = arith.constant 7 : index
    %c0_119 = arith.constant 0 : index
    %c0_120 = arith.constant 0 : index
    %363 = vector.load %arg8[%c7, %c0_119, %c0_120] : memref<16x1x256xf32, #tpu.memory_space<vmem>>, vector<1x1x256xf32>
    %364 = vector.shape_cast %363 : vector<1x1x256xf32> to vector<1x256xf32>
    %365 = vector.extract_strided_slice %364 {offsets = [0, 0], sizes = [1, 32], strides = [1, 1]} : vector<1x256xf32> to vector<1x32xf32>
    %366 = vector.broadcast %365 : vector<1x32xf32> to vector<16x32xf32>
    %367 = arith.addf %362, %366 : vector<16x32xf32>
    %368 = arith.addf %367, %321 : vector<16x32xf32>
    %cst_121 = arith.constant dense<0.000000e+00> : vector<16xf32>
    %369 = vector.multi_reduction <add>, %368, %cst_121 [1] : vector<16x32xf32> to vector<16xf32>
    %370 = vector.shape_cast %369 : vector<16xf32> to vector<16x1xf32>
    %cst_122 = arith.constant 3.200000e+01 : f32
    %371 = vector.broadcast %cst_122 : f32 to vector<16x1xf32>
    %372 = arith.divf %370, %371 : vector<16x1xf32>
    %373 = vector.broadcast %372 : vector<16x1xf32> to vector<16x32xf32>
    %374 = arith.subf %368, %373 : vector<16x32xf32>
    %375 = arith.mulf %374, %374 : vector<16x32xf32>
    %cst_123 = arith.constant dense<0.000000e+00> : vector<16xf32>
    %376 = vector.multi_reduction <add>, %375, %cst_123 [1] : vector<16x32xf32> to vector<16xf32>
    %377 = vector.shape_cast %376 : vector<16xf32> to vector<16x1xf32>
    %cst_124 = arith.constant 3.200000e+01 : f32
    %378 = vector.broadcast %cst_124 : f32 to vector<16x1xf32>
    %379 = arith.divf %377, %378 : vector<16x1xf32>
    %cst_125 = arith.constant 9.99999974E-6 : f32
    %380 = vector.broadcast %cst_125 : f32 to vector<16x1xf32>
    %381 = arith.addf %379, %380 : vector<16x1xf32>
    %382 = math.rsqrt %381 : vector<16x1xf32>
    %383 = vector.broadcast %382 : vector<16x1xf32> to vector<16x32xf32>
    %384 = arith.mulf %374, %383 : vector<16x32xf32>
    %c3_126 = arith.constant 3 : index
    %c0_127 = arith.constant 0 : index
    %c0_128 = arith.constant 0 : index
    %385 = vector.load %arg2[%c3_126, %c0_127, %c0_128] : memref<7x16x32xf32, #tpu.memory_space<vmem>>, vector<1x16x32xf32>
    %386 = vector.shape_cast %385 : vector<1x16x32xf32> to vector<16x32xf32>
    %387 = arith.mulf %384, %386 : vector<16x32xf32>
    %c3_129 = arith.constant 3 : index
    %c0_130 = arith.constant 0 : index
    %c0_131 = arith.constant 0 : index
    %388 = vector.load %arg3[%c3_129, %c0_130, %c0_131] : memref<7x16x32xf32, #tpu.memory_space<vmem>>, vector<1x16x32xf32>
    %389 = vector.shape_cast %388 : vector<1x16x32xf32> to vector<16x32xf32>
    %390 = arith.addf %387, %389 : vector<16x32xf32>
    %c328 = arith.constant 328 : index
    %c0_132 = arith.constant 0 : index
    %391 = vector.load %arg6[%c328, %c0_132] : memref<648x128xbf16, #tpu.memory_space<vmem>>, vector<32x96xbf16>
    %392 = arith.truncf %390 : vector<16x32xf32> to vector<16x32xbf16>
    %cst_133 = arith.constant dense<0.000000e+00> : vector<16x96xf32>
    %393 = tpu.matmul %392, %391, %cst_133 {dimension_numbers = #tpu.dot_dimension_numbers<[1], [0], [0], [1], [0, 0, 1, 1], [], []>} : vector<16x32xbf16>, vector<32x96xbf16>, vector<16x96xf32> -> vector<16x96xf32>
    %c8 = arith.constant 8 : index
    %c0_134 = arith.constant 0 : index
    %c0_135 = arith.constant 0 : index
    %394 = vector.load %arg8[%c8, %c0_134, %c0_135] : memref<16x1x256xf32, #tpu.memory_space<vmem>>, vector<1x1x256xf32>
    %395 = vector.shape_cast %394 : vector<1x1x256xf32> to vector<1x256xf32>
    %396 = vector.extract_strided_slice %395 {offsets = [0, 0], sizes = [1, 96], strides = [1, 1]} : vector<1x256xf32> to vector<1x96xf32>
    %397 = vector.broadcast %396 : vector<1x96xf32> to vector<16x96xf32>
    %398 = arith.addf %393, %397 : vector<16x96xf32>
    %399 = vector.extract_strided_slice %398 {offsets = [0, 0], sizes = [16, 32], strides = [1, 1]} : vector<16x96xf32> to vector<16x32xf32>
    %400 = vector.extract_strided_slice %398 {offsets = [0, 32], sizes = [16, 32], strides = [1, 1]} : vector<16x96xf32> to vector<16x32xf32>
    %401 = vector.extract_strided_slice %398 {offsets = [0, 64], sizes = [16, 32], strides = [1, 1]} : vector<16x96xf32> to vector<16x32xf32>
    %402 = arith.truncf %400 : vector<16x32xf32> to vector<16x32xbf16>
    %cst_136 = arith.constant 0.000000e+00 : f32
    %403 = vector.broadcast %cst_136 : f32 to vector<16x32xf32>
    %404 = vector.broadcast %8 : vector<1x32xf32> to vector<16x32xf32>
    %405 = arith.mulf %399, %404 : vector<16x32xf32>
    %406 = arith.truncf %405 : vector<16x32xf32> to vector<16x32xbf16>
    %cst_137 = arith.constant dense<0.000000e+00> : vector<16x16xf32>
    %407 = tpu.matmul %406, %402, %cst_137 {dimension_numbers = #tpu.dot_dimension_numbers<[1], [1], [0], [0], [0, 0, 1, 0], [], []>} : vector<16x32xbf16>, vector<16x32xbf16>, vector<16x16xf32> -> vector<16x16xf32>
    %cst_138 = arith.constant 0.353553385 : f32
    %408 = vector.broadcast %cst_138 : f32 to vector<16x16xf32>
    %409 = arith.mulf %407, %408 : vector<16x16xf32>
    %410 = arith.addf %409, %0 : vector<16x16xf32>
    %cst_139 = arith.constant dense<0xFF800000> : vector<16xf32>
    %411 = vector.multi_reduction <maximumf>, %410, %cst_139 [1] : vector<16x16xf32> to vector<16xf32>
    %412 = vector.shape_cast %411 : vector<16xf32> to vector<16x1xf32>
    %413 = vector.broadcast %412 : vector<16x1xf32> to vector<16x16xf32>
    %414 = arith.subf %410, %413 : vector<16x16xf32>
    %415 = math.exp %414 : vector<16x16xf32>
    %cst_140 = arith.constant dense<0.000000e+00> : vector<16xf32>
    %416 = vector.multi_reduction <add>, %415, %cst_140 [1] : vector<16x16xf32> to vector<16xf32>
    %417 = vector.shape_cast %416 : vector<16xf32> to vector<16x1xf32>
    %418 = tpu.reciprocal %417 {approx = true} : vector<16x1xf32> -> vector<16x1xf32>
    %419 = vector.broadcast %418 : vector<16x1xf32> to vector<16x16xf32>
    %420 = arith.mulf %415, %419 : vector<16x16xf32>
    %421 = vector.broadcast %8 : vector<1x32xf32> to vector<16x32xf32>
    %422 = arith.mulf %401, %421 : vector<16x32xf32>
    %423 = arith.truncf %422 : vector<16x32xf32> to vector<16x32xbf16>
    %424 = arith.truncf %420 : vector<16x16xf32> to vector<16x16xbf16>
    %cst_141 = arith.constant dense<0.000000e+00> : vector<16x32xf32>
    %425 = tpu.matmul %424, %423, %cst_141 {dimension_numbers = #tpu.dot_dimension_numbers<[1], [0], [0], [1], [0, 0, 1, 1], [], []>} : vector<16x16xbf16>, vector<16x32xbf16>, vector<16x32xf32> -> vector<16x32xf32>
    %426 = arith.addf %403, %425 : vector<16x32xf32>
    %427 = vector.broadcast %15 : vector<1x32xf32> to vector<16x32xf32>
    %428 = arith.mulf %399, %427 : vector<16x32xf32>
    %429 = arith.truncf %428 : vector<16x32xf32> to vector<16x32xbf16>
    %cst_142 = arith.constant dense<0.000000e+00> : vector<16x16xf32>
    %430 = tpu.matmul %429, %402, %cst_142 {dimension_numbers = #tpu.dot_dimension_numbers<[1], [1], [0], [0], [0, 0, 1, 0], [], []>} : vector<16x32xbf16>, vector<16x32xbf16>, vector<16x16xf32> -> vector<16x16xf32>
    %cst_143 = arith.constant 0.353553385 : f32
    %431 = vector.broadcast %cst_143 : f32 to vector<16x16xf32>
    %432 = arith.mulf %430, %431 : vector<16x16xf32>
    %433 = arith.addf %432, %0 : vector<16x16xf32>
    %cst_144 = arith.constant dense<0xFF800000> : vector<16xf32>
    %434 = vector.multi_reduction <maximumf>, %433, %cst_144 [1] : vector<16x16xf32> to vector<16xf32>
    %435 = vector.shape_cast %434 : vector<16xf32> to vector<16x1xf32>
    %436 = vector.broadcast %435 : vector<16x1xf32> to vector<16x16xf32>
    %437 = arith.subf %433, %436 : vector<16x16xf32>
    %438 = math.exp %437 : vector<16x16xf32>
    %cst_145 = arith.constant dense<0.000000e+00> : vector<16xf32>
    %439 = vector.multi_reduction <add>, %438, %cst_145 [1] : vector<16x16xf32> to vector<16xf32>
    %440 = vector.shape_cast %439 : vector<16xf32> to vector<16x1xf32>
    %441 = tpu.reciprocal %440 {approx = true} : vector<16x1xf32> -> vector<16x1xf32>
    %442 = vector.broadcast %441 : vector<16x1xf32> to vector<16x16xf32>
    %443 = arith.mulf %438, %442 : vector<16x16xf32>
    %444 = vector.broadcast %15 : vector<1x32xf32> to vector<16x32xf32>
    %445 = arith.mulf %401, %444 : vector<16x32xf32>
    %446 = arith.truncf %445 : vector<16x32xf32> to vector<16x32xbf16>
    %447 = arith.truncf %443 : vector<16x16xf32> to vector<16x16xbf16>
    %cst_146 = arith.constant dense<0.000000e+00> : vector<16x32xf32>
    %448 = tpu.matmul %447, %446, %cst_146 {dimension_numbers = #tpu.dot_dimension_numbers<[1], [0], [0], [1], [0, 0, 1, 1], [], []>} : vector<16x16xbf16>, vector<16x32xbf16>, vector<16x32xf32> -> vector<16x32xf32>
    %449 = arith.addf %426, %448 : vector<16x32xf32>
    %450 = vector.broadcast %22 : vector<1x32xf32> to vector<16x32xf32>
    %451 = arith.mulf %399, %450 : vector<16x32xf32>
    %452 = arith.truncf %451 : vector<16x32xf32> to vector<16x32xbf16>
    %cst_147 = arith.constant dense<0.000000e+00> : vector<16x16xf32>
    %453 = tpu.matmul %452, %402, %cst_147 {dimension_numbers = #tpu.dot_dimension_numbers<[1], [1], [0], [0], [0, 0, 1, 0], [], []>} : vector<16x32xbf16>, vector<16x32xbf16>, vector<16x16xf32> -> vector<16x16xf32>
    %cst_148 = arith.constant 0.353553385 : f32
    %454 = vector.broadcast %cst_148 : f32 to vector<16x16xf32>
    %455 = arith.mulf %453, %454 : vector<16x16xf32>
    %456 = arith.addf %455, %0 : vector<16x16xf32>
    %cst_149 = arith.constant dense<0xFF800000> : vector<16xf32>
    %457 = vector.multi_reduction <maximumf>, %456, %cst_149 [1] : vector<16x16xf32> to vector<16xf32>
    %458 = vector.shape_cast %457 : vector<16xf32> to vector<16x1xf32>
    %459 = vector.broadcast %458 : vector<16x1xf32> to vector<16x16xf32>
    %460 = arith.subf %456, %459 : vector<16x16xf32>
    %461 = math.exp %460 : vector<16x16xf32>
    %cst_150 = arith.constant dense<0.000000e+00> : vector<16xf32>
    %462 = vector.multi_reduction <add>, %461, %cst_150 [1] : vector<16x16xf32> to vector<16xf32>
    %463 = vector.shape_cast %462 : vector<16xf32> to vector<16x1xf32>
    %464 = tpu.reciprocal %463 {approx = true} : vector<16x1xf32> -> vector<16x1xf32>
    %465 = vector.broadcast %464 : vector<16x1xf32> to vector<16x16xf32>
    %466 = arith.mulf %461, %465 : vector<16x16xf32>
    %467 = vector.broadcast %22 : vector<1x32xf32> to vector<16x32xf32>
    %468 = arith.mulf %401, %467 : vector<16x32xf32>
    %469 = arith.truncf %468 : vector<16x32xf32> to vector<16x32xbf16>
    %470 = arith.truncf %466 : vector<16x16xf32> to vector<16x16xbf16>
    %cst_151 = arith.constant dense<0.000000e+00> : vector<16x32xf32>
    %471 = tpu.matmul %470, %469, %cst_151 {dimension_numbers = #tpu.dot_dimension_numbers<[1], [0], [0], [1], [0, 0, 1, 1], [], []>} : vector<16x16xbf16>, vector<16x32xbf16>, vector<16x32xf32> -> vector<16x32xf32>
    %472 = arith.addf %449, %471 : vector<16x32xf32>
    %473 = vector.broadcast %29 : vector<1x32xf32> to vector<16x32xf32>
    %474 = arith.mulf %399, %473 : vector<16x32xf32>
    %475 = arith.truncf %474 : vector<16x32xf32> to vector<16x32xbf16>
    %cst_152 = arith.constant dense<0.000000e+00> : vector<16x16xf32>
    %476 = tpu.matmul %475, %402, %cst_152 {dimension_numbers = #tpu.dot_dimension_numbers<[1], [1], [0], [0], [0, 0, 1, 0], [], []>} : vector<16x32xbf16>, vector<16x32xbf16>, vector<16x16xf32> -> vector<16x16xf32>
    %cst_153 = arith.constant 0.353553385 : f32
    %477 = vector.broadcast %cst_153 : f32 to vector<16x16xf32>
    %478 = arith.mulf %476, %477 : vector<16x16xf32>
    %479 = arith.addf %478, %0 : vector<16x16xf32>
    %cst_154 = arith.constant dense<0xFF800000> : vector<16xf32>
    %480 = vector.multi_reduction <maximumf>, %479, %cst_154 [1] : vector<16x16xf32> to vector<16xf32>
    %481 = vector.shape_cast %480 : vector<16xf32> to vector<16x1xf32>
    %482 = vector.broadcast %481 : vector<16x1xf32> to vector<16x16xf32>
    %483 = arith.subf %479, %482 : vector<16x16xf32>
    %484 = math.exp %483 : vector<16x16xf32>
    %cst_155 = arith.constant dense<0.000000e+00> : vector<16xf32>
    %485 = vector.multi_reduction <add>, %484, %cst_155 [1] : vector<16x16xf32> to vector<16xf32>
    %486 = vector.shape_cast %485 : vector<16xf32> to vector<16x1xf32>
    %487 = tpu.reciprocal %486 {approx = true} : vector<16x1xf32> -> vector<16x1xf32>
    %488 = vector.broadcast %487 : vector<16x1xf32> to vector<16x16xf32>
    %489 = arith.mulf %484, %488 : vector<16x16xf32>
    %490 = vector.broadcast %29 : vector<1x32xf32> to vector<16x32xf32>
    %491 = arith.mulf %401, %490 : vector<16x32xf32>
    %492 = arith.truncf %491 : vector<16x32xf32> to vector<16x32xbf16>
    %493 = arith.truncf %489 : vector<16x16xf32> to vector<16x16xbf16>
    %cst_156 = arith.constant dense<0.000000e+00> : vector<16x32xf32>
    %494 = tpu.matmul %493, %492, %cst_156 {dimension_numbers = #tpu.dot_dimension_numbers<[1], [0], [0], [1], [0, 0, 1, 1], [], []>} : vector<16x16xbf16>, vector<16x32xbf16>, vector<16x32xf32> -> vector<16x32xf32>
    %495 = arith.addf %472, %494 : vector<16x32xf32>
    %c360 = arith.constant 360 : index
    %c0_157 = arith.constant 0 : index
    %496 = vector.load %arg6[%c360, %c0_157] : memref<648x128xbf16, #tpu.memory_space<vmem>>, vector<32x32xbf16>
    %497 = arith.truncf %495 : vector<16x32xf32> to vector<16x32xbf16>
    %cst_158 = arith.constant dense<0.000000e+00> : vector<16x32xf32>
    %498 = tpu.matmul %497, %496, %cst_158 {dimension_numbers = #tpu.dot_dimension_numbers<[1], [0], [0], [1], [0, 0, 1, 1], [], []>} : vector<16x32xbf16>, vector<32x32xbf16>, vector<16x32xf32> -> vector<16x32xf32>
    %c9 = arith.constant 9 : index
    %c0_159 = arith.constant 0 : index
    %c0_160 = arith.constant 0 : index
    %499 = vector.load %arg8[%c9, %c0_159, %c0_160] : memref<16x1x256xf32, #tpu.memory_space<vmem>>, vector<1x1x256xf32>
    %500 = vector.shape_cast %499 : vector<1x1x256xf32> to vector<1x256xf32>
    %501 = vector.extract_strided_slice %500 {offsets = [0, 0], sizes = [1, 32], strides = [1, 1]} : vector<1x256xf32> to vector<1x32xf32>
    %502 = vector.broadcast %501 : vector<1x32xf32> to vector<16x32xf32>
    %503 = arith.addf %498, %502 : vector<16x32xf32>
    %504 = arith.addf %503, %368 : vector<16x32xf32>
    %cst_161 = arith.constant dense<0.000000e+00> : vector<16xf32>
    %505 = vector.multi_reduction <add>, %504, %cst_161 [1] : vector<16x32xf32> to vector<16xf32>
    %506 = vector.shape_cast %505 : vector<16xf32> to vector<16x1xf32>
    %cst_162 = arith.constant 3.200000e+01 : f32
    %507 = vector.broadcast %cst_162 : f32 to vector<16x1xf32>
    %508 = arith.divf %506, %507 : vector<16x1xf32>
    %509 = vector.broadcast %508 : vector<16x1xf32> to vector<16x32xf32>
    %510 = arith.subf %504, %509 : vector<16x32xf32>
    %511 = arith.mulf %510, %510 : vector<16x32xf32>
    %cst_163 = arith.constant dense<0.000000e+00> : vector<16xf32>
    %512 = vector.multi_reduction <add>, %511, %cst_163 [1] : vector<16x32xf32> to vector<16xf32>
    %513 = vector.shape_cast %512 : vector<16xf32> to vector<16x1xf32>
    %cst_164 = arith.constant 3.200000e+01 : f32
    %514 = vector.broadcast %cst_164 : f32 to vector<16x1xf32>
    %515 = arith.divf %513, %514 : vector<16x1xf32>
    %cst_165 = arith.constant 9.99999974E-6 : f32
    %516 = vector.broadcast %cst_165 : f32 to vector<16x1xf32>
    %517 = arith.addf %515, %516 : vector<16x1xf32>
    %518 = math.rsqrt %517 : vector<16x1xf32>
    %519 = vector.broadcast %518 : vector<16x1xf32> to vector<16x32xf32>
    %520 = arith.mulf %510, %519 : vector<16x32xf32>
    %c4_166 = arith.constant 4 : index
    %c0_167 = arith.constant 0 : index
    %c0_168 = arith.constant 0 : index
    %521 = vector.load %arg2[%c4_166, %c0_167, %c0_168] : memref<7x16x32xf32, #tpu.memory_space<vmem>>, vector<1x16x32xf32>
    %522 = vector.shape_cast %521 : vector<1x16x32xf32> to vector<16x32xf32>
    %523 = arith.mulf %520, %522 : vector<16x32xf32>
    %c4_169 = arith.constant 4 : index
    %c0_170 = arith.constant 0 : index
    %c0_171 = arith.constant 0 : index
    %524 = vector.load %arg3[%c4_169, %c0_170, %c0_171] : memref<7x16x32xf32, #tpu.memory_space<vmem>>, vector<1x16x32xf32>
    %525 = vector.shape_cast %524 : vector<1x16x32xf32> to vector<16x32xf32>
    %526 = arith.addf %523, %525 : vector<16x32xf32>
    %c392 = arith.constant 392 : index
    %c0_172 = arith.constant 0 : index
    %527 = vector.load %arg6[%c392, %c0_172] : memref<648x128xbf16, #tpu.memory_space<vmem>>, vector<32x32xbf16>
    %528 = arith.truncf %526 : vector<16x32xf32> to vector<16x32xbf16>
    %cst_173 = arith.constant dense<0.000000e+00> : vector<16x32xf32>
    %529 = tpu.matmul %528, %527, %cst_173 {dimension_numbers = #tpu.dot_dimension_numbers<[1], [0], [0], [1], [0, 0, 1, 1], [], []>} : vector<16x32xbf16>, vector<32x32xbf16>, vector<16x32xf32> -> vector<16x32xf32>
    %c10 = arith.constant 10 : index
    %c0_174 = arith.constant 0 : index
    %c0_175 = arith.constant 0 : index
    %530 = vector.load %arg8[%c10, %c0_174, %c0_175] : memref<16x1x256xf32, #tpu.memory_space<vmem>>, vector<1x1x256xf32>
    %531 = vector.shape_cast %530 : vector<1x1x256xf32> to vector<1x256xf32>
    %532 = vector.extract_strided_slice %531 {offsets = [0, 0], sizes = [1, 32], strides = [1, 1]} : vector<1x256xf32> to vector<1x32xf32>
    %533 = vector.broadcast %532 : vector<1x32xf32> to vector<16x32xf32>
    %534 = arith.addf %529, %533 : vector<16x32xf32>
    %c424 = arith.constant 424 : index
    %c0_176 = arith.constant 0 : index
    %535 = vector.load %arg6[%c424, %c0_176] : memref<648x128xbf16, #tpu.memory_space<vmem>>, vector<32x64xbf16>
    %536 = arith.truncf %42 : vector<16x32xf32> to vector<16x32xbf16>
    %cst_177 = arith.constant dense<0.000000e+00> : vector<16x64xf32>
    %537 = tpu.matmul %536, %535, %cst_177 {dimension_numbers = #tpu.dot_dimension_numbers<[1], [0], [0], [1], [0, 0, 1, 1], [], []>} : vector<16x32xbf16>, vector<32x64xbf16>, vector<16x64xf32> -> vector<16x64xf32>
    %c11 = arith.constant 11 : index
    %c0_178 = arith.constant 0 : index
    %c0_179 = arith.constant 0 : index
    %538 = vector.load %arg8[%c11, %c0_178, %c0_179] : memref<16x1x256xf32, #tpu.memory_space<vmem>>, vector<1x1x256xf32>
    %539 = vector.shape_cast %538 : vector<1x1x256xf32> to vector<1x256xf32>
    %540 = vector.extract_strided_slice %539 {offsets = [0, 0], sizes = [1, 64], strides = [1, 1]} : vector<1x256xf32> to vector<1x64xf32>
    %541 = vector.broadcast %540 : vector<1x64xf32> to vector<16x64xf32>
    %542 = arith.addf %537, %541 : vector<16x64xf32>
    %543 = vector.extract_strided_slice %542 {offsets = [0, 0], sizes = [16, 32], strides = [1, 1]} : vector<16x64xf32> to vector<16x32xf32>
    %544 = vector.extract_strided_slice %542 {offsets = [0, 32], sizes = [16, 32], strides = [1, 1]} : vector<16x64xf32> to vector<16x32xf32>
    %545 = arith.truncf %543 : vector<16x32xf32> to vector<16x32xbf16>
    %cst_180 = arith.constant 0.000000e+00 : f32
    %546 = vector.broadcast %cst_180 : f32 to vector<16x32xf32>
    %547 = vector.broadcast %8 : vector<1x32xf32> to vector<16x32xf32>
    %548 = arith.mulf %534, %547 : vector<16x32xf32>
    %549 = arith.truncf %548 : vector<16x32xf32> to vector<16x32xbf16>
    %cst_181 = arith.constant dense<0.000000e+00> : vector<16x16xf32>
    %550 = tpu.matmul %549, %545, %cst_181 {dimension_numbers = #tpu.dot_dimension_numbers<[1], [1], [0], [0], [0, 0, 1, 0], [], []>} : vector<16x32xbf16>, vector<16x32xbf16>, vector<16x16xf32> -> vector<16x16xf32>
    %cst_182 = arith.constant 0.353553385 : f32
    %551 = vector.broadcast %cst_182 : f32 to vector<16x16xf32>
    %552 = arith.mulf %550, %551 : vector<16x16xf32>
    %553 = arith.addf %552, %0 : vector<16x16xf32>
    %cst_183 = arith.constant dense<0xFF800000> : vector<16xf32>
    %554 = vector.multi_reduction <maximumf>, %553, %cst_183 [1] : vector<16x16xf32> to vector<16xf32>
    %555 = vector.shape_cast %554 : vector<16xf32> to vector<16x1xf32>
    %556 = vector.broadcast %555 : vector<16x1xf32> to vector<16x16xf32>
    %557 = arith.subf %553, %556 : vector<16x16xf32>
    %558 = math.exp %557 : vector<16x16xf32>
    %cst_184 = arith.constant dense<0.000000e+00> : vector<16xf32>
    %559 = vector.multi_reduction <add>, %558, %cst_184 [1] : vector<16x16xf32> to vector<16xf32>
    %560 = vector.shape_cast %559 : vector<16xf32> to vector<16x1xf32>
    %561 = vector.broadcast %560 : vector<16x1xf32> to vector<16x16xf32>
    %562 = arith.divf %558, %561 : vector<16x16xf32>
    %563 = vector.broadcast %8 : vector<1x32xf32> to vector<16x32xf32>
    %564 = arith.mulf %544, %563 : vector<16x32xf32>
    %565 = arith.truncf %564 : vector<16x32xf32> to vector<16x32xbf16>
    %566 = arith.truncf %562 : vector<16x16xf32> to vector<16x16xbf16>
    %cst_185 = arith.constant dense<0.000000e+00> : vector<16x32xf32>
    %567 = tpu.matmul %566, %565, %cst_185 {dimension_numbers = #tpu.dot_dimension_numbers<[1], [0], [0], [1], [0, 0, 1, 1], [], []>} : vector<16x16xbf16>, vector<16x32xbf16>, vector<16x32xf32> -> vector<16x32xf32>
    %568 = arith.addf %546, %567 : vector<16x32xf32>
    %569 = vector.broadcast %15 : vector<1x32xf32> to vector<16x32xf32>
    %570 = arith.mulf %534, %569 : vector<16x32xf32>
    %571 = arith.truncf %570 : vector<16x32xf32> to vector<16x32xbf16>
    %cst_186 = arith.constant dense<0.000000e+00> : vector<16x16xf32>
    %572 = tpu.matmul %571, %545, %cst_186 {dimension_numbers = #tpu.dot_dimension_numbers<[1], [1], [0], [0], [0, 0, 1, 0], [], []>} : vector<16x32xbf16>, vector<16x32xbf16>, vector<16x16xf32> -> vector<16x16xf32>
    %cst_187 = arith.constant 0.353553385 : f32
    %573 = vector.broadcast %cst_187 : f32 to vector<16x16xf32>
    %574 = arith.mulf %572, %573 : vector<16x16xf32>
    %575 = arith.addf %574, %0 : vector<16x16xf32>
    %cst_188 = arith.constant dense<0xFF800000> : vector<16xf32>
    %576 = vector.multi_reduction <maximumf>, %575, %cst_188 [1] : vector<16x16xf32> to vector<16xf32>
    %577 = vector.shape_cast %576 : vector<16xf32> to vector<16x1xf32>
    %578 = vector.broadcast %577 : vector<16x1xf32> to vector<16x16xf32>
    %579 = arith.subf %575, %578 : vector<16x16xf32>
    %580 = math.exp %579 : vector<16x16xf32>
    %cst_189 = arith.constant dense<0.000000e+00> : vector<16xf32>
    %581 = vector.multi_reduction <add>, %580, %cst_189 [1] : vector<16x16xf32> to vector<16xf32>
    %582 = vector.shape_cast %581 : vector<16xf32> to vector<16x1xf32>
    %583 = vector.broadcast %582 : vector<16x1xf32> to vector<16x16xf32>
    %584 = arith.divf %580, %583 : vector<16x16xf32>
    %585 = vector.broadcast %15 : vector<1x32xf32> to vector<16x32xf32>
    %586 = arith.mulf %544, %585 : vector<16x32xf32>
    %587 = arith.truncf %586 : vector<16x32xf32> to vector<16x32xbf16>
    %588 = arith.truncf %584 : vector<16x16xf32> to vector<16x16xbf16>
    %cst_190 = arith.constant dense<0.000000e+00> : vector<16x32xf32>
    %589 = tpu.matmul %588, %587, %cst_190 {dimension_numbers = #tpu.dot_dimension_numbers<[1], [0], [0], [1], [0, 0, 1, 1], [], []>} : vector<16x16xbf16>, vector<16x32xbf16>, vector<16x32xf32> -> vector<16x32xf32>
    %590 = arith.addf %568, %589 : vector<16x32xf32>
    %591 = vector.broadcast %22 : vector<1x32xf32> to vector<16x32xf32>
    %592 = arith.mulf %534, %591 : vector<16x32xf32>
    %593 = arith.truncf %592 : vector<16x32xf32> to vector<16x32xbf16>
    %cst_191 = arith.constant dense<0.000000e+00> : vector<16x16xf32>
    %594 = tpu.matmul %593, %545, %cst_191 {dimension_numbers = #tpu.dot_dimension_numbers<[1], [1], [0], [0], [0, 0, 1, 0], [], []>} : vector<16x32xbf16>, vector<16x32xbf16>, vector<16x16xf32> -> vector<16x16xf32>
    %cst_192 = arith.constant 0.353553385 : f32
    %595 = vector.broadcast %cst_192 : f32 to vector<16x16xf32>
    %596 = arith.mulf %594, %595 : vector<16x16xf32>
    %597 = arith.addf %596, %0 : vector<16x16xf32>
    %cst_193 = arith.constant dense<0xFF800000> : vector<16xf32>
    %598 = vector.multi_reduction <maximumf>, %597, %cst_193 [1] : vector<16x16xf32> to vector<16xf32>
    %599 = vector.shape_cast %598 : vector<16xf32> to vector<16x1xf32>
    %600 = vector.broadcast %599 : vector<16x1xf32> to vector<16x16xf32>
    %601 = arith.subf %597, %600 : vector<16x16xf32>
    %602 = math.exp %601 : vector<16x16xf32>
    %cst_194 = arith.constant dense<0.000000e+00> : vector<16xf32>
    %603 = vector.multi_reduction <add>, %602, %cst_194 [1] : vector<16x16xf32> to vector<16xf32>
    %604 = vector.shape_cast %603 : vector<16xf32> to vector<16x1xf32>
    %605 = vector.broadcast %604 : vector<16x1xf32> to vector<16x16xf32>
    %606 = arith.divf %602, %605 : vector<16x16xf32>
    %607 = vector.broadcast %22 : vector<1x32xf32> to vector<16x32xf32>
    %608 = arith.mulf %544, %607 : vector<16x32xf32>
    %609 = arith.truncf %608 : vector<16x32xf32> to vector<16x32xbf16>
    %610 = arith.truncf %606 : vector<16x16xf32> to vector<16x16xbf16>
    %cst_195 = arith.constant dense<0.000000e+00> : vector<16x32xf32>
    %611 = tpu.matmul %610, %609, %cst_195 {dimension_numbers = #tpu.dot_dimension_numbers<[1], [0], [0], [1], [0, 0, 1, 1], [], []>} : vector<16x16xbf16>, vector<16x32xbf16>, vector<16x32xf32> -> vector<16x32xf32>
    %612 = arith.addf %590, %611 : vector<16x32xf32>
    %613 = vector.broadcast %29 : vector<1x32xf32> to vector<16x32xf32>
    %614 = arith.mulf %534, %613 : vector<16x32xf32>
    %615 = arith.truncf %614 : vector<16x32xf32> to vector<16x32xbf16>
    %cst_196 = arith.constant dense<0.000000e+00> : vector<16x16xf32>
    %616 = tpu.matmul %615, %545, %cst_196 {dimension_numbers = #tpu.dot_dimension_numbers<[1], [1], [0], [0], [0, 0, 1, 0], [], []>} : vector<16x32xbf16>, vector<16x32xbf16>, vector<16x16xf32> -> vector<16x16xf32>
    %cst_197 = arith.constant 0.353553385 : f32
    %617 = vector.broadcast %cst_197 : f32 to vector<16x16xf32>
    %618 = arith.mulf %616, %617 : vector<16x16xf32>
    %619 = arith.addf %618, %0 : vector<16x16xf32>
    %cst_198 = arith.constant dense<0xFF800000> : vector<16xf32>
    %620 = vector.multi_reduction <maximumf>, %619, %cst_198 [1] : vector<16x16xf32> to vector<16xf32>
    %621 = vector.shape_cast %620 : vector<16xf32> to vector<16x1xf32>
    %622 = vector.broadcast %621 : vector<16x1xf32> to vector<16x16xf32>
    %623 = arith.subf %619, %622 : vector<16x16xf32>
    %624 = math.exp %623 : vector<16x16xf32>
    %cst_199 = arith.constant dense<0.000000e+00> : vector<16xf32>
    %625 = vector.multi_reduction <add>, %624, %cst_199 [1] : vector<16x16xf32> to vector<16xf32>
    %626 = vector.shape_cast %625 : vector<16xf32> to vector<16x1xf32>
    %627 = vector.broadcast %626 : vector<16x1xf32> to vector<16x16xf32>
    %628 = arith.divf %624, %627 : vector<16x16xf32>
    %629 = vector.broadcast %29 : vector<1x32xf32> to vector<16x32xf32>
    %630 = arith.mulf %544, %629 : vector<16x32xf32>
    %631 = arith.truncf %630 : vector<16x32xf32> to vector<16x32xbf16>
    %632 = arith.truncf %628 : vector<16x16xf32> to vector<16x16xbf16>
    %cst_200 = arith.constant dense<0.000000e+00> : vector<16x32xf32>
    %633 = tpu.matmul %632, %631, %cst_200 {dimension_numbers = #tpu.dot_dimension_numbers<[1], [0], [0], [1], [0, 0, 1, 1], [], []>} : vector<16x16xbf16>, vector<16x32xbf16>, vector<16x32xf32> -> vector<16x32xf32>
    %634 = arith.addf %612, %633 : vector<16x32xf32>
    %635 = tpu.concatenate %562, %584, %606, %628 in 1 : vector<16x16xf32>, vector<16x16xf32>, vector<16x16xf32>, vector<16x16xf32> -> vector<16x64xf32>
    %c1_201 = arith.constant 1 : index
    %c0_202 = arith.constant 0 : index
    %c0_203 = arith.constant 0 : index
    %636 = vector.load %arg10[%c1_201, %c0_202, %c0_203] : memref<2x16x64xf32, #tpu.memory_space<vmem>>, vector<1x16x64xf32>
    %637 = vector.shape_cast %636 : vector<1x16x64xf32> to vector<16x64xf32>
    %638 = vector.shape_cast %635 : vector<16x64xf32> to vector<1x16x64xf32>
    tpu.vector_store %arg10[%c1_201, %c0_202, %c0_203], %638 {strides = array<i32>} : memref<2x16x64xf32, #tpu.memory_space<vmem>>, vector<1x16x64xf32>,
    %c456 = arith.constant 456 : index
    %c0_204 = arith.constant 0 : index
    %639 = vector.load %arg6[%c456, %c0_204] : memref<648x128xbf16, #tpu.memory_space<vmem>>, vector<32x32xbf16>
    %640 = arith.truncf %634 : vector<16x32xf32> to vector<16x32xbf16>
    %cst_205 = arith.constant dense<0.000000e+00> : vector<16x32xf32>
    %641 = tpu.matmul %640, %639, %cst_205 {dimension_numbers = #tpu.dot_dimension_numbers<[1], [0], [0], [1], [0, 0, 1, 1], [], []>} : vector<16x32xbf16>, vector<32x32xbf16>, vector<16x32xf32> -> vector<16x32xf32>
    %c12 = arith.constant 12 : index
    %c0_206 = arith.constant 0 : index
    %c0_207 = arith.constant 0 : index
    %642 = vector.load %arg8[%c12, %c0_206, %c0_207] : memref<16x1x256xf32, #tpu.memory_space<vmem>>, vector<1x1x256xf32>
    %643 = vector.shape_cast %642 : vector<1x1x256xf32> to vector<1x256xf32>
    %644 = vector.extract_strided_slice %643 {offsets = [0, 0], sizes = [1, 32], strides = [1, 1]} : vector<1x256xf32> to vector<1x32xf32>
    %645 = vector.broadcast %644 : vector<1x32xf32> to vector<16x32xf32>
    %646 = arith.addf %641, %645 : vector<16x32xf32>
    %647 = arith.addf %646, %504 : vector<16x32xf32>
    %cst_208 = arith.constant dense<0.000000e+00> : vector<16xf32>
    %648 = vector.multi_reduction <add>, %647, %cst_208 [1] : vector<16x32xf32> to vector<16xf32>
    %649 = vector.shape_cast %648 : vector<16xf32> to vector<16x1xf32>
    %cst_209 = arith.constant 3.200000e+01 : f32
    %650 = vector.broadcast %cst_209 : f32 to vector<16x1xf32>
    %651 = arith.divf %649, %650 : vector<16x1xf32>
    %652 = vector.broadcast %651 : vector<16x1xf32> to vector<16x32xf32>
    %653 = arith.subf %647, %652 : vector<16x32xf32>
    %654 = arith.mulf %653, %653 : vector<16x32xf32>
    %cst_210 = arith.constant dense<0.000000e+00> : vector<16xf32>
    %655 = vector.multi_reduction <add>, %654, %cst_210 [1] : vector<16x32xf32> to vector<16xf32>
    %656 = vector.shape_cast %655 : vector<16xf32> to vector<16x1xf32>
    %cst_211 = arith.constant 3.200000e+01 : f32
    %657 = vector.broadcast %cst_211 : f32 to vector<16x1xf32>
    %658 = arith.divf %656, %657 : vector<16x1xf32>
    %cst_212 = arith.constant 9.99999974E-6 : f32
    %659 = vector.broadcast %cst_212 : f32 to vector<16x1xf32>
    %660 = arith.addf %658, %659 : vector<16x1xf32>
    %661 = math.rsqrt %660 : vector<16x1xf32>
    %662 = vector.broadcast %661 : vector<16x1xf32> to vector<16x32xf32>
    %663 = arith.mulf %653, %662 : vector<16x32xf32>
    %c5_213 = arith.constant 5 : index
    %c0_214 = arith.constant 0 : index
    %c0_215 = arith.constant 0 : index
    %664 = vector.load %arg2[%c5_213, %c0_214, %c0_215] : memref<7x16x32xf32, #tpu.memory_space<vmem>>, vector<1x16x32xf32>
    %665 = vector.shape_cast %664 : vector<1x16x32xf32> to vector<16x32xf32>
    %666 = arith.mulf %663, %665 : vector<16x32xf32>
    %c5_216 = arith.constant 5 : index
    %c0_217 = arith.constant 0 : index
    %c0_218 = arith.constant 0 : index
    %667 = vector.load %arg3[%c5_216, %c0_217, %c0_218] : memref<7x16x32xf32, #tpu.memory_space<vmem>>, vector<1x16x32xf32>
    %668 = vector.shape_cast %667 : vector<1x16x32xf32> to vector<16x32xf32>
    %669 = arith.addf %666, %668 : vector<16x32xf32>
    %c32 = arith.constant 32 : index
    %c0_219 = arith.constant 0 : index
    %670 = vector.load %arg7[%c32, %c0_219] : memref<64x256xbf16, #tpu.memory_space<vmem>>, vector<32x256xbf16>
    %671 = arith.truncf %669 : vector<16x32xf32> to vector<16x32xbf16>
    %cst_220 = arith.constant dense<0.000000e+00> : vector<16x256xf32>
    %672 = tpu.matmul %671, %670, %cst_220 {dimension_numbers = #tpu.dot_dimension_numbers<[1], [0], [0], [1], [0, 0, 1, 1], [], []>} : vector<16x32xbf16>, vector<32x256xbf16>, vector<16x256xf32> -> vector<16x256xf32>
    %c13 = arith.constant 13 : index
    %c0_221 = arith.constant 0 : index
    %c0_222 = arith.constant 0 : index
    %673 = vector.load %arg8[%c13, %c0_221, %c0_222] : memref<16x1x256xf32, #tpu.memory_space<vmem>>, vector<1x1x256xf32>
    %674 = vector.shape_cast %673 : vector<1x1x256xf32> to vector<1x256xf32>
    %675 = vector.broadcast %674 : vector<1x256xf32> to vector<16x256xf32>
    %676 = arith.addf %672, %675 : vector<16x256xf32>
    %677 = vector.extract_strided_slice %676 {offsets = [0, 0], sizes = [16, 128], strides = [1, 1]} : vector<16x256xf32> to vector<16x128xf32>
    %678 = arith.negf %677 : vector<16x128xf32>
    %679 = math.exp %678 : vector<16x128xf32>
    %cst_223 = arith.constant 1.000000e+00 : f32
    %680 = vector.broadcast %cst_223 : f32 to vector<16x128xf32>
    %681 = arith.addf %680, %679 : vector<16x128xf32>
    %682 = arith.divf %680, %681 : vector<16x128xf32>
    %683 = arith.mulf %677, %682 : vector<16x128xf32>
    %684 = vector.extract_strided_slice %676 {offsets = [0, 128], sizes = [16, 128], strides = [1, 1]} : vector<16x256xf32> to vector<16x128xf32>
    %685 = arith.mulf %683, %684 : vector<16x128xf32>
    %c488 = arith.constant 488 : index
    %c0_224 = arith.constant 0 : index
    %686 = vector.load %arg6[%c488, %c0_224] : memref<648x128xbf16, #tpu.memory_space<vmem>>, vector<128x32xbf16>
    %687 = arith.truncf %685 : vector<16x128xf32> to vector<16x128xbf16>
    %cst_225 = arith.constant dense<0.000000e+00> : vector<16x32xf32>
    %688 = tpu.matmul %687, %686, %cst_225 {dimension_numbers = #tpu.dot_dimension_numbers<[1], [0], [0], [1], [0, 0, 1, 1], [], []>} : vector<16x128xbf16>, vector<128x32xbf16>, vector<16x32xf32> -> vector<16x32xf32>
    %c14 = arith.constant 14 : index
    %c0_226 = arith.constant 0 : index
    %c0_227 = arith.constant 0 : index
    %689 = vector.load %arg8[%c14, %c0_226, %c0_227] : memref<16x1x256xf32, #tpu.memory_space<vmem>>, vector<1x1x256xf32>
    %690 = vector.shape_cast %689 : vector<1x1x256xf32> to vector<1x256xf32>
    %691 = vector.extract_strided_slice %690 {offsets = [0, 0], sizes = [1, 32], strides = [1, 1]} : vector<1x256xf32> to vector<1x32xf32>
    %692 = vector.broadcast %691 : vector<1x32xf32> to vector<16x32xf32>
    %693 = arith.addf %688, %692 : vector<16x32xf32>
    %694 = arith.addf %693, %647 : vector<16x32xf32>
    %cst_228 = arith.constant dense<0.000000e+00> : vector<16xf32>
    %695 = vector.multi_reduction <add>, %694, %cst_228 [1] : vector<16x32xf32> to vector<16xf32>
    %696 = vector.shape_cast %695 : vector<16xf32> to vector<16x1xf32>
    %cst_229 = arith.constant 3.200000e+01 : f32
    %697 = vector.broadcast %cst_229 : f32 to vector<16x1xf32>
    %698 = arith.divf %696, %697 : vector<16x1xf32>
    %699 = vector.broadcast %698 : vector<16x1xf32> to vector<16x32xf32>
    %700 = arith.subf %694, %699 : vector<16x32xf32>
    %701 = arith.mulf %700, %700 : vector<16x32xf32>
    %cst_230 = arith.constant dense<0.000000e+00> : vector<16xf32>
    %702 = vector.multi_reduction <add>, %701, %cst_230 [1] : vector<16x32xf32> to vector<16xf32>
    %703 = vector.shape_cast %702 : vector<16xf32> to vector<16x1xf32>
    %cst_231 = arith.constant 3.200000e+01 : f32
    %704 = vector.broadcast %cst_231 : f32 to vector<16x1xf32>
    %705 = arith.divf %703, %704 : vector<16x1xf32>
    %cst_232 = arith.constant 9.99999974E-6 : f32
    %706 = vector.broadcast %cst_232 : f32 to vector<16x1xf32>
    %707 = arith.addf %705, %706 : vector<16x1xf32>
    %708 = math.rsqrt %707 : vector<16x1xf32>
    %709 = vector.broadcast %708 : vector<16x1xf32> to vector<16x32xf32>
    %710 = arith.mulf %700, %709 : vector<16x32xf32>
    %c6_233 = arith.constant 6 : index
    %c0_234 = arith.constant 0 : index
    %c0_235 = arith.constant 0 : index
    %711 = vector.load %arg2[%c6_233, %c0_234, %c0_235] : memref<7x16x32xf32, #tpu.memory_space<vmem>>, vector<1x16x32xf32>
    %712 = vector.shape_cast %711 : vector<1x16x32xf32> to vector<16x32xf32>
    %713 = arith.mulf %710, %712 : vector<16x32xf32>
    %c6_236 = arith.constant 6 : index
    %c0_237 = arith.constant 0 : index
    %c0_238 = arith.constant 0 : index
    %714 = vector.load %arg3[%c6_236, %c0_237, %c0_238] : memref<7x16x32xf32, #tpu.memory_space<vmem>>, vector<1x16x32xf32>
    %715 = vector.shape_cast %714 : vector<1x16x32xf32> to vector<16x32xf32>
    %716 = arith.addf %713, %715 : vector<16x32xf32>
    %c616 = arith.constant 616 : index
    %c0_239 = arith.constant 0 : index
    %717 = vector.load %arg6[%c616, %c0_239] : memref<648x128xbf16, #tpu.memory_space<vmem>>, vector<32x24xbf16>
    %718 = arith.truncf %716 : vector<16x32xf32> to vector<16x32xbf16>
    %cst_240 = arith.constant dense<0.000000e+00> : vector<16x24xf32>
    %719 = tpu.matmul %718, %717, %cst_240 {dimension_numbers = #tpu.dot_dimension_numbers<[1], [0], [0], [1], [0, 0, 1, 1], [], []>} : vector<16x32xbf16>, vector<32x24xbf16>, vector<16x24xf32> -> vector<16x24xf32>
    %c15 = arith.constant 15 : index
    %c0_241 = arith.constant 0 : index
    %c0_242 = arith.constant 0 : index
    %720 = vector.load %arg8[%c15, %c0_241, %c0_242] : memref<16x1x256xf32, #tpu.memory_space<vmem>>, vector<1x1x256xf32>
    %721 = vector.shape_cast %720 : vector<1x1x256xf32> to vector<1x256xf32>
    %722 = vector.extract_strided_slice %721 {offsets = [0, 0], sizes = [1, 24], strides = [1, 1]} : vector<1x256xf32> to vector<1x24xf32>
    %723 = vector.broadcast %722 : vector<1x24xf32> to vector<16x24xf32>
    %724 = arith.addf %719, %723 : vector<16x24xf32>
    %c0_243 = arith.constant 0 : index
    %c0_244 = arith.constant 0 : index
    %725 = vector.load %arg4[%c0_243, %c0_244] : memref<16x24xf32, #tpu.memory_space<vmem>>, vector<16x24xf32>
    %726 = arith.mulf %724, %725 : vector<16x24xf32>
    %c0_245 = arith.constant 0 : index
    %c0_246 = arith.constant 0 : index
    %727 = vector.load %arg9[%c0_245, %c0_246] : memref<16x24xf32, #tpu.memory_space<vmem>>, vector<16x24xf32>
    tpu.vector_store %arg9[%c0_245, %c0_246], %726 {strides = array<i32>} : memref<16x24xf32, #tpu.memory_space<vmem>>, vector<16x24xf32>,
    return
  }
}

</mosaic_0001>

<llo_original>
// kernel: _lambda_.1
$region0: #{_lambda_.1}
  #allocation0 [shape = 'u32[]', space=smem, size = 0x4, offset = 0x4, fixed_abs, tag = 'smem constant byte address 0x4 - core index']
  #allocation1 [shape = 'u32[144,128]{1,0:T(1,128)}', space=vmem, size = 0x12000, scoped, tag = 'internal scratch']
  %s0 = inlined_call_operand.vmem [shape: f32[16,40], index: 0, kind: input, shape index: {}]
  %s1 = inlined_call_operand.vmem [shape: f32[16,32], index: 1, kind: input, shape index: {}]
  %s2 = inlined_call_operand.vmem [shape: f32[7,16,32], index: 2, kind: input, shape index: {}]
  %s3 = inlined_call_operand.vmem [shape: f32[7,16,32], index: 3, kind: input, shape index: {}]
  %s4 = inlined_call_operand.vmem [shape: f32[16,24], index: 4, kind: input, shape index: {}]
  %s5 = inlined_call_operand.vmem [shape: f32[16,16], index: 5, kind: input, shape index: {}]
  %s6 = inlined_call_operand.vmem [shape: bf16[648,128], index: 6, kind: input, shape index: {}]
  %s7 = inlined_call_operand.vmem [shape: bf16[64,256], index: 7, kind: input, shape index: {}]
  %s8 = inlined_call_operand.vmem [shape: f32[16,1,256], index: 8, kind: input, shape index: {}]
  %s9 = inlined_call_operand.hbm [shape: f32[16,24], index: 9, kind: output, shape index: {0}]
  %s10 = inlined_call_operand.vmem [shape: f32[2,16,64], index: 10, kind: output, shape index: {1}]
  %11 = xla_tuple %s9, %s10
  %s12 = sld [smem:[#allocation0]]
  $region54: #{_lambda_.1} parent=0
    _
  %s14 = ssub.s32 1, %s12
  %s15 = scalar_select 0, %s14, %s12
  $region1: #{_lambda_.1} parent=0
    #allocation2 [shape = 'u8[8192]{0}', space=vmem, size = 0x2000, scoped, tag = 'output window, operand 0, single buffered']
    #allocation3 [shape = 's32[1]{0}', space=sflag, size = 0x4, scoped, tag = 'scoped memory for _lambda_.1']
    %16 = vsyncpa [#allocation3], 0
    // Predicated region
    $region2: #{_lambda_.1} parent=1 // pred_check
      _
    $region3: #{_lambda_.1} parent=1 // pred_check_branch
      %18 = sbr.rel (0) target = $region5
    $region4: #{_lambda_.1} parent=1 // pred_region
      _
    $region5: #{_lambda_.1} parent=1 // pred_fallthru
      _
    // Predicated region
    $region6: #{_lambda_.1} parent=1 // pred_check
      _
    $region7: #{_lambda_.1} parent=1 // pred_check_branch
      %20 = sbr.rel (0) target = $region9
    $region8: #{_lambda_.1} parent=1 // pred_region
      _
    $region9: #{_lambda_.1} parent=1 // pred_fallthru
      _
    // Predicated region
    $region10: #{_lambda_.1} parent=1 // pred_check
      _
    $region11: #{_lambda_.1} parent=1 // pred_check_branch
      %22 = sbr.rel (0) target = $region13
    $region12: #{_lambda_.1} parent=1 // pred_region
      _
    $region13: #{_lambda_.1} parent=1 // pred_fallthru
      _
    // Predicated region
    $region14: #{_lambda_.1} parent=1 // pred_check
      _
    $region15: #{_lambda_.1} parent=1 // pred_check_branch
      %24 = sbr.rel (0) target = $region17
    $region16: #{_lambda_.1} parent=1 // pred_region
      _
    $region17: #{_lambda_.1} parent=1 // pred_fallthru
      _
    // Predicated region
    $region18: #{_lambda_.1} parent=1 // pred_check
      _
    $region19: #{_lambda_.1} parent=1 // pred_check_branch
      %26 = sbr.rel (0) target = $region21
    $region20: #{_lambda_.1} parent=1 // pred_region
      _
    $region21: #{_lambda_.1} parent=1 // pred_fallthru
      _
    // Predicated region
    $region22: #{_lambda_.1} parent=1 // pred_check
      _
    $region23: #{_lambda_.1} parent=1 // pred_check_branch
      %28 = sbr.rel (0) target = $region25
    $region24: #{_lambda_.1} parent=1 // pred_region
      _
    $region25: #{_lambda_.1} parent=1 // pred_fallthru
      _
    // Predicated region
    $region26: #{_lambda_.1} parent=1 // pred_check
      _
    $region27: #{_lambda_.1} parent=1 // pred_check_branch
      %30 = sbr.rel (0) target = $region29
    $region28: #{_lambda_.1} parent=1 // pred_region
      _
    $region29: #{_lambda_.1} parent=1 // pred_fallthru
      _
    // Predicated region
    $region30: #{_lambda_.1} parent=1 // pred_check
      _
    $region31: #{_lambda_.1} parent=1 // pred_check_branch
      %32 = sbr.rel (0) target = $region33
    $region32: #{_lambda_.1} parent=1 // pred_region
      _
    $region33: #{_lambda_.1} parent=1 // pred_fallthru
      _
    // Predicated region
    $region34: #{_lambda_.1} parent=1 // pred_check
      _
    $region35: #{_lambda_.1} parent=1 // pred_check_branch
      %34 = sbr.rel (0) target = $region37
    $region36: #{_lambda_.1} parent=1 // pred_region
      _
    $region37: #{_lambda_.1} parent=1 // pred_fallthru
      _
    %v36 = vld [vmem:[%s5] sm:$0xff]
    %v37 = vld [vmem:[%s5 + $0x8] sm:$0xff]
    %v38 = vlaneseq
    %v39 = vand.u32 %v38, 127
    %vm40 = vcmp.ge.s32.totalorder %v39, 0
    %vm41 = vcmp.lt.s32.totalorder %v39, 8
    %vm42 = vmand %vm40, %vm41
    %v43 = vsel %vm42, 1, 0
    %v44 = vcvt.s32.f32 %v43
    %vm45 = vcmp.ge.s32.totalorder %v39, 8
    %vm46 = vcmp.lt.s32.totalorder %v39, 16
    %vm47 = vmand %vm45, %vm46
    %v48 = vsel %vm47, 1, 0
    %v49 = vcvt.s32.f32 %v48
    %vm50 = vcmp.ge.s32.totalorder %v39, 16
    %vm51 = vcmp.lt.s32.totalorder %v39, 24
    %vm52 = vmand %vm50, %vm51
    %v53 = vsel %vm52, 1, 0
    %v54 = vcvt.s32.f32 %v53
    %vm55 = vcmp.ge.s32.totalorder %v39, 24
    %vm56 = vcmp.lt.s32.totalorder %v39, 32
    %vm57 = vmand %vm55, %vm56
    %v58 = vsel %vm57, 1, 0
    %v59 = vcvt.s32.f32 %v58
    %v60 = vld [vmem:[%s0] sm:$0xff]
    %v61 = vld [vmem:[%s0 + $0x8] sm:$0xff]
    %v62 = vld [vmem:[%s6] sm:$0xf]
    %v63 = vld [vmem:[%s6 + $0x4] sm:$0xf]
    %v64 = vld [vmem:[%s6 + $0x8] sm:$0xf]
    %v65 = vld [vmem:[%s6 + $0xc] sm:$0xf]
    %v66 = vld [vmem:[%s6 + $0x10] sm:$0xf]
    %v67 = vpack.c.bf16 %v61, %v60
    %v68 = vld [vmem:[%s8] sm:$0x3]
    %v70 = vlaneseq
    %v71 = vshrl.u32 %v70, 7
    %v72 = vsub.s32 0, %v71
    %v73 = vrot.slane %v68, %v72
    %v80 = vunpack.c.l.b16 %v62
    %v81 = vunpack.c.l.b16 %v63
    %v82 = vunpack.c.l.b16 %v64
    %v83 = vunpack.c.l.b16 %v65
    %v84 = vunpack.c.l.b16 %v66
    %v85 = vpack.c.b16 %v81, %v80
    %v86 = vpack.c.b16 %v83, %v82
    %v87 = vpack.c.b16 %v84, %v84
    %vm90 = vcmask 326656
    %v92 = vsel %vm90, %v67, 0
    %vm94 = vcmask 1043456
    %v96 = vsel %vm94, %v87, 0
    %98 = vmatprep.subr.bf16.mxu0 0
    %99 = vmatpush1.bf16.msra.mxu0 %v85
    %100 = vmatprep.subr.bf16.mxu0 0
    %101 = vmatpush1.bf16.msra.mxu0 %v86
    %102 = vmatprep.subr.bf16.mxu0 0
    %103 = vmatpush1.bf16.msra.mxu0 %v96
    %104 = vmatprep.subr.bf16.mxu0 0
    %105 = vmatpush1.bf16.msra.mxu0 0
    %106 = vmatprep.subr.bf16.mxu0 0
    %107 = vmatpush1.bf16.msra.mxu0 0
    %108 = vmatprep.subr.bf16.mxu0 0
    %109 = vmatpush1.bf16.msra.mxu0 0
    %110 = vmatprep.subr.bf16.mxu0 0
    %111 = vmatpush1.bf16.msra.mxu0 0
    %112 = vmatprep.subr.bf16.mxu0 0
    %113 = vmatpush1.bf16.msra.mxu0 0
    %114 = vmatprep.subr.bf16.mxu0 0
    %115 = vmatpush1.bf16.msra.mxu0 0
    %116 = vmatprep.subr.bf16.mxu0 0
    %117 = vmatpush1.bf16.msra.mxu0 0
    %118 = vmatprep.subr.bf16.mxu0 0
    %119 = vmatpush1.bf16.msra.mxu0 0
    %120 = vmatprep.subr.bf16.mxu0 0
    %121 = vmatpush1.bf16.msra.mxu0 0
    %122 = vmatprep.subr.bf16.mxu0 0
    %123 = vmatpush1.bf16.msra.mxu0 0
    %124 = vmatprep.subr.bf16.mxu0 0
    %125 = vmatpush1.bf16.msra.mxu0 0
    %126 = vmatprep.subr.bf16.mxu0 0
    %127 = vmatpush1.bf16.msra.mxu0 0
    %128 = vmatprep.subr.bf16.mxu0 0
    %129 = vmatpush1.bf16.msra.mxu0 0
    %130 = vmatprep.mubr.bf16.mxu0 0
    %131 = vmatmul.mubr.bf16.gmra.mrb[0].mxu0 %v92
    %v132 = vpop.f32.mrb[0].mxu0
    %v133 = vadd.f32 %v73, %v132
    %v134 = vpop.f32.mrb[0].mxu0
    %v135 = vpop.f32.mrb[0].mxu0
    %v136 = vadd.f32 %v73, %v135
    %v137 = vpop.f32.mrb[0].mxu0
    %138 = vdwg.mxu0
    %v139 = vld [vmem:[%s1] sm:$0xff]
    %v140 = vld [vmem:[%s1 + $0x8] sm:$0xff]
    %v141 = vadd.f32 %v133, %v139
    %v142 = vadd.f32 %v136, %v140
    %vm143 = vcmask 261120
    %v144 = vsel %vm143, %v141, 0.0
    %145 = vadd.xlane.f32.xlu0 %v144
    %v146 = vpop.xlane.xlu0 %145
    %v147 = vsel %vm143, %v142, 0.0
    %148 = vadd.xlane.f32.xlu0 %v147
    %v149 = vpop.xlane.xlu0 %148
    %v150 = vrcp.pop 32.0
    %v151 = vmul.f32 %v146, %v150
    %v152 = vmul.f32 %v149, %v150
    %v153 = vsub.f32 %v141, %v151
    %v154 = vsub.f32 %v142, %v152
    %v155 = vmul.f32 %v153, %v153
    %v156 = vmul.f32 %v154, %v154
    %v157 = vsel %vm143, %v155, 0.0
    %158 = vadd.xlane.f32.xlu0 %v157
    %v159 = vpop.xlane.xlu0 %158
    %v160 = vsel %vm143, %v156, 0.0
    %161 = vadd.xlane.f32.xlu0 %v160
    %v162 = vpop.xlane.xlu0 %161
    %v163 = vmul.f32 %v159, %v150
    %v164 = vmul.f32 %v162, %v150
    %v165 = vadd.f32 %v163, 1e-05
    %v166 = vadd.f32 %v164, 1e-05
    %v167 = vrsqrt.pop %v165
    %v168 = vrsqrt.pop %v166
    %v169 = vmul.f32 %v153, %v167
    %v170 = vmul.f32 %v154, %v168
    %v171 = vld [vmem:[%s2] sm:$0xff]
    %v172 = vld [vmem:[%s2 + $0x8] sm:$0xff]
    %v173 = vmul.f32 %v169, %v171
    %v174 = vmul.f32 %v170, %v172
    %v175 = vld [vmem:[%s3] sm:$0xff]
    %v176 = vld [vmem:[%s3 + $0x8] sm:$0xff]
    %v177 = vadd.f32 %v173, %v175
    %v178 = vadd.f32 %v174, %v176
    %v179 = vld [vmem:[%s6 + $0x14] sm:$0xf]
    %v180 = vld [vmem:[%s6 + $0x18] sm:$0xf]
    %v181 = vld [vmem:[%s6 + $0x1c] sm:$0xf]
    %v182 = vld [vmem:[%s6 + $0x20] sm:$0xf]
    %v183 = vpack.c.bf16 %v178, %v177
    %s184 = scalar_lea.vmem %s8, 2
    %v185 = vld [vmem:[%s184] sm:$0x3]
    %v187 = vlaneseq
    %v188 = vshrl.u32 %v187, 7
    %v189 = vsub.s32 0, %v188
    %v190 = vrot.slane %v185, %v189
    %v196 = vunpack.c.l.b16 %v179
    %v197 = vunpack.c.l.b16 %v180
    %v198 = vunpack.c.l.b16 %v181
    %v199 = vunpack.c.l.b16 %v182
    %v200 = vpack.c.b16 %v197, %v196
    %v201 = vpack.c.b16 %v199, %v198
    %v205 = vsel %vm143, %v183, 0
    %207 = vmatprep.subr.bf16.mxu0 0
    %208 = vmatpush1.bf16.msra.mxu0 %v200
    %209 = vmatprep.subr.bf16.mxu0 0
    %210 = vmatpush1.bf16.msra.mxu0 %v201
    %211 = vmatprep.subr.bf16.mxu0 0
    %212 = vmatpush1.bf16.msra.mxu0 0
    %213 = vmatprep.subr.bf16.mxu0 0
    %214 = vmatpush1.bf16.msra.mxu0 0
    %215 = vmatprep.subr.bf16.mxu0 0
    %216 = vmatpush1.bf16.msra.mxu0 0
    %217 = vmatprep.subr.bf16.mxu0 0
    %218 = vmatpush1.bf16.msra.mxu0 0
    %219 = vmatprep.subr.bf16.mxu0 0
    %220 = vmatpush1.bf16.msra.mxu0 0
    %221 = vmatprep.subr.bf16.mxu0 0
    %222 = vmatpush1.bf16.msra.mxu0 0
    %223 = vmatprep.subr.bf16.mxu0 0
    %224 = vmatpush1.bf16.msra.mxu0 0
    %225 = vmatprep.subr.bf16.mxu0 0
    %226 = vmatpush1.bf16.msra.mxu0 0
    %227 = vmatprep.subr.bf16.mxu0 0
    %228 = vmatpush1.bf16.msra.mxu0 0
    %229 = vmatprep.subr.bf16.mxu0 0
    %230 = vmatpush1.bf16.msra.mxu0 0
    %231 = vmatprep.subr.bf16.mxu0 0
    %232 = vmatpush1.bf16.msra.mxu0 0
    %233 = vmatprep.subr.bf16.mxu0 0
    %234 = vmatpush1.bf16.msra.mxu0 0
    %235 = vmatprep.subr.bf16.mxu0 0
    %236 = vmatpush1.bf16.msra.mxu0 0
    %237 = vmatprep.subr.bf16.mxu0 0
    %238 = vmatpush1.bf16.msra.mxu0 0
    %239 = vmatprep.mubr.bf16.mxu0 0
    %240 = vmatmul.mubr.bf16.gmra.mrb[0].mxu0 %v205
    %v241 = vpop.f32.mrb[0].mxu0
    %v242 = vadd.f32 %v190, %v241
    %v243 = vpop.f32.mrb[0].mxu0
    %v244 = vpop.f32.mrb[0].mxu0
    %v245 = vadd.f32 %v190, %v244
    %v246 = vpop.f32.mrb[0].mxu0
    %247 = vdwg.mxu0
    %v248 = vpack.c.bf16 %v245, %v242
    %v249 = vmul.f32 %v242, %v44
    %v250 = vmul.f32 %v245, %v44
    %v251 = vpack.c.bf16 %v250, %v249
    %253 = vrot.lane.b32.xlu0 %v248, 96
    %v254 = vpop.permute.xlu0 %253
    %v256 = vsel %vm143, %v251, 0
    %v259 = vsel %vm143, %v254, 0
    %261 = vmatprep.subr.bf16.mxu0 0
    %262 = vmatpush1.bf16.xpose.msra.mxu0 %v259
    %263 = vmatprep.subr.bf16.mxu0 0
    %264 = vmatpush1.bf16.xpose.msra.mxu0 0
    %265 = vmatprep.subr.bf16.mxu0 0
    %266 = vmatpush1.bf16.xpose.msra.mxu0 0
    %267 = vmatprep.subr.bf16.mxu0 0
    %268 = vmatpush1.bf16.xpose.msra.mxu0 0
    %269 = vmatprep.subr.bf16.mxu0 0
    %270 = vmatpush1.bf16.xpose.msra.mxu0 0
    %271 = vmatprep.subr.bf16.mxu0 0
    %272 = vmatpush1.bf16.xpose.msra.mxu0 0
    %273 = vmatprep.subr.bf16.mxu0 0
    %274 = vmatpush1.bf16.xpose.msra.mxu0 0
    %275 = vmatprep.subr.bf16.mxu0 0
    %276 = vmatpush1.bf16.xpose.msra.mxu0 0
    %277 = vmatprep.subr.bf16.mxu0 0
    %278 = vmatpush1.bf16.xpose.msra.mxu0 0
    %279 = vmatprep.subr.bf16.mxu0 0
    %280 = vmatpush1.bf16.xpose.msra.mxu0 0
    %281 = vmatprep.subr.bf16.mxu0 0
    %282 = vmatpush1.bf16.xpose.msra.mxu0 0
    %283 = vmatprep.subr.bf16.mxu0 0
    %284 = vmatpush1.bf16.xpose.msra.mxu0 0
    %285 = vmatprep.subr.bf16.mxu0 0
    %286 = vmatpush1.bf16.xpose.msra.mxu0 0
    %287 = vmatprep.subr.bf16.mxu0 0
    %288 = vmatpush1.bf16.xpose.msra.mxu0 0
    %289 = vmatprep.subr.bf16.mxu0 0
    %290 = vmatpush1.bf16.xpose.msra.mxu0 0
    %291 = vmatprep.subr.bf16.mxu0 0
    %292 = vmatpush1.bf16.xpose.msra.mxu0 0
    %293 = vmatprep.mubr.bf16.mxu0 0
    %294 = vmatmul.mubr.bf16.gmra.mrb[0].mxu0 %v256
    %v295 = vpop.f32.mrb[0].mxu0
    %v296 = vadd.f32 0.0, %v295
    %v297 = vpop.f32.mrb[0].mxu0
    %v298 = vpop.f32.mrb[0].mxu0
    %v299 = vadd.f32 0.0, %v298
    %v300 = vpop.f32.mrb[0].mxu0
    %301 = vdwg.mxu0
    %v302 = vmul.f32 %v296, 0.35355338
    %v303 = vmul.f32 %v299, 0.35355338
    %v304 = vadd.f32 %v302, %v36
    %v305 = vadd.f32 %v303, %v37
    %vm306 = vcmask 130048
    %v307 = vsel %vm306, %v304, -inf
    %308 = vmax.xlane.f32.xlu0 %v307
    %v309 = vpop.xlane.xlu0 %308
    %v310 = vsel %vm306, %v305, -inf
    %311 = vmax.xlane.f32.xlu0 %v310
    %v312 = vpop.xlane.xlu0 %311
    %v313 = vsub.f32 %v304, %v309
    %v314 = vsub.f32 %v305, %v312
    %v315 = vmul.f32 %v313, 1.442695
    %v316 = vpow.pop %v315
    %v317 = vmul.f32 %v314, 1.442695
    %v318 = vpow.pop %v317
    %v319 = vsel %vm306, %v316, 0.0
    %320 = vadd.xlane.f32.xlu0 %v319
    %v321 = vpop.xlane.xlu0 %320
    %v322 = vsel %vm306, %v318, 0.0
    %323 = vadd.xlane.f32.xlu0 %v322
    %v324 = vpop.xlane.xlu0 %323
    %v325 = vrcp.pop %v321
    %v326 = vrcp.pop %v324
    %v327 = vmul.f32 %v316, %v325
    %v328 = vmul.f32 %v318, %v326
    %330 = vrot.lane.b32.xlu0 %v44, 64
    %v331 = vpop.permute.xlu0 %330
    %v333 = vmul.f32 %v242, %v331
    %v334 = vmul.f32 %v245, %v331
    %v335 = vpack.c.bf16 %v334, %v333
    %v336 = vpack.c.bf16 %v328, %v327
    %v337 = vmul.f32 %v242, %v49
    %v338 = vmul.f32 %v245, %v49
    %v339 = vpack.c.bf16 %v338, %v337
    %v341 = vsel %vm143, %v339, 0
    %343 = vmatprep.subr.bf16.mxu0 0
    %344 = vmatpush1.bf16.xpose.msra.mxu0 %v259
    %345 = vmatprep.subr.bf16.mxu0 0
    %346 = vmatpush1.bf16.xpose.msra.mxu0 0
    %347 = vmatprep.subr.bf16.mxu0 0
    %348 = vmatpush1.bf16.xpose.msra.mxu0 0
    %349 = vmatprep.subr.bf16.mxu0 0
    %350 = vmatpush1.bf16.xpose.msra.mxu0 0
    %351 = vmatprep.subr.bf16.mxu0 0
    %352 = vmatpush1.bf16.xpose.msra.mxu0 0
    %353 = vmatprep.subr.bf16.mxu0 0
    %354 = vmatpush1.bf16.xpose.msra.mxu0 0
    %355 = vmatprep.subr.bf16.mxu0 0
    %356 = vmatpush1.bf16.xpose.msra.mxu0 0
    %357 = vmatprep.subr.bf16.mxu0 0
    %358 = vmatpush1.bf16.xpose.msra.mxu0 0
    %359 = vmatprep.subr.bf16.mxu0 0
    %360 = vmatpush1.bf16.xpose.msra.mxu0 0
    %361 = vmatprep.subr.bf16.mxu0 0
    %362 = vmatpush1.bf16.xpose.msra.mxu0 0
    %363 = vmatprep.subr.bf16.mxu0 0
    %364 = vmatpush1.bf16.xpose.msra.mxu0 0
    %365 = vmatprep.subr.bf16.mxu0 0
    %366 = vmatpush1.bf16.xpose.msra.mxu0 0
    %367 = vmatprep.subr.bf16.mxu0 0
    %368 = vmatpush1.bf16.xpose.msra.mxu0 0
    %369 = vmatprep.subr.bf16.mxu0 0
    %370 = vmatpush1.bf16.xpose.msra.mxu0 0
    %371 = vmatprep.subr.bf16.mxu0 0
    %372 = vmatpush1.bf16.xpose.msra.mxu0 0
    %373 = vmatprep.subr.bf16.mxu0 0
    %374 = vmatpush1.bf16.xpose.msra.mxu0 0
    %375 = vmatprep.mubr.bf16.mxu0 0
    %376 = vmatmul.mubr.bf16.gmra.mrb[0].mxu0 %v341
    %v377 = vpop.f32.mrb[0].mxu0
    %v378 = vadd.f32 0.0, %v377
    %v379 = vpop.f32.mrb[0].mxu0
    %v380 = vpop.f32.mrb[0].mxu0
    %v381 = vadd.f32 0.0, %v380
    %v382 = vpop.f32.mrb[0].mxu0
    %383 = vdwg.mxu0
    %v384 = vmul.f32 %v378, 0.35355338
    %v385 = vmul.f32 %v381, 0.35355338
    %v386 = vadd.f32 %v384, %v36
    %v387 = vadd.f32 %v385, %v37
    %v388 = vsel %vm306, %v386, -inf
    %389 = vmax.xlane.f32.xlu0 %v388
    %v390 = vpop.xlane.xlu0 %389
    %v391 = vsel %vm306, %v387, -inf
    %392 = vmax.xlane.f32.xlu0 %v391
    %v393 = vpop.xlane.xlu0 %392
    %v394 = vsub.f32 %v386, %v390
    %v395 = vsub.f32 %v387, %v393
    %v396 = vmul.f32 %v394, 1.442695
    %v397 = vpow.pop %v396
    %v398 = vmul.f32 %v395, 1.442695
    %v399 = vpow.pop %v398
    %v400 = vsel %vm306, %v397, 0.0
    %401 = vadd.xlane.f32.xlu0 %v400
    %v402 = vpop.xlane.xlu0 %401
    %v403 = vsel %vm306, %v399, 0.0
    %404 = vadd.xlane.f32.xlu0 %v403
    %v405 = vpop.xlane.xlu0 %404
    %v406 = vrcp.pop %v402
    %v407 = vrcp.pop %v405
    %v408 = vmul.f32 %v397, %v406
    %v409 = vmul.f32 %v399, %v407
    %411 = vrot.lane.b32.xlu0 %v49, 64
    %v412 = vpop.permute.xlu0 %411
    %v414 = vmul.f32 %v242, %v412
    %v415 = vmul.f32 %v245, %v412
    %v416 = vpack.c.bf16 %v415, %v414
    %v417 = vpack.c.bf16 %v409, %v408
    %419 = vrot.lane.b32.xlu0 %v416, 64
    %v420 = vpop.permute.xlu0 %419
    %v423 = vsel %vm306, %v417, 0
    %425 = vmatprep.subr.bf16.mxu0 0
    %426 = vmatpush1.bf16.msra.mxu0 %v420
    %427 = vmatprep.subr.bf16.mxu0 0
    %428 = vmatpush1.bf16.msra.mxu0 0
    %429 = vmatprep.subr.bf16.mxu0 0
    %430 = vmatpush1.bf16.msra.mxu0 0
    %431 = vmatprep.subr.bf16.mxu0 0
    %432 = vmatpush1.bf16.msra.mxu0 0
    %433 = vmatprep.subr.bf16.mxu0 0
    %434 = vmatpush1.bf16.msra.mxu0 0
    %435 = vmatprep.subr.bf16.mxu0 0
    %436 = vmatpush1.bf16.msra.mxu0 0
    %437 = vmatprep.subr.bf16.mxu0 0
    %438 = vmatpush1.bf16.msra.mxu0 0
    %439 = vmatprep.subr.bf16.mxu0 0
    %440 = vmatpush1.bf16.msra.mxu0 0
    %441 = vmatprep.subr.bf16.mxu0 0
    %442 = vmatpush1.bf16.msra.mxu0 0
    %443 = vmatprep.subr.bf16.mxu0 0
    %444 = vmatpush1.bf16.msra.mxu0 0
    %445 = vmatprep.subr.bf16.mxu0 0
    %446 = vmatpush1.bf16.msra.mxu0 0
    %447 = vmatprep.subr.bf16.mxu0 0
    %448 = vmatpush1.bf16.msra.mxu0 0
    %449 = vmatprep.subr.bf16.mxu0 0
    %450 = vmatpush1.bf16.msra.mxu0 0
    %451 = vmatprep.subr.bf16.mxu0 0
    %452 = vmatpush1.bf16.msra.mxu0 0
    %453 = vmatprep.subr.bf16.mxu0 0
    %454 = vmatpush1.bf16.msra.mxu0 0
    %455 = vmatprep.subr.bf16.mxu0 0
    %456 = vmatpush1.bf16.msra.mxu0 0
    %457 = vmatprep.mubr.bf16.mxu0 0
    %458 = vmatmul.mubr.bf16.gmra.mrb[0].mxu0 %v423
    %v459 = vpop.f32.mrb[0].mxu0
    %v460 = vadd.f32 0.0, %v459
    %v461 = vpop.f32.mrb[0].mxu0
    %v462 = vpop.f32.mrb[0].mxu0
    %v463 = vadd.f32 0.0, %v462
    %v464 = vpop.f32.mrb[0].mxu0
    %465 = vdwg.mxu0
    %467 = vrot.lane.b32.xlu0 %v335, 64
    %v468 = vpop.permute.xlu0 %467
    %v471 = vsel %vm306, %v336, 0
    %473 = vmatprep.subr.bf16.mxu0 0
    %474 = vmatpush1.bf16.msra.mxu0 %v468
    %475 = vmatprep.subr.bf16.mxu0 0
    %476 = vmatpush1.bf16.msra.mxu0 0
    %477 = vmatprep.subr.bf16.mxu0 0
    %478 = vmatpush1.bf16.msra.mxu0 0
    %479 = vmatprep.subr.bf16.mxu0 0
    %480 = vmatpush1.bf16.msra.mxu0 0
    %481 = vmatprep.subr.bf16.mxu0 0
    %482 = vmatpush1.bf16.msra.mxu0 0
    %483 = vmatprep.subr.bf16.mxu0 0
    %484 = vmatpush1.bf16.msra.mxu0 0
    %485 = vmatprep.subr.bf16.mxu0 0
    %486 = vmatpush1.bf16.msra.mxu0 0
    %487 = vmatprep.subr.bf16.mxu0 0
    %488 = vmatpush1.bf16.msra.mxu0 0
    %489 = vmatprep.subr.bf16.mxu0 0
    %490 = vmatpush1.bf16.msra.mxu0 0
    %491 = vmatprep.subr.bf16.mxu0 0
    %492 = vmatpush1.bf16.msra.mxu0 0
    %493 = vmatprep.subr.bf16.mxu0 0
    %494 = vmatpush1.bf16.msra.mxu0 0
    %495 = vmatprep.subr.bf16.mxu0 0
    %496 = vmatpush1.bf16.msra.mxu0 0
    %497 = vmatprep.subr.bf16.mxu0 0
    %498 = vmatpush1.bf16.msra.mxu0 0
    %499 = vmatprep.subr.bf16.mxu0 0
    %500 = vmatpush1.bf16.msra.mxu0 0
    %501 = vmatprep.subr.bf16.mxu0 0
    %502 = vmatpush1.bf16.msra.mxu0 0
    %503 = vmatprep.subr.bf16.mxu0 0
    %504 = vmatpush1.bf16.msra.mxu0 0
    %505 = vmatprep.mubr.bf16.mxu0 0
    %506 = vmatmul.mubr.bf16.gmra.mrb[0].mxu0 %v471
    %v507 = vpop.f32.mrb[0].mxu0
    %v508 = vadd.f32 %v460, %v507
    %v509 = vpop.f32.mrb[0].mxu0
    %v510 = vpop.f32.mrb[0].mxu0
    %v511 = vadd.f32 %v463, %v510
    %v512 = vpop.f32.mrb[0].mxu0
    %513 = vdwg.mxu0
    %v514 = vmul.f32 %v242, %v54
    %v515 = vmul.f32 %v245, %v54
    %v516 = vpack.c.bf16 %v515, %v514
    %v518 = vsel %vm143, %v516, 0
    %520 = vmatprep.subr.bf16.mxu0 0
    %521 = vmatpush1.bf16.xpose.msra.mxu0 %v259
    %522 = vmatprep.subr.bf16.mxu0 0
    %523 = vmatpush1.bf16.xpose.msra.mxu0 0
    %524 = vmatprep.subr.bf16.mxu0 0
    %525 = vmatpush1.bf16.xpose.msra.mxu0 0
    %526 = vmatprep.subr.bf16.mxu0 0
    %527 = vmatpush1.bf16.xpose.msra.mxu0 0
    %528 = vmatprep.subr.bf16.mxu0 0
    %529 = vmatpush1.bf16.xpose.msra.mxu0 0
    %530 = vmatprep.subr.bf16.mxu0 0
    %531 = vmatpush1.bf16.xpose.msra.mxu0 0
    %532 = vmatprep.subr.bf16.mxu0 0
    %533 = vmatpush1.bf16.xpose.msra.mxu0 0
    %534 = vmatprep.subr.bf16.mxu0 0
    %535 = vmatpush1.bf16.xpose.msra.mxu0 0
    %536 = vmatprep.subr.bf16.mxu0 0
    %537 = vmatpush1.bf16.xpose.msra.mxu0 0
    %538 = vmatprep.subr.bf16.mxu0 0
    %539 = vmatpush1.bf16.xpose.msra.mxu0 0
    %540 = vmatprep.subr.bf16.mxu0 0
    %541 = vmatpush1.bf16.xpose.msra.mxu0 0
    %542 = vmatprep.subr.bf16.mxu0 0
    %543 = vmatpush1.bf16.xpose.msra.mxu0 0
    %544 = vmatprep.subr.bf16.mxu0 0
    %545 = vmatpush1.bf16.xpose.msra.mxu0 0
    %546 = vmatprep.subr.bf16.mxu0 0
    %547 = vmatpush1.bf16.xpose.msra.mxu0 0
    %548 = vmatprep.subr.bf16.mxu0 0
    %549 = vmatpush1.bf16.xpose.msra.mxu0 0
    %550 = vmatprep.subr.bf16.mxu0 0
    %551 = vmatpush1.bf16.xpose.msra.mxu0 0
    %552 = vmatprep.mubr.bf16.mxu0 0
    %553 = vmatmul.mubr.bf16.gmra.mrb[0].mxu0 %v518
    %v554 = vpop.f32.mrb[0].mxu0
    %v555 = vadd.f32 0.0, %v554
    %v556 = vpop.f32.mrb[0].mxu0
    %v557 = vpop.f32.mrb[0].mxu0
    %v558 = vadd.f32 0.0, %v557
    %v559 = vpop.f32.mrb[0].mxu0
    %560 = vdwg.mxu0
    %v561 = vmul.f32 %v555, 0.35355338
    %v562 = vmul.f32 %v558, 0.35355338
    %v563 = vadd.f32 %v561, %v36
    %v564 = vadd.f32 %v562, %v37
    %v565 = vsel %vm306, %v563, -inf
    %566 = vmax.xlane.f32.xlu0 %v565
    %v567 = vpop.xlane.xlu0 %566
    %v568 = vsel %vm306, %v564, -inf
    %569 = vmax.xlane.f32.xlu0 %v568
    %v570 = vpop.xlane.xlu0 %569
    %v571 = vsub.f32 %v563, %v567
    %v572 = vsub.f32 %v564, %v570
    %v573 = vmul.f32 %v571, 1.442695
    %v574 = vpow.pop %v573
    %v575 = vmul.f32 %v572, 1.442695
    %v576 = vpow.pop %v575
    %v577 = vsel %vm306, %v574, 0.0
    %578 = vadd.xlane.f32.xlu0 %v577
    %v579 = vpop.xlane.xlu0 %578
    %v580 = vsel %vm306, %v576, 0.0
    %581 = vadd.xlane.f32.xlu0 %v580
    %v582 = vpop.xlane.xlu0 %581
    %v583 = vrcp.pop %v579
    %v584 = vrcp.pop %v582
    %v585 = vmul.f32 %v574, %v583
    %v586 = vmul.f32 %v576, %v584
    %588 = vrot.lane.b32.xlu0 %v54, 64
    %v589 = vpop.permute.xlu0 %588
    %v591 = vmul.f32 %v242, %v589
    %v592 = vmul.f32 %v245, %v589
    %v593 = vpack.c.bf16 %v592, %v591
    %v594 = vpack.c.bf16 %v586, %v585
    %596 = vrot.lane.b32.xlu0 %v593, 64
    %v597 = vpop.permute.xlu0 %596
    %v600 = vsel %vm306, %v594, 0
    %602 = vmatprep.subr.bf16.mxu0 0
    %603 = vmatpush1.bf16.msra.mxu0 %v597
    %604 = vmatprep.subr.bf16.mxu0 0
    %605 = vmatpush1.bf16.msra.mxu0 0
    %606 = vmatprep.subr.bf16.mxu0 0
    %607 = vmatpush1.bf16.msra.mxu0 0
    %608 = vmatprep.subr.bf16.mxu0 0
    %609 = vmatpush1.bf16.msra.mxu0 0
    %610 = vmatprep.subr.bf16.mxu0 0
    %611 = vmatpush1.bf16.msra.mxu0 0
    %612 = vmatprep.subr.bf16.mxu0 0
    %613 = vmatpush1.bf16.msra.mxu0 0
    %614 = vmatprep.subr.bf16.mxu0 0
    %615 = vmatpush1.bf16.msra.mxu0 0
    %616 = vmatprep.subr.bf16.mxu0 0
    %617 = vmatpush1.bf16.msra.mxu0 0
    %618 = vmatprep.subr.bf16.mxu0 0
    %619 = vmatpush1.bf16.msra.mxu0 0
    %620 = vmatprep.subr.bf16.mxu0 0
    %621 = vmatpush1.bf16.msra.mxu0 0
    %622 = vmatprep.subr.bf16.mxu0 0
    %623 = vmatpush1.bf16.msra.mxu0 0
    %624 = vmatprep.subr.bf16.mxu0 0
    %625 = vmatpush1.bf16.msra.mxu0 0
    %626 = vmatprep.subr.bf16.mxu0 0
    %627 = vmatpush1.bf16.msra.mxu0 0
    %628 = vmatprep.subr.bf16.mxu0 0
    %629 = vmatpush1.bf16.msra.mxu0 0
    %630 = vmatprep.subr.bf16.mxu0 0
    %631 = vmatpush1.bf16.msra.mxu0 0
    %632 = vmatprep.subr.bf16.mxu0 0
    %633 = vmatpush1.bf16.msra.mxu0 0
    %634 = vmatprep.mubr.bf16.mxu0 0
    %635 = vmatmul.mubr.bf16.gmra.mrb[0].mxu0 %v600
    %v636 = vpop.f32.mrb[0].mxu0
    %v637 = vadd.f32 0.0, %v636
    %v638 = vpop.f32.mrb[0].mxu0
    %v639 = vpop.f32.mrb[0].mxu0
    %v640 = vadd.f32 0.0, %v639
    %v641 = vpop.f32.mrb[0].mxu0
    %642 = vdwg.mxu0
    %v643 = vadd.f32 %v508, %v637
    %v644 = vadd.f32 %v511, %v640
    %v645 = vmul.f32 %v242, %v59
    %v646 = vmul.f32 %v245, %v59
    %v647 = vpack.c.bf16 %v646, %v645
    %v649 = vsel %vm143, %v647, 0
    %651 = vmatprep.subr.bf16.mxu0 0
    %652 = vmatpush1.bf16.xpose.msra.mxu0 %v259
    %653 = vmatprep.subr.bf16.mxu0 0
    %654 = vmatpush1.bf16.xpose.msra.mxu0 0
    %655 = vmatprep.subr.bf16.mxu0 0
    %656 = vmatpush1.bf16.xpose.msra.mxu0 0
    %657 = vmatprep.subr.bf16.mxu0 0
    %658 = vmatpush1.bf16.xpose.msra.mxu0 0
    %659 = vmatprep.subr.bf16.mxu0 0
    %660 = vmatpush1.bf16.xpose.msra.mxu0 0
    %661 = vmatprep.subr.bf16.mxu0 0
    %662 = vmatpush1.bf16.xpose.msra.mxu0 0
    %663 = vmatprep.subr.bf16.mxu0 0
    %664 = vmatpush1.bf16.xpose.msra.mxu0 0
    %665 = vmatprep.subr.bf16.mxu0 0
    %666 = vmatpush1.bf16.xpose.msra.mxu0 0
    %667 = vmatprep.subr.bf16.mxu0 0
    %668 = vmatpush1.bf16.xpose.msra.mxu0 0
    %669 = vmatprep.subr.bf16.mxu0 0
    %670 = vmatpush1.bf16.xpose.msra.mxu0 0
    %671 = vmatprep.subr.bf16.mxu0 0
    %672 = vmatpush1.bf16.xpose.msra.mxu0 0
    %673 = vmatprep.subr.bf16.mxu0 0
    %674 = vmatpush1.bf16.xpose.msra.mxu0 0
    %675 = vmatprep.subr.bf16.mxu0 0
    %676 = vmatpush1.bf16.xpose.msra.mxu0 0
    %677 = vmatprep.subr.bf16.mxu0 0
    %678 = vmatpush1.bf16.xpose.msra.mxu0 0
    %679 = vmatprep.subr.bf16.mxu0 0
    %680 = vmatpush1.bf16.xpose.msra.mxu0 0
    %681 = vmatprep.subr.bf16.mxu0 0
    %682 = vmatpush1.bf16.xpose.msra.mxu0 0
    %683 = vmatprep.mubr.bf16.mxu0 0
    %684 = vmatmul.mubr.bf16.gmra.mrb[0].mxu0 %v649
    %v685 = vpop.f32.mrb[0].mxu0
    %v686 = vadd.f32 0.0, %v685
    %v687 = vpop.f32.mrb[0].mxu0
    %v688 = vpop.f32.mrb[0].mxu0
    %v689 = vadd.f32 0.0, %v688
    %v690 = vpop.f32.mrb[0].mxu0
    %691 = vdwg.mxu0
    %v692 = vmul.f32 %v686, 0.35355338
    %v693 = vmul.f32 %v689, 0.35355338
    %v694 = vadd.f32 %v692, %v36
    %v695 = vadd.f32 %v693, %v37
    %v696 = vsel %vm306, %v694, -inf
    %697 = vmax.xlane.f32.xlu0 %v696
    %v698 = vpop.xlane.xlu0 %697
    %v699 = vsel %vm306, %v695, -inf
    %700 = vmax.xlane.f32.xlu0 %v699
    %v701 = vpop.xlane.xlu0 %700
    %v702 = vsub.f32 %v694, %v698
    %v703 = vsub.f32 %v695, %v701
    %v704 = vmul.f32 %v702, 1.442695
    %v705 = vpow.pop %v704
    %v706 = vmul.f32 %v703, 1.442695
    %v707 = vpow.pop %v706
    %v708 = vsel %vm306, %v705, 0.0
    %709 = vadd.xlane.f32.xlu0 %v708
    %v710 = vpop.xlane.xlu0 %709
    %v711 = vsel %vm306, %v707, 0.0
    %712 = vadd.xlane.f32.xlu0 %v711
    %v713 = vpop.xlane.xlu0 %712
    %v714 = vrcp.pop %v710
    %v715 = vrcp.pop %v713
    %v716 = vmul.f32 %v705, %v714
    %v717 = vmul.f32 %v707, %v715
    %719 = vrot.lane.b32.xlu0 %v59, 64
    %v720 = vpop.permute.xlu0 %719
    %v722 = vmul.f32 %v242, %v720
    %v723 = vmul.f32 %v245, %v720
    %v724 = vpack.c.bf16 %v723, %v722
    %v725 = vpack.c.bf16 %v717, %v716
    %727 = vrot.lane.b32.xlu0 %v724, 64
    %v728 = vpop.permute.xlu0 %727
    %v731 = vsel %vm306, %v725, 0
    %733 = vmatprep.subr.bf16.mxu0 0
    %734 = vmatpush1.bf16.msra.mxu0 %v728
    %735 = vmatprep.subr.bf16.mxu0 0
    %736 = vmatpush1.bf16.msra.mxu0 0
    %737 = vmatprep.subr.bf16.mxu0 0
    %738 = vmatpush1.bf16.msra.mxu0 0
    %739 = vmatprep.subr.bf16.mxu0 0
    %740 = vmatpush1.bf16.msra.mxu0 0
    %741 = vmatprep.subr.bf16.mxu0 0
    %742 = vmatpush1.bf16.msra.mxu0 0
    %743 = vmatprep.subr.bf16.mxu0 0
    %744 = vmatpush1.bf16.msra.mxu0 0
    %745 = vmatprep.subr.bf16.mxu0 0
    %746 = vmatpush1.bf16.msra.mxu0 0
    %747 = vmatprep.subr.bf16.mxu0 0
    %748 = vmatpush1.bf16.msra.mxu0 0
    %749 = vmatprep.subr.bf16.mxu0 0
    %750 = vmatpush1.bf16.msra.mxu0 0
    %751 = vmatprep.subr.bf16.mxu0 0
    %752 = vmatpush1.bf16.msra.mxu0 0
    %753 = vmatprep.subr.bf16.mxu0 0
    %754 = vmatpush1.bf16.msra.mxu0 0
    %755 = vmatprep.subr.bf16.mxu0 0
    %756 = vmatpush1.bf16.msra.mxu0 0
    %757 = vmatprep.subr.bf16.mxu0 0
    %758 = vmatpush1.bf16.msra.mxu0 0
    %759 = vmatprep.subr.bf16.mxu0 0
    %760 = vmatpush1.bf16.msra.mxu0 0
    %761 = vmatprep.subr.bf16.mxu0 0
    %762 = vmatpush1.bf16.msra.mxu0 0
    %763 = vmatprep.subr.bf16.mxu0 0
    %764 = vmatpush1.bf16.msra.mxu0 0
    %765 = vmatprep.mubr.bf16.mxu0 0
    %766 = vmatmul.mubr.bf16.gmra.mrb[0].mxu0 %v731
    %v767 = vpop.f32.mrb[0].mxu0
    %v768 = vadd.f32 0.0, %v767
    %v769 = vpop.f32.mrb[0].mxu0
    %v770 = vpop.f32.mrb[0].mxu0
    %v771 = vadd.f32 0.0, %v770
    %v772 = vpop.f32.mrb[0].mxu0
    %773 = vdwg.mxu0
    %v774 = vadd.f32 %v643, %v768
    %v775 = vadd.f32 %v644, %v771
    %v776 = vld [vmem:[%s6 + $0x24] sm:$0xf]
    %v777 = vld [vmem:[%s6 + $0x28] sm:$0xf]
    %v778 = vld [vmem:[%s6 + $0x2c] sm:$0xf]
    %v779 = vld [vmem:[%s6 + $0x30] sm:$0xf]
    %v780 = vpack.c.bf16 %v775, %v774
    %s781 = scalar_lea.vmem %s8, 4
    %v782 = vld [vmem:[%s781] sm:$0x3]
    %v784 = vlaneseq
    %v785 = vshrl.u32 %v784, 7
    %v786 = vsub.s32 0, %v785
    %v787 = vrot.slane %v782, %v786
    %v793 = vunpack.c.l.b16 %v776
    %v794 = vunpack.c.l.b16 %v777
    %v795 = vunpack.c.l.b16 %v778
    %v796 = vunpack.c.l.b16 %v779
    %v797 = vpack.c.b16 %v794, %v793
    %v798 = vpack.c.b16 %v796, %v795
    %v802 = vsel %vm143, %v780, 0
    %804 = vmatprep.subr.bf16.mxu0 0
    %805 = vmatpush1.bf16.msra.mxu0 %v797
    %806 = vmatprep.subr.bf16.mxu0 0
    %807 = vmatpush1.bf16.msra.mxu0 %v798
    %808 = vmatprep.subr.bf16.mxu0 0
    %809 = vmatpush1.bf16.msra.mxu0 0
    %810 = vmatprep.subr.bf16.mxu0 0
    %811 = vmatpush1.bf16.msra.mxu0 0
    %812 = vmatprep.subr.bf16.mxu0 0
    %813 = vmatpush1.bf16.msra.mxu0 0
    %814 = vmatprep.subr.bf16.mxu0 0
    %815 = vmatpush1.bf16.msra.mxu0 0
    %816 = vmatprep.subr.bf16.mxu0 0
    %817 = vmatpush1.bf16.msra.mxu0 0
    %818 = vmatprep.subr.bf16.mxu0 0
    %819 = vmatpush1.bf16.msra.mxu0 0
    %820 = vmatprep.subr.bf16.mxu0 0
    %821 = vmatpush1.bf16.msra.mxu0 0
    %822 = vmatprep.subr.bf16.mxu0 0
    %823 = vmatpush1.bf16.msra.mxu0 0
    %824 = vmatprep.subr.bf16.mxu0 0
    %825 = vmatpush1.bf16.msra.mxu0 0
    %826 = vmatprep.subr.bf16.mxu0 0
    %827 = vmatpush1.bf16.msra.mxu0 0
    %828 = vmatprep.subr.bf16.mxu0 0
    %829 = vmatpush1.bf16.msra.mxu0 0
    %830 = vmatprep.subr.bf16.mxu0 0
    %831 = vmatpush1.bf16.msra.mxu0 0
    %832 = vmatprep.subr.bf16.mxu0 0
    %833 = vmatpush1.bf16.msra.mxu0 0
    %834 = vmatprep.subr.bf16.mxu0 0
    %835 = vmatpush1.bf16.msra.mxu0 0
    %836 = vmatprep.mubr.bf16.mxu0 0
    %837 = vmatmul.mubr.bf16.gmra.mrb[0].mxu0 %v802
    %v838 = vpop.f32.mrb[0].mxu0
    %v839 = vadd.f32 %v787, %v838
    %v840 = vpop.f32.mrb[0].mxu0
    %v841 = vpop.f32.mrb[0].mxu0
    %v842 = vadd.f32 %v787, %v841
    %v843 = vpop.f32.mrb[0].mxu0
    %844 = vdwg.mxu0
    %v845 = vadd.f32 %v839, %v141
    %v846 = vadd.f32 %v842, %v142
    %v847 = vsel %vm143, %v845, 0.0
    %848 = vadd.xlane.f32.xlu0 %v847
    %v849 = vpop.xlane.xlu0 %848
    %v850 = vsel %vm143, %v846, 0.0
    %851 = vadd.xlane.f32.xlu0 %v850
    %v852 = vpop.xlane.xlu0 %851
    %v853 = vmul.f32 %v849, %v150
    %v854 = vmul.f32 %v852, %v150
    %v855 = vsub.f32 %v845, %v853
    %v856 = vsub.f32 %v846, %v854
    %v857 = vmul.f32 %v855, %v855
    %v858 = vmul.f32 %v856, %v856
    %v859 = vsel %vm143, %v857, 0.0
    %860 = vadd.xlane.f32.xlu0 %v859
    %v861 = vpop.xlane.xlu0 %860
    %v862 = vsel %vm143, %v858, 0.0
    %863 = vadd.xlane.f32.xlu0 %v862
    %v864 = vpop.xlane.xlu0 %863
    %v865 = vmul.f32 %v861, %v150
    %v866 = vmul.f32 %v864, %v150
    %v867 = vadd.f32 %v865, 1e-05
    %v868 = vadd.f32 %v866, 1e-05
    %v869 = vrsqrt.pop %v867
    %v870 = vrsqrt.pop %v868
    %v871 = vmul.f32 %v855, %v869
    %v872 = vmul.f32 %v856, %v870
    %s873 = scalar_lea.vmem %s2, 16
    %v874 = vld [vmem:[%s873] sm:$0xff]
    %v875 = vld [vmem:[%s873 + $0x8] sm:$0xff]
    %v876 = vmul.f32 %v871, %v874
    %v877 = vmul.f32 %v872, %v875
    %s878 = scalar_lea.vmem %s3, 16
    %v879 = vld [vmem:[%s878] sm:$0xff]
    %v880 = vld [vmem:[%s878 + $0x8] sm:$0xff]
    %v881 = vadd.f32 %v876, %v879
    %v882 = vadd.f32 %v877, %v880
    %v883 = vld [vmem:[%s6 + $0x34] sm:$0xf]
    %v884 = vld [vmem:[%s6 + $0x38] sm:$0xf]
    %v885 = vld [vmem:[%s6 + $0x3c] sm:$0xf]
    %v886 = vld [vmem:[%s6 + $0x40] sm:$0xf]
    %v887 = vpack.c.bf16 %v882, %v881
    %s888 = scalar_lea.vmem %s8, 6
    %v889 = vld [vmem:[%s888] sm:$0x3]
    %v891 = vlaneseq
    %v892 = vshrl.u32 %v891, 7
    %v893 = vsub.s32 0, %v892
    %v894 = vrot.slane %v889, %v893
    %v900 = vunpack.c.l.b16 %v883
    %v901 = vunpack.c.l.b16 %v884
    %v902 = vunpack.c.l.b16 %v885
    %v903 = vunpack.c.l.b16 %v886
    %v904 = vpack.c.b16 %v901, %v900
    %v905 = vpack.c.b16 %v903, %v902
    %v909 = vsel %vm143, %v887, 0
    %911 = vmatprep.subr.bf16.mxu0 0
    %912 = vmatpush1.bf16.msra.mxu0 %v904
    %913 = vmatprep.subr.bf16.mxu0 0
    %914 = vmatpush1.bf16.msra.mxu0 %v905
    %915 = vmatprep.subr.bf16.mxu0 0
    %916 = vmatpush1.bf16.msra.mxu0 0
    %917 = vmatprep.subr.bf16.mxu0 0
    %918 = vmatpush1.bf16.msra.mxu0 0
    %919 = vmatprep.subr.bf16.mxu0 0
    %920 = vmatpush1.bf16.msra.mxu0 0
    %921 = vmatprep.subr.bf16.mxu0 0
    %922 = vmatpush1.bf16.msra.mxu0 0
    %923 = vmatprep.subr.bf16.mxu0 0
    %924 = vmatpush1.bf16.msra.mxu0 0
    %925 = vmatprep.subr.bf16.mxu0 0
    %926 = vmatpush1.bf16.msra.mxu0 0
    %927 = vmatprep.subr.bf16.mxu0 0
    %928 = vmatpush1.bf16.msra.mxu0 0
    %929 = vmatprep.subr.bf16.mxu0 0
    %930 = vmatpush1.bf16.msra.mxu0 0
    %931 = vmatprep.subr.bf16.mxu0 0
    %932 = vmatpush1.bf16.msra.mxu0 0
    %933 = vmatprep.subr.bf16.mxu0 0
    %934 = vmatpush1.bf16.msra.mxu0 0
    %935 = vmatprep.subr.bf16.mxu0 0
    %936 = vmatpush1.bf16.msra.mxu0 0
    %937 = vmatprep.subr.bf16.mxu0 0
    %938 = vmatpush1.bf16.msra.mxu0 0
    %939 = vmatprep.subr.bf16.mxu0 0
    %940 = vmatpush1.bf16.msra.mxu0 0
    %941 = vmatprep.subr.bf16.mxu0 0
    %942 = vmatpush1.bf16.msra.mxu0 0
    %943 = vmatprep.mubr.bf16.mxu0 0
    %944 = vmatmul.mubr.bf16.gmra.mrb[0].mxu0 %v909
    %v945 = vpop.f32.mrb[0].mxu0
    %v946 = vadd.f32 %v894, %v945
    %v947 = vpop.f32.mrb[0].mxu0
    %v948 = vpop.f32.mrb[0].mxu0
    %v949 = vadd.f32 %v894, %v948
    %v950 = vpop.f32.mrb[0].mxu0
    %951 = vdwg.mxu0
    %v952 = vld [vmem:[%s6 + $0x44] sm:$0xf]
    %v953 = vld [vmem:[%s6 + $0x48] sm:$0xf]
    %v954 = vld [vmem:[%s6 + $0x4c] sm:$0xf]
    %v955 = vld [vmem:[%s6 + $0x50] sm:$0xf]
    %v956 = vpack.c.bf16 %v136, %v133
    %s957 = scalar_lea.vmem %s8, 8
    %v958 = vld [vmem:[%s957] sm:$0x3]
    %v960 = vlaneseq
    %v961 = vshrl.u32 %v960, 7
    %v962 = vsub.s32 0, %v961
    %v963 = vrot.slane %v958, %v962
    %966 = vrot.lane.b32.xlu0 %v956, 96
    %v967 = vpop.permute.xlu0 %966
    %v972 = vunpack.c.l.b16 %v952
    %v973 = vunpack.c.l.b16 %v953
    %v974 = vunpack.c.l.b16 %v954
    %v975 = vunpack.c.l.b16 %v955
    %v976 = vpack.c.b16 %v973, %v972
    %v977 = vpack.c.b16 %v975, %v974
    %v981 = vsel %vm143, %v967, 0
    %983 = vmatprep.subr.bf16.mxu0 0
    %984 = vmatpush1.bf16.msra.mxu0 %v976
    %985 = vmatprep.subr.bf16.mxu0 0
    %986 = vmatpush1.bf16.msra.mxu0 %v977
    %987 = vmatprep.subr.bf16.mxu0 0
    %988 = vmatpush1.bf16.msra.mxu0 0
    %989 = vmatprep.subr.bf16.mxu0 0
    %990 = vmatpush1.bf16.msra.mxu0 0
    %991 = vmatprep.subr.bf16.mxu0 0
    %992 = vmatpush1.bf16.msra.mxu0 0
    %993 = vmatprep.subr.bf16.mxu0 0
    %994 = vmatpush1.bf16.msra.mxu0 0
    %995 = vmatprep.subr.bf16.mxu0 0
    %996 = vmatpush1.bf16.msra.mxu0 0
    %997 = vmatprep.subr.bf16.mxu0 0
    %998 = vmatpush1.bf16.msra.mxu0 0
    %999 = vmatprep.subr.bf16.mxu0 0
    %1000 = vmatpush1.bf16.msra.mxu0 0
    %1001 = vmatprep.subr.bf16.mxu0 0
    %1002 = vmatpush1.bf16.msra.mxu0 0
    %1003 = vmatprep.subr.bf16.mxu0 0
    %1004 = vmatpush1.bf16.msra.mxu0 0
    %1005 = vmatprep.subr.bf16.mxu0 0
    %1006 = vmatpush1.bf16.msra.mxu0 0
    %1007 = vmatprep.subr.bf16.mxu0 0
    %1008 = vmatpush1.bf16.msra.mxu0 0
    %1009 = vmatprep.subr.bf16.mxu0 0
    %1010 = vmatpush1.bf16.msra.mxu0 0
    %1011 = vmatprep.subr.bf16.mxu0 0
    %1012 = vmatpush1.bf16.msra.mxu0 0
    %1013 = vmatprep.subr.bf16.mxu0 0
    %1014 = vmatpush1.bf16.msra.mxu0 0
    %1015 = vmatprep.mubr.bf16.mxu0 0
    %1016 = vmatmul.mubr.bf16.gmra.mrb[0].mxu0 %v981
    %v1017 = vpop.f32.mrb[0].mxu0
    %v1018 = vadd.f32 %v963, %v1017
    %v1019 = vpop.f32.mrb[0].mxu0
    %v1020 = vpop.f32.mrb[0].mxu0
    %v1021 = vadd.f32 %v963, %v1020
    %v1022 = vpop.f32.mrb[0].mxu0
    %1023 = vdwg.mxu0
    %v1024 = vpack.c.bf16 %v1021, %v1018
    %v1025 = vmul.f32 %v946, %v44
    %v1026 = vmul.f32 %v949, %v44
    %v1027 = vpack.c.bf16 %v1026, %v1025
    %v1029 = vsel %vm143, %v1027, 0
    %v1032 = vsel %vm143, %v1024, 0
    %1034 = vmatprep.subr.bf16.mxu0 0
    %1035 = vmatpush1.bf16.xpose.msra.mxu0 %v1032
    %1036 = vmatprep.subr.bf16.mxu0 0
    %1037 = vmatpush1.bf16.xpose.msra.mxu0 0
    %1038 = vmatprep.subr.bf16.mxu0 0
    %1039 = vmatpush1.bf16.xpose.msra.mxu0 0
    %1040 = vmatprep.subr.bf16.mxu0 0
    %1041 = vmatpush1.bf16.xpose.msra.mxu0 0
    %1042 = vmatprep.subr.bf16.mxu0 0
    %1043 = vmatpush1.bf16.xpose.msra.mxu0 0
    %1044 = vmatprep.subr.bf16.mxu0 0
    %1045 = vmatpush1.bf16.xpose.msra.mxu0 0
    %1046 = vmatprep.subr.bf16.mxu0 0
    %1047 = vmatpush1.bf16.xpose.msra.mxu0 0
    %1048 = vmatprep.subr.bf16.mxu0 0
    %1049 = vmatpush1.bf16.xpose.msra.mxu0 0
    %1050 = vmatprep.subr.bf16.mxu0 0
    %1051 = vmatpush1.bf16.xpose.msra.mxu0 0
    %1052 = vmatprep.subr.bf16.mxu0 0
    %1053 = vmatpush1.bf16.xpose.msra.mxu0 0
    %1054 = vmatprep.subr.bf16.mxu0 0
    %1055 = vmatpush1.bf16.xpose.msra.mxu0 0
    %1056 = vmatprep.subr.bf16.mxu0 0
    %1057 = vmatpush1.bf16.xpose.msra.mxu0 0
    %1058 = vmatprep.subr.bf16.mxu0 0
    %1059 = vmatpush1.bf16.xpose.msra.mxu0 0
    %1060 = vmatprep.subr.bf16.mxu0 0
    %1061 = vmatpush1.bf16.xpose.msra.mxu0 0
    %1062 = vmatprep.subr.bf16.mxu0 0
    %1063 = vmatpush1.bf16.xpose.msra.mxu0 0
    %1064 = vmatprep.subr.bf16.mxu0 0
    %1065 = vmatpush1.bf16.xpose.msra.mxu0 0
    %1066 = vmatprep.mubr.bf16.mxu0 0
    %1067 = vmatmul.mubr.bf16.gmra.mrb[0].mxu0 %v1029
    %v1068 = vpop.f32.mrb[0].mxu0
    %v1069 = vadd.f32 0.0, %v1068
    %v1070 = vpop.f32.mrb[0].mxu0
    %v1071 = vpop.f32.mrb[0].mxu0
    %v1072 = vadd.f32 0.0, %v1071
    %v1073 = vpop.f32.mrb[0].mxu0
    %1074 = vdwg.mxu0
    %v1075 = vmul.f32 %v1069, 0.35355338
    %v1076 = vmul.f32 %v1072, 0.35355338
    %v1077 = vadd.f32 %v1075, %v36
    %v1078 = vadd.f32 %v1076, %v37
    %v1079 = vsel %vm306, %v1077, -inf
    %1080 = vmax.xlane.f32.xlu0 %v1079
    %v1081 = vpop.xlane.xlu0 %1080
    %v1082 = vsel %vm306, %v1078, -inf
    %1083 = vmax.xlane.f32.xlu0 %v1082
    %v1084 = vpop.xlane.xlu0 %1083
    %v1085 = vsub.f32 %v1077, %v1081
    %v1086 = vsub.f32 %v1078, %v1084
    %v1087 = vmul.f32 %v1085, 1.442695
    %v1088 = vpow.pop %v1087
    %v1089 = vmul.f32 %v1086, 1.442695
    %v1090 = vpow.pop %v1089
    %v1091 = vsel %vm306, %v1088, 0.0
    %1092 = vadd.xlane.f32.xlu0 %v1091
    %v1093 = vpop.xlane.xlu0 %1092
    %v1094 = vsel %vm306, %v1090, 0.0
    %1095 = vadd.xlane.f32.xlu0 %v1094
    %v1096 = vpop.xlane.xlu0 %1095
    %v1097 = vrcp.pop %v1093
    %v1098 = vmul.f32 %v1088, %v1097
    %v1099 = vrcp.pop %v1096
    %v1100 = vmul.f32 %v1090, %v1099
    %1101 = vrot.lane.b32.xlu0 %v44, 32
    %v1102 = vpop.permute.xlu0 %1101
    %v1104 = vmul.f32 %v1018, %v1102
    %v1105 = vmul.f32 %v1021, %v1102
    %v1106 = vpack.c.bf16 %v1105, %v1104
    %v1107 = vpack.c.bf16 %v1100, %v1098
    %v1108 = vmul.f32 %v946, %v49
    %v1109 = vmul.f32 %v949, %v49
    %v1110 = vpack.c.bf16 %v1109, %v1108
    %v1112 = vsel %vm143, %v1110, 0
    %1114 = vmatprep.subr.bf16.mxu0 0
    %1115 = vmatpush1.bf16.xpose.msra.mxu0 %v1032
    %1116 = vmatprep.subr.bf16.mxu0 0
    %1117 = vmatpush1.bf16.xpose.msra.mxu0 0
    %1118 = vmatprep.subr.bf16.mxu0 0
    %1119 = vmatpush1.bf16.xpose.msra.mxu0 0
    %1120 = vmatprep.subr.bf16.mxu0 0
    %1121 = vmatpush1.bf16.xpose.msra.mxu0 0
    %1122 = vmatprep.subr.bf16.mxu0 0
    %1123 = vmatpush1.bf16.xpose.msra.mxu0 0
    %1124 = vmatprep.subr.bf16.mxu0 0
    %1125 = vmatpush1.bf16.xpose.msra.mxu0 0
    %1126 = vmatprep.subr.bf16.mxu0 0
    %1127 = vmatpush1.bf16.xpose.msra.mxu0 0
    %1128 = vmatprep.subr.bf16.mxu0 0
    %1129 = vmatpush1.bf16.xpose.msra.mxu0 0
    %1130 = vmatprep.subr.bf16.mxu0 0
    %1131 = vmatpush1.bf16.xpose.msra.mxu0 0
    %1132 = vmatprep.subr.bf16.mxu0 0
    %1133 = vmatpush1.bf16.xpose.msra.mxu0 0
    %1134 = vmatprep.subr.bf16.mxu0 0
    %1135 = vmatpush1.bf16.xpose.msra.mxu0 0
    %1136 = vmatprep.subr.bf16.mxu0 0
    %1137 = vmatpush1.bf16.xpose.msra.mxu0 0
    %1138 = vmatprep.subr.bf16.mxu0 0
    %1139 = vmatpush1.bf16.xpose.msra.mxu0 0
    %1140 = vmatprep.subr.bf16.mxu0 0
    %1141 = vmatpush1.bf16.xpose.msra.mxu0 0
    %1142 = vmatprep.subr.bf16.mxu0 0
    %1143 = vmatpush1.bf16.xpose.msra.mxu0 0
    %1144 = vmatprep.subr.bf16.mxu0 0
    %1145 = vmatpush1.bf16.xpose.msra.mxu0 0
    %1146 = vmatprep.mubr.bf16.mxu0 0
    %1147 = vmatmul.mubr.bf16.gmra.mrb[0].mxu0 %v1112
    %v1148 = vpop.f32.mrb[0].mxu0
    %v1149 = vadd.f32 0.0, %v1148
    %v1150 = vpop.f32.mrb[0].mxu0
    %v1151 = vpop.f32.mrb[0].mxu0
    %v1152 = vadd.f32 0.0, %v1151
    %v1153 = vpop.f32.mrb[0].mxu0
    %1154 = vdwg.mxu0
    %v1155 = vmul.f32 %v1149, 0.35355338
    %v1156 = vmul.f32 %v1152, 0.35355338
    %v1157 = vadd.f32 %v1155, %v36
    %v1158 = vadd.f32 %v1156, %v37
    %v1159 = vsel %vm306, %v1157, -inf
    %1160 = vmax.xlane.f32.xlu0 %v1159
    %v1161 = vpop.xlane.xlu0 %1160
    %v1162 = vsel %vm306, %v1158, -inf
    %1163 = vmax.xlane.f32.xlu0 %v1162
    %v1164 = vpop.xlane.xlu0 %1163
    %v1165 = vsub.f32 %v1157, %v1161
    %v1166 = vsub.f32 %v1158, %v1164
    %v1167 = vmul.f32 %v1165, 1.442695
    %v1168 = vpow.pop %v1167
    %v1169 = vmul.f32 %v1166, 1.442695
    %v1170 = vpow.pop %v1169
    %v1171 = vsel %vm306, %v1168, 0.0
    %1172 = vadd.xlane.f32.xlu0 %v1171
    %v1173 = vpop.xlane.xlu0 %1172
    %v1174 = vsel %vm306, %v1170, 0.0
    %1175 = vadd.xlane.f32.xlu0 %v1174
    %v1176 = vpop.xlane.xlu0 %1175
    %v1177 = vrcp.pop %v1173
    %v1178 = vmul.f32 %v1168, %v1177
    %v1179 = vrcp.pop %v1176
    %v1180 = vmul.f32 %v1170, %v1179
    %1181 = vrot.lane.b32.xlu0 %v49, 32
    %v1182 = vpop.permute.xlu0 %1181
    %v1184 = vmul.f32 %v1018, %v1182
    %v1185 = vmul.f32 %v1021, %v1182
    %v1186 = vpack.c.bf16 %v1185, %v1184
    %v1187 = vpack.c.bf16 %v1180, %v1178
    %1189 = vrot.lane.b32.xlu0 %v1186, 96
    %v1190 = vpop.permute.xlu0 %1189
    %v1193 = vsel %vm306, %v1187, 0
    %1195 = vmatprep.subr.bf16.mxu0 0
    %1196 = vmatpush1.bf16.msra.mxu0 %v1190
    %1197 = vmatprep.subr.bf16.mxu0 0
    %1198 = vmatpush1.bf16.msra.mxu0 0
    %1199 = vmatprep.subr.bf16.mxu0 0
    %1200 = vmatpush1.bf16.msra.mxu0 0
    %1201 = vmatprep.subr.bf16.mxu0 0
    %1202 = vmatpush1.bf16.msra.mxu0 0
    %1203 = vmatprep.subr.bf16.mxu0 0
    %1204 = vmatpush1.bf16.msra.mxu0 0
    %1205 = vmatprep.subr.bf16.mxu0 0
    %1206 = vmatpush1.bf16.msra.mxu0 0
    %1207 = vmatprep.subr.bf16.mxu0 0
    %1208 = vmatpush1.bf16.msra.mxu0 0
    %1209 = vmatprep.subr.bf16.mxu0 0
    %1210 = vmatpush1.bf16.msra.mxu0 0
    %1211 = vmatprep.subr.bf16.mxu0 0
    %1212 = vmatpush1.bf16.msra.mxu0 0
    %1213 = vmatprep.subr.bf16.mxu0 0
    %1214 = vmatpush1.bf16.msra.mxu0 0
    %1215 = vmatprep.subr.bf16.mxu0 0
    %1216 = vmatpush1.bf16.msra.mxu0 0
    %1217 = vmatprep.subr.bf16.mxu0 0
    %1218 = vmatpush1.bf16.msra.mxu0 0
    %1219 = vmatprep.subr.bf16.mxu0 0
    %1220 = vmatpush1.bf16.msra.mxu0 0
    %1221 = vmatprep.subr.bf16.mxu0 0
    %1222 = vmatpush1.bf16.msra.mxu0 0
    %1223 = vmatprep.subr.bf16.mxu0 0
    %1224 = vmatpush1.bf16.msra.mxu0 0
    %1225 = vmatprep.subr.bf16.mxu0 0
    %1226 = vmatpush1.bf16.msra.mxu0 0
    %1227 = vmatprep.mubr.bf16.mxu0 0
    %1228 = vmatmul.mubr.bf16.gmra.mrb[0].mxu0 %v1193
    %v1229 = vpop.f32.mrb[0].mxu0
    %v1230 = vadd.f32 0.0, %v1229
    %v1231 = vpop.f32.mrb[0].mxu0
    %v1232 = vpop.f32.mrb[0].mxu0
    %v1233 = vadd.f32 0.0, %v1232
    %v1234 = vpop.f32.mrb[0].mxu0
    %1235 = vdwg.mxu0
    %1237 = vrot.lane.b32.xlu0 %v1106, 96
    %v1238 = vpop.permute.xlu0 %1237
    %v1241 = vsel %vm306, %v1107, 0
    %1243 = vmatprep.subr.bf16.mxu0 0
    %1244 = vmatpush1.bf16.msra.mxu0 %v1238
    %1245 = vmatprep.subr.bf16.mxu0 0
    %1246 = vmatpush1.bf16.msra.mxu0 0
    %1247 = vmatprep.subr.bf16.mxu0 0
    %1248 = vmatpush1.bf16.msra.mxu0 0
    %1249 = vmatprep.subr.bf16.mxu0 0
    %1250 = vmatpush1.bf16.msra.mxu0 0
    %1251 = vmatprep.subr.bf16.mxu0 0
    %1252 = vmatpush1.bf16.msra.mxu0 0
    %1253 = vmatprep.subr.bf16.mxu0 0
    %1254 = vmatpush1.bf16.msra.mxu0 0
    %1255 = vmatprep.subr.bf16.mxu0 0
    %1256 = vmatpush1.bf16.msra.mxu0 0
    %1257 = vmatprep.subr.bf16.mxu0 0
    %1258 = vmatpush1.bf16.msra.mxu0 0
    %1259 = vmatprep.subr.bf16.mxu0 0
    %1260 = vmatpush1.bf16.msra.mxu0 0
    %1261 = vmatprep.subr.bf16.mxu0 0
    %1262 = vmatpush1.bf16.msra.mxu0 0
    %1263 = vmatprep.subr.bf16.mxu0 0
    %1264 = vmatpush1.bf16.msra.mxu0 0
    %1265 = vmatprep.subr.bf16.mxu0 0
    %1266 = vmatpush1.bf16.msra.mxu0 0
    %1267 = vmatprep.subr.bf16.mxu0 0
    %1268 = vmatpush1.bf16.msra.mxu0 0
    %1269 = vmatprep.subr.bf16.mxu0 0
    %1270 = vmatpush1.bf16.msra.mxu0 0
    %1271 = vmatprep.subr.bf16.mxu0 0
    %1272 = vmatpush1.bf16.msra.mxu0 0
    %1273 = vmatprep.subr.bf16.mxu0 0
    %1274 = vmatpush1.bf16.msra.mxu0 0
    %1275 = vmatprep.mubr.bf16.mxu0 0
    %1276 = vmatmul.mubr.bf16.gmra.mrb[0].mxu0 %v1241
    %v1277 = vpop.f32.mrb[0].mxu0
    %v1278 = vadd.f32 %v1230, %v1277
    %v1279 = vpop.f32.mrb[0].mxu0
    %v1280 = vpop.f32.mrb[0].mxu0
    %v1281 = vadd.f32 %v1233, %v1280
    %v1282 = vpop.f32.mrb[0].mxu0
    %1283 = vdwg.mxu0
    %v1284 = vmul.f32 %v946, %v54
    %v1285 = vmul.f32 %v949, %v54
    %v1286 = vpack.c.bf16 %v1285, %v1284
    %v1288 = vsel %vm143, %v1286, 0
    %1290 = vmatprep.subr.bf16.mxu0 0
    %1291 = vmatpush1.bf16.xpose.msra.mxu0 %v1032
    %1292 = vmatprep.subr.bf16.mxu0 0
    %1293 = vmatpush1.bf16.xpose.msra.mxu0 0
    %1294 = vmatprep.subr.bf16.mxu0 0
    %1295 = vmatpush1.bf16.xpose.msra.mxu0 0
    %1296 = vmatprep.subr.bf16.mxu0 0
    %1297 = vmatpush1.bf16.xpose.msra.mxu0 0
    %1298 = vmatprep.subr.bf16.mxu0 0
    %1299 = vmatpush1.bf16.xpose.msra.mxu0 0
    %1300 = vmatprep.subr.bf16.mxu0 0
    %1301 = vmatpush1.bf16.xpose.msra.mxu0 0
    %1302 = vmatprep.subr.bf16.mxu0 0
    %1303 = vmatpush1.bf16.xpose.msra.mxu0 0
    %1304 = vmatprep.subr.bf16.mxu0 0
    %1305 = vmatpush1.bf16.xpose.msra.mxu0 0
    %1306 = vmatprep.subr.bf16.mxu0 0
    %1307 = vmatpush1.bf16.xpose.msra.mxu0 0
    %1308 = vmatprep.subr.bf16.mxu0 0
    %1309 = vmatpush1.bf16.xpose.msra.mxu0 0
    %1310 = vmatprep.subr.bf16.mxu0 0
    %1311 = vmatpush1.bf16.xpose.msra.mxu0 0
    %1312 = vmatprep.subr.bf16.mxu0 0
    %1313 = vmatpush1.bf16.xpose.msra.mxu0 0
    %1314 = vmatprep.subr.bf16.mxu0 0
    %1315 = vmatpush1.bf16.xpose.msra.mxu0 0
    %1316 = vmatprep.subr.bf16.mxu0 0
    %1317 = vmatpush1.bf16.xpose.msra.mxu0 0
    %1318 = vmatprep.subr.bf16.mxu0 0
    %1319 = vmatpush1.bf16.xpose.msra.mxu0 0
    %1320 = vmatprep.subr.bf16.mxu0 0
    %1321 = vmatpush1.bf16.xpose.msra.mxu0 0
    %1322 = vmatprep.mubr.bf16.mxu0 0
    %1323 = vmatmul.mubr.bf16.gmra.mrb[0].mxu0 %v1288
    %v1324 = vpop.f32.mrb[0].mxu0
    %v1325 = vadd.f32 0.0, %v1324
    %v1326 = vpop.f32.mrb[0].mxu0
    %v1327 = vpop.f32.mrb[0].mxu0
    %v1328 = vadd.f32 0.0, %v1327
    %v1329 = vpop.f32.mrb[0].mxu0
    %1330 = vdwg.mxu0
    %v1331 = vmul.f32 %v1325, 0.35355338
    %v1332 = vmul.f32 %v1328, 0.35355338
    %v1333 = vadd.f32 %v1331, %v36
    %v1334 = vadd.f32 %v1332, %v37
    %v1335 = vsel %vm306, %v1333, -inf
    %1336 = vmax.xlane.f32.xlu0 %v1335
    %v1337 = vpop.xlane.xlu0 %1336
    %v1338 = vsel %vm306, %v1334, -inf
    %1339 = vmax.xlane.f32.xlu0 %v1338
    %v1340 = vpop.xlane.xlu0 %1339
    %v1341 = vsub.f32 %v1333, %v1337
    %v1342 = vsub.f32 %v1334, %v1340
    %v1343 = vmul.f32 %v1341, 1.442695
    %v1344 = vpow.pop %v1343
    %v1345 = vmul.f32 %v1342, 1.442695
    %v1346 = vpow.pop %v1345
    %v1347 = vsel %vm306, %v1344, 0.0
    %1348 = vadd.xlane.f32.xlu0 %v1347
    %v1349 = vpop.xlane.xlu0 %1348
    %v1350 = vsel %vm306, %v1346, 0.0
    %1351 = vadd.xlane.f32.xlu0 %v1350
    %v1352 = vpop.xlane.xlu0 %1351
    %v1353 = vrcp.pop %v1349
    %v1354 = vmul.f32 %v1344, %v1353
    %v1355 = vrcp.pop %v1352
    %v1356 = vmul.f32 %v1346, %v1355
    %1357 = vrot.lane.b32.xlu0 %v54, 32
    %v1358 = vpop.permute.xlu0 %1357
    %v1360 = vmul.f32 %v1018, %v1358
    %v1361 = vmul.f32 %v1021, %v1358
    %v1362 = vpack.c.bf16 %v1361, %v1360
    %v1363 = vpack.c.bf16 %v1356, %v1354
    %1365 = vrot.lane.b32.xlu0 %v1362, 96
    %v1366 = vpop.permute.xlu0 %1365
    %v1369 = vsel %vm306, %v1363, 0
    %1371 = vmatprep.subr.bf16.mxu0 0
    %1372 = vmatpush1.bf16.msra.mxu0 %v1366
    %1373 = vmatprep.subr.bf16.mxu0 0
    %1374 = vmatpush1.bf16.msra.mxu0 0
    %1375 = vmatprep.subr.bf16.mxu0 0
    %1376 = vmatpush1.bf16.msra.mxu0 0
    %1377 = vmatprep.subr.bf16.mxu0 0
    %1378 = vmatpush1.bf16.msra.mxu0 0
    %1379 = vmatprep.subr.bf16.mxu0 0
    %1380 = vmatpush1.bf16.msra.mxu0 0
    %1381 = vmatprep.subr.bf16.mxu0 0
    %1382 = vmatpush1.bf16.msra.mxu0 0
    %1383 = vmatprep.subr.bf16.mxu0 0
    %1384 = vmatpush1.bf16.msra.mxu0 0
    %1385 = vmatprep.subr.bf16.mxu0 0
    %1386 = vmatpush1.bf16.msra.mxu0 0
    %1387 = vmatprep.subr.bf16.mxu0 0
    %1388 = vmatpush1.bf16.msra.mxu0 0
    %1389 = vmatprep.subr.bf16.mxu0 0
    %1390 = vmatpush1.bf16.msra.mxu0 0
    %1391 = vmatprep.subr.bf16.mxu0 0
    %1392 = vmatpush1.bf16.msra.mxu0 0
    %1393 = vmatprep.subr.bf16.mxu0 0
    %1394 = vmatpush1.bf16.msra.mxu0 0
    %1395 = vmatprep.subr.bf16.mxu0 0
    %1396 = vmatpush1.bf16.msra.mxu0 0
    %1397 = vmatprep.subr.bf16.mxu0 0
    %1398 = vmatpush1.bf16.msra.mxu0 0
    %1399 = vmatprep.subr.bf16.mxu0 0
    %1400 = vmatpush1.bf16.msra.mxu0 0
    %1401 = vmatprep.subr.bf16.mxu0 0
    %1402 = vmatpush1.bf16.msra.mxu0 0
    %1403 = vmatprep.mubr.bf16.mxu0 0
    %1404 = vmatmul.mubr.bf16.gmra.mrb[0].mxu0 %v1369
    %v1405 = vpop.f32.mrb[0].mxu0
    %v1406 = vadd.f32 0.0, %v1405
    %v1407 = vpop.f32.mrb[0].mxu0
    %v1408 = vpop.f32.mrb[0].mxu0
    %v1409 = vadd.f32 0.0, %v1408
    %v1410 = vpop.f32.mrb[0].mxu0
    %1411 = vdwg.mxu0
    %v1412 = vadd.f32 %v1278, %v1406
    %v1413 = vadd.f32 %v1281, %v1409
    %v1414 = vmul.f32 %v946, %v59
    %v1415 = vmul.f32 %v949, %v59
    %v1416 = vpack.c.bf16 %v1415, %v1414
    %v1418 = vsel %vm143, %v1416, 0
    %1420 = vmatprep.subr.bf16.mxu0 0
    %1421 = vmatpush1.bf16.xpose.msra.mxu0 %v1032
    %1422 = vmatprep.subr.bf16.mxu0 0
    %1423 = vmatpush1.bf16.xpose.msra.mxu0 0
    %1424 = vmatprep.subr.bf16.mxu0 0
    %1425 = vmatpush1.bf16.xpose.msra.mxu0 0
    %1426 = vmatprep.subr.bf16.mxu0 0
    %1427 = vmatpush1.bf16.xpose.msra.mxu0 0
    %1428 = vmatprep.subr.bf16.mxu0 0
    %1429 = vmatpush1.bf16.xpose.msra.mxu0 0
    %1430 = vmatprep.subr.bf16.mxu0 0
    %1431 = vmatpush1.bf16.xpose.msra.mxu0 0
    %1432 = vmatprep.subr.bf16.mxu0 0
    %1433 = vmatpush1.bf16.xpose.msra.mxu0 0
    %1434 = vmatprep.subr.bf16.mxu0 0
    %1435 = vmatpush1.bf16.xpose.msra.mxu0 0
    %1436 = vmatprep.subr.bf16.mxu0 0
    %1437 = vmatpush1.bf16.xpose.msra.mxu0 0
    %1438 = vmatprep.subr.bf16.mxu0 0
    %1439 = vmatpush1.bf16.xpose.msra.mxu0 0
    %1440 = vmatprep.subr.bf16.mxu0 0
    %1441 = vmatpush1.bf16.xpose.msra.mxu0 0
    %1442 = vmatprep.subr.bf16.mxu0 0
    %1443 = vmatpush1.bf16.xpose.msra.mxu0 0
    %1444 = vmatprep.subr.bf16.mxu0 0
    %1445 = vmatpush1.bf16.xpose.msra.mxu0 0
    %1446 = vmatprep.subr.bf16.mxu0 0
    %1447 = vmatpush1.bf16.xpose.msra.mxu0 0
    %1448 = vmatprep.subr.bf16.mxu0 0
    %1449 = vmatpush1.bf16.xpose.msra.mxu0 0
    %1450 = vmatprep.subr.bf16.mxu0 0
    %1451 = vmatpush1.bf16.xpose.msra.mxu0 0
    %1452 = vmatprep.mubr.bf16.mxu0 0
    %1453 = vmatmul.mubr.bf16.gmra.mrb[0].mxu0 %v1418
    %v1454 = vpop.f32.mrb[0].mxu0
    %v1455 = vadd.f32 0.0, %v1454
    %v1456 = vpop.f32.mrb[0].mxu0
    %v1457 = vpop.f32.mrb[0].mxu0
    %v1458 = vadd.f32 0.0, %v1457
    %v1459 = vpop.f32.mrb[0].mxu0
    %1460 = vdwg.mxu0
    %v1461 = vmul.f32 %v1455, 0.35355338
    %v1462 = vmul.f32 %v1458, 0.35355338
    %v1463 = vadd.f32 %v1461, %v36
    %v1464 = vadd.f32 %v1462, %v37
    %v1465 = vsel %vm306, %v1463, -inf
    %1466 = vmax.xlane.f32.xlu0 %v1465
    %v1467 = vpop.xlane.xlu0 %1466
    %v1468 = vsel %vm306, %v1464, -inf
    %1469 = vmax.xlane.f32.xlu0 %v1468
    %v1470 = vpop.xlane.xlu0 %1469
    %v1471 = vsub.f32 %v1463, %v1467
    %v1472 = vsub.f32 %v1464, %v1470
    %v1473 = vmul.f32 %v1471, 1.442695
    %v1474 = vpow.pop %v1473
    %v1475 = vmul.f32 %v1472, 1.442695
    %v1476 = vpow.pop %v1475
    %v1477 = vsel %vm306, %v1474, 0.0
    %1478 = vadd.xlane.f32.xlu0 %v1477
    %v1479 = vpop.xlane.xlu0 %1478
    %v1480 = vsel %vm306, %v1476, 0.0
    %1481 = vadd.xlane.f32.xlu0 %v1480
    %v1482 = vpop.xlane.xlu0 %1481
    %v1483 = vrcp.pop %v1479
    %v1484 = vmul.f32 %v1474, %v1483
    %v1485 = vrcp.pop %v1482
    %v1486 = vmul.f32 %v1476, %v1485
    %1487 = vrot.lane.b32.xlu0 %v59, 32
    %v1488 = vpop.permute.xlu0 %1487
    %v1490 = vmul.f32 %v1018, %v1488
    %v1491 = vmul.f32 %v1021, %v1488
    %v1492 = vpack.c.bf16 %v1491, %v1490
    %v1493 = vpack.c.bf16 %v1486, %v1484
    %1495 = vrot.lane.b32.xlu0 %v1492, 96
    %v1496 = vpop.permute.xlu0 %1495
    %v1499 = vsel %vm306, %v1493, 0
    %1501 = vmatprep.subr.bf16.mxu0 0
    %1502 = vmatpush1.bf16.msra.mxu0 %v1496
    %1503 = vmatprep.subr.bf16.mxu0 0
    %1504 = vmatpush1.bf16.msra.mxu0 0
    %1505 = vmatprep.subr.bf16.mxu0 0
    %1506 = vmatpush1.bf16.msra.mxu0 0
    %1507 = vmatprep.subr.bf16.mxu0 0
    %1508 = vmatpush1.bf16.msra.mxu0 0
    %1509 = vmatprep.subr.bf16.mxu0 0
    %1510 = vmatpush1.bf16.msra.mxu0 0
    %1511 = vmatprep.subr.bf16.mxu0 0
    %1512 = vmatpush1.bf16.msra.mxu0 0
    %1513 = vmatprep.subr.bf16.mxu0 0
    %1514 = vmatpush1.bf16.msra.mxu0 0
    %1515 = vmatprep.subr.bf16.mxu0 0
    %1516 = vmatpush1.bf16.msra.mxu0 0
    %1517 = vmatprep.subr.bf16.mxu0 0
    %1518 = vmatpush1.bf16.msra.mxu0 0
    %1519 = vmatprep.subr.bf16.mxu0 0
    %1520 = vmatpush1.bf16.msra.mxu0 0
    %1521 = vmatprep.subr.bf16.mxu0 0
    %1522 = vmatpush1.bf16.msra.mxu0 0
    %1523 = vmatprep.subr.bf16.mxu0 0
    %1524 = vmatpush1.bf16.msra.mxu0 0
    %1525 = vmatprep.subr.bf16.mxu0 0
    %1526 = vmatpush1.bf16.msra.mxu0 0
    %1527 = vmatprep.subr.bf16.mxu0 0
    %1528 = vmatpush1.bf16.msra.mxu0 0
    %1529 = vmatprep.subr.bf16.mxu0 0
    %1530 = vmatpush1.bf16.msra.mxu0 0
    %1531 = vmatprep.subr.bf16.mxu0 0
    %1532 = vmatpush1.bf16.msra.mxu0 0
    %1533 = vmatprep.mubr.bf16.mxu0 0
    %1534 = vmatmul.mubr.bf16.gmra.mrb[0].mxu0 %v1499
    %v1535 = vpop.f32.mrb[0].mxu0
    %v1536 = vadd.f32 0.0, %v1535
    %v1537 = vpop.f32.mrb[0].mxu0
    %v1538 = vpop.f32.mrb[0].mxu0
    %v1539 = vadd.f32 0.0, %v1538
    %v1540 = vpop.f32.mrb[0].mxu0
    %1541 = vdwg.mxu0
    %v1542 = vadd.f32 %v1412, %v1536
    %v1543 = vadd.f32 %v1413, %v1539
    %1546 = vrot.lane.b32.xlu0 %v1178, 16
    %v1547 = vpop.permute.xlu0 %1546
    %1548 = vrot.lane.b32.xlu0 %v1180, 16
    %v1549 = vpop.permute.xlu0 %1548
    %1554 = vrot.lane.b32.xlu0 %v1354, 32
    %v1555 = vpop.permute.xlu0 %1554
    %1556 = vrot.lane.b32.xlu0 %v1356, 32
    %v1557 = vpop.permute.xlu0 %1556
    %1562 = vrot.lane.b32.xlu0 %v1484, 48
    %v1563 = vpop.permute.xlu0 %1562
    %1564 = vrot.lane.b32.xlu0 %v1486, 48
    %v1565 = vpop.permute.xlu0 %1564
    %v1568 = vsel %vm306, %v1098, %v1547
    %v1569 = vsel %vm306, %v1100, %v1549
    %v1570 = vsel %vm143, %v1568, %v1555
    %v1571 = vsel %vm143, %v1569, %v1557
    %vm1572 = vcmask 392192
    %v1573 = vsel %vm1572, %v1570, %v1563
    %v1574 = vsel %vm1572, %v1571, %v1565
    %vm1575 = vcmask 523264
    %1576 = vst.msk [vmem:[%s10] sm:$0xff] %vm1575, %v1573
    %1577 = vst.msk [vmem:[%s10 + $0x8] sm:$0xff] %vm1575, %v1574
    %v1578 = vld [vmem:[%s6 + $0x54] sm:$0xf]
    %v1579 = vld [vmem:[%s6 + $0x58] sm:$0xf]
    %v1580 = vld [vmem:[%s6 + $0x5c] sm:$0xf]
    %v1581 = vld [vmem:[%s6 + $0x60] sm:$0xf]
    %v1582 = vpack.c.bf16 %v1543, %v1542
    %s1583 = scalar_lea.vmem %s8, 10
    %v1584 = vld [vmem:[%s1583] sm:$0x3]
    %v1586 = vlaneseq
    %v1587 = vshrl.u32 %v1586, 7
    %v1588 = vsub.s32 0, %v1587
    %v1589 = vrot.slane %v1584, %v1588
    %v1595 = vunpack.c.l.b16 %v1578
    %v1596 = vunpack.c.l.b16 %v1579
    %v1597 = vunpack.c.l.b16 %v1580
    %v1598 = vunpack.c.l.b16 %v1581
    %v1599 = vpack.c.b16 %v1596, %v1595
    %v1600 = vpack.c.b16 %v1598, %v1597
    %v1604 = vsel %vm143, %v1582, 0
    %1606 = vmatprep.subr.bf16.mxu0 0
    %1607 = vmatpush1.bf16.msra.mxu0 %v1599
    %1608 = vmatprep.subr.bf16.mxu0 0
    %1609 = vmatpush1.bf16.msra.mxu0 %v1600
    %1610 = vmatprep.subr.bf16.mxu0 0
    %1611 = vmatpush1.bf16.msra.mxu0 0
    %1612 = vmatprep.subr.bf16.mxu0 0
    %1613 = vmatpush1.bf16.msra.mxu0 0
    %1614 = vmatprep.subr.bf16.mxu0 0
    %1615 = vmatpush1.bf16.msra.mxu0 0
    %1616 = vmatprep.subr.bf16.mxu0 0
    %1617 = vmatpush1.bf16.msra.mxu0 0
    %1618 = vmatprep.subr.bf16.mxu0 0
    %1619 = vmatpush1.bf16.msra.mxu0 0
    %1620 = vmatprep.subr.bf16.mxu0 0
    %1621 = vmatpush1.bf16.msra.mxu0 0
    %1622 = vmatprep.subr.bf16.mxu0 0
    %1623 = vmatpush1.bf16.msra.mxu0 0
    %1624 = vmatprep.subr.bf16.mxu0 0
    %1625 = vmatpush1.bf16.msra.mxu0 0
    %1626 = vmatprep.subr.bf16.mxu0 0
    %1627 = vmatpush1.bf16.msra.mxu0 0
    %1628 = vmatprep.subr.bf16.mxu0 0
    %1629 = vmatpush1.bf16.msra.mxu0 0
    %1630 = vmatprep.subr.bf16.mxu0 0
    %1631 = vmatpush1.bf16.msra.mxu0 0
    %1632 = vmatprep.subr.bf16.mxu0 0
    %1633 = vmatpush1.bf16.msra.mxu0 0
    %1634 = vmatprep.subr.bf16.mxu0 0
    %1635 = vmatpush1.bf16.msra.mxu0 0
    %1636 = vmatprep.subr.bf16.mxu0 0
    %1637 = vmatpush1.bf16.msra.mxu0 0
    %1638 = vmatprep.mubr.bf16.mxu0 0
    %1639 = vmatmul.mubr.bf16.gmra.mrb[0].mxu0 %v1604
    %v1640 = vpop.f32.mrb[0].mxu0
    %v1641 = vadd.f32 %v1589, %v1640
    %v1642 = vpop.f32.mrb[0].mxu0
    %v1643 = vpop.f32.mrb[0].mxu0
    %v1644 = vadd.f32 %v1589, %v1643
    %v1645 = vpop.f32.mrb[0].mxu0
    %1646 = vdwg.mxu0
    %v1647 = vadd.f32 %v1641, %v845
    %v1648 = vadd.f32 %v1644, %v846
    %v1649 = vsel %vm143, %v1647, 0.0
    %1650 = vadd.xlane.f32.xlu0 %v1649
    %v1651 = vpop.xlane.xlu0 %1650
    %v1652 = vsel %vm143, %v1648, 0.0
    %1653 = vadd.xlane.f32.xlu0 %v1652
    %v1654 = vpop.xlane.xlu0 %1653
    %v1655 = vmul.f32 %v1651, %v150
    %v1656 = vmul.f32 %v1654, %v150
    %v1657 = vsub.f32 %v1647, %v1655
    %v1658 = vsub.f32 %v1648, %v1656
    %v1659 = vmul.f32 %v1657, %v1657
    %v1660 = vmul.f32 %v1658, %v1658
    %v1661 = vsel %vm143, %v1659, 0.0
    %1662 = vadd.xlane.f32.xlu0 %v1661
    %v1663 = vpop.xlane.xlu0 %1662
    %v1664 = vsel %vm143, %v1660, 0.0
    %1665 = vadd.xlane.f32.xlu0 %v1664
    %v1666 = vpop.xlane.xlu0 %1665
    %v1667 = vmul.f32 %v1663, %v150
    %v1668 = vmul.f32 %v1666, %v150
    %v1669 = vadd.f32 %v1667, 1e-05
    %v1670 = vadd.f32 %v1668, 1e-05
    %v1671 = vrsqrt.pop %v1669
    %v1672 = vrsqrt.pop %v1670
    %v1673 = vmul.f32 %v1657, %v1671
    %v1674 = vmul.f32 %v1658, %v1672
    %s1675 = scalar_lea.vmem %s2, 32
    %v1676 = vld [vmem:[%s1675] sm:$0xff]
    %v1677 = vld [vmem:[%s1675 + $0x8] sm:$0xff]
    %v1678 = vmul.f32 %v1673, %v1676
    %v1679 = vmul.f32 %v1674, %v1677
    %s1680 = scalar_lea.vmem %s3, 32
    %v1681 = vld [vmem:[%s1680] sm:$0xff]
    %v1682 = vld [vmem:[%s1680 + $0x8] sm:$0xff]
    %v1683 = vadd.f32 %v1678, %v1681
    %v1684 = vadd.f32 %v1679, %v1682
    %v1685 = vld [vmem:[%s7] sm:$0xff]
    %v1686 = vld [vmem:[%s7 + $0x8] sm:$0xff]
    %v1687 = vld [vmem:[%s7 + $0x10] sm:$0xff]
    %v1688 = vld [vmem:[%s7 + $0x18] sm:$0xff]
    %v1689 = vpack.c.bf16 %v1684, %v1683
    %s1690 = scalar_lea.vmem %s8, 12
    %v1691 = vld [vmem:[%s1690] sm:$0x3]
    %v1693 = vlaneseq
    %v1694 = vshrl.u32 %v1693, 7
    %v1695 = vsub.s32 0, %v1694
    %v1696 = vrot.slane %v1691, %v1695
    %v1697 = vlaneseq
    %v1698 = vshrl.u32 %v1697, 7
    %v1699 = vsub.s32 1, %v1698
    %v1700 = vrot.slane %v1691, %v1699
    %v1707 = vunpack.c.l.b16 %v1685
    %v1708 = vunpack.c.h.b16 %v1685
    %v1709 = vunpack.c.l.b16 %v1686
    %v1710 = vunpack.c.h.b16 %v1686
    %v1711 = vunpack.c.l.b16 %v1687
    %v1712 = vunpack.c.h.b16 %v1687
    %v1713 = vunpack.c.l.b16 %v1688
    %v1714 = vunpack.c.h.b16 %v1688
    %v1715 = vpack.c.b16 %v1709, %v1707
    %v1716 = vpack.c.b16 %v1710, %v1708
    %v1717 = vpack.c.b16 %v1713, %v1711
    %v1718 = vpack.c.b16 %v1714, %v1712
    %v1724 = vsel %vm143, %v1689, 0
    %1726 = vmatprep.subr.bf16.mxu0 %v1716
    %1727 = vmatpush1.bf16.msra.mxu0 %v1715
    %1728 = vmatprep.subr.bf16.mxu0 %v1718
    %1729 = vmatpush1.bf16.msra.mxu0 %v1717
    %1730 = vmatprep.subr.bf16.mxu0 0
    %1731 = vmatpush1.bf16.msra.mxu0 0
    %1732 = vmatprep.subr.bf16.mxu0 0
    %1733 = vmatpush1.bf16.msra.mxu0 0
    %1734 = vmatprep.subr.bf16.mxu0 0
    %1735 = vmatpush1.bf16.msra.mxu0 0
    %1736 = vmatprep.subr.bf16.mxu0 0
    %1737 = vmatpush1.bf16.msra.mxu0 0
    %1738 = vmatprep.subr.bf16.mxu0 0
    %1739 = vmatpush1.bf16.msra.mxu0 0
    %1740 = vmatprep.subr.bf16.mxu0 0
    %1741 = vmatpush1.bf16.msra.mxu0 0
    %1742 = vmatprep.subr.bf16.mxu0 0
    %1743 = vmatpush1.bf16.msra.mxu0 0
    %1744 = vmatprep.subr.bf16.mxu0 0
    %1745 = vmatpush1.bf16.msra.mxu0 0
    %1746 = vmatprep.subr.bf16.mxu0 0
    %1747 = vmatpush1.bf16.msra.mxu0 0
    %1748 = vmatprep.subr.bf16.mxu0 0
    %1749 = vmatpush1.bf16.msra.mxu0 0
    %1750 = vmatprep.subr.bf16.mxu0 0
    %1751 = vmatpush1.bf16.msra.mxu0 0
    %1752 = vmatprep.subr.bf16.mxu0 0
    %1753 = vmatpush1.bf16.msra.mxu0 0
    %1754 = vmatprep.subr.bf16.mxu0 0
    %1755 = vmatpush1.bf16.msra.mxu0 0
    %1756 = vmatprep.subr.bf16.mxu0 0
    %1757 = vmatpush1.bf16.msra.mxu0 0
    %1758 = vmatprep.mubr.bf16.mxu0 0
    %1759 = vmatmul.mubr.bf16.gmra.mrb[0].mxu0 %v1724
    %v1760 = vpop.f32.mrb[0].mxu0
    %v1761 = vadd.f32 %v1696, %v1760
    %v1762 = vpop.f32.mrb[0].mxu0
    %v1763 = vadd.f32 %v1700, %v1762
    %v1764 = vpop.f32.mrb[0].mxu0
    %v1765 = vadd.f32 %v1696, %v1764
    %v1766 = vpop.f32.mrb[0].mxu0
    %v1767 = vadd.f32 %v1700, %v1766
    %1768 = vdwg.mxu0
    %v1769 = vxor.u32 %v1761, 2147483648
    %v1770 = vxor.u32 %v1765, 2147483648
    %v1771 = vmul.f32 %v1769, 1.442695
    %v1772 = vpow.pop %v1771
    %v1773 = vmul.f32 %v1770, 1.442695
    %v1774 = vpow.pop %v1773
    %v1775 = vadd.f32 %v1772, 1.0
    %v1776 = vadd.f32 %v1774, 1.0
    %v1777 = vrcp.pop %v1775
    %v1778 = vmul.f32 1.0, %v1777
    %v1779 = vrcp.pop %v1776
    %v1780 = vmul.f32 1.0, %v1779
    %v1781 = vmul.f32 %v1761, %v1778
    %v1782 = vmul.f32 %v1765, %v1780
    %v1783 = vmul.f32 %v1781, %v1763
    %v1784 = vmul.f32 %v1782, %v1767
    %v1785 = vld [vmem:[%s6 + $0x64] sm:$0xf]
    %v1786 = vld [vmem:[%s6 + $0x68] sm:$0xf]
    %v1787 = vld [vmem:[%s6 + $0x6c] sm:$0xf]
    %v1788 = vld [vmem:[%s6 + $0x70] sm:$0xf]
    %v1789 = vld [vmem:[%s6 + $0x74] sm:$0xf]
    %v1790 = vld [vmem:[%s6 + $0x78] sm:$0xf]
    %v1791 = vld [vmem:[%s6 + $0x7c] sm:$0xf]
    %v1792 = vld [vmem:[%s6 + $0x80] sm:$0xf]
    %v1793 = vld [vmem:[%s6 + $0x84] sm:$0xf]
    %v1794 = vld [vmem:[%s6 + $0x88] sm:$0xf]
    %v1795 = vld [vmem:[%s6 + $0x8c] sm:$0xf]
    %v1796 = vld [vmem:[%s6 + $0x90] sm:$0xf]
    %v1797 = vld [vmem:[%s6 + $0x94] sm:$0xf]
    %v1798 = vld [vmem:[%s6 + $0x98] sm:$0xf]
    %v1799 = vld [vmem:[%s6 + $0x9c] sm:$0xf]
    %v1800 = vld [vmem:[%s6 + $0xa0] sm:$0xf]
    %v1801 = vpack.c.bf16 %v1784, %v1783
    %s1802 = scalar_lea.vmem %s8, 14
    %v1803 = vld [vmem:[%s1802] sm:$0x3]
    %v1805 = vlaneseq
    %v1806 = vshrl.u32 %v1805, 7
    %v1807 = vsub.s32 0, %v1806
    %v1808 = vrot.slane %v1803, %v1807
    %v1826 = vunpack.c.l.b16 %v1785
    %v1827 = vunpack.c.l.b16 %v1786
    %v1828 = vunpack.c.l.b16 %v1787
    %v1829 = vunpack.c.l.b16 %v1788
    %v1830 = vunpack.c.l.b16 %v1789
    %v1831 = vunpack.c.l.b16 %v1790
    %v1832 = vunpack.c.l.b16 %v1791
    %v1833 = vunpack.c.l.b16 %v1792
    %v1834 = vunpack.c.l.b16 %v1793
    %v1835 = vunpack.c.l.b16 %v1794
    %v1836 = vunpack.c.l.b16 %v1795
    %v1837 = vunpack.c.l.b16 %v1796
    %v1838 = vunpack.c.l.b16 %v1797
    %v1839 = vunpack.c.l.b16 %v1798
    %v1840 = vunpack.c.l.b16 %v1799
    %v1841 = vunpack.c.l.b16 %v1800
    %v1842 = vpack.c.b16 %v1827, %v1826
    %v1843 = vpack.c.b16 %v1829, %v1828
    %v1844 = vpack.c.b16 %v1831, %v1830
    %v1845 = vpack.c.b16 %v1833, %v1832
    %v1846 = vpack.c.b16 %v1835, %v1834
    %v1847 = vpack.c.b16 %v1837, %v1836
    %v1848 = vpack.c.b16 %v1839, %v1838
    %v1849 = vpack.c.b16 %v1841, %v1840
    %1858 = vmatprep.subr.bf16.mxu0 0
    %1859 = vmatpush1.bf16.msra.mxu0 %v1842
    %1860 = vmatprep.subr.bf16.mxu0 0
    %1861 = vmatpush1.bf16.msra.mxu0 %v1843
    %1862 = vmatprep.subr.bf16.mxu0 0
    %1863 = vmatpush1.bf16.msra.mxu0 %v1844
    %1864 = vmatprep.subr.bf16.mxu0 0
    %1865 = vmatpush1.bf16.msra.mxu0 %v1845
    %1866 = vmatprep.subr.bf16.mxu0 0
    %1867 = vmatpush1.bf16.msra.mxu0 %v1846
    %1868 = vmatprep.subr.bf16.mxu0 0
    %1869 = vmatpush1.bf16.msra.mxu0 %v1847
    %1870 = vmatprep.subr.bf16.mxu0 0
    %1871 = vmatpush1.bf16.msra.mxu0 %v1848
    %1872 = vmatprep.subr.bf16.mxu0 0
    %1873 = vmatpush1.bf16.msra.mxu0 %v1849
    %1874 = vmatprep.subr.bf16.mxu0 0
    %1875 = vmatpush1.bf16.msra.mxu0 0
    %1876 = vmatprep.subr.bf16.mxu0 0
    %1877 = vmatpush1.bf16.msra.mxu0 0
    %1878 = vmatprep.subr.bf16.mxu0 0
    %1879 = vmatpush1.bf16.msra.mxu0 0
    %1880 = vmatprep.subr.bf16.mxu0 0
    %1881 = vmatpush1.bf16.msra.mxu0 0
    %1882 = vmatprep.subr.bf16.mxu0 0
    %1883 = vmatpush1.bf16.msra.mxu0 0
    %1884 = vmatprep.subr.bf16.mxu0 0
    %1885 = vmatpush1.bf16.msra.mxu0 0
    %1886 = vmatprep.subr.bf16.mxu0 0
    %1887 = vmatpush1.bf16.msra.mxu0 0
    %1888 = vmatprep.subr.bf16.mxu0 0
    %1889 = vmatpush1.bf16.msra.mxu0 0
    %1890 = vmatprep.mubr.bf16.mxu0 0
    %1891 = vmatmul.mubr.bf16.gmra.mrb[0].mxu0 %v1801
    %v1892 = vpop.f32.mrb[0].mxu0
    %v1893 = vadd.f32 %v1808, %v1892
    %v1894 = vpop.f32.mrb[0].mxu0
    %v1895 = vpop.f32.mrb[0].mxu0
    %v1896 = vadd.f32 %v1808, %v1895
    %v1897 = vpop.f32.mrb[0].mxu0
    %1898 = vdwg.mxu0
    %v1899 = vadd.f32 %v1893, %v1647
    %v1900 = vadd.f32 %v1896, %v1648
    %v1901 = vsel %vm143, %v1899, 0.0
    %1902 = vadd.xlane.f32.xlu0 %v1901
    %v1903 = vpop.xlane.xlu0 %1902
    %v1904 = vsel %vm143, %v1900, 0.0
    %1905 = vadd.xlane.f32.xlu0 %v1904
    %v1906 = vpop.xlane.xlu0 %1905
    %v1907 = vmul.f32 %v1903, %v150
    %v1908 = vmul.f32 %v1906, %v150
    %v1909 = vsub.f32 %v1899, %v1907
    %v1910 = vsub.f32 %v1900, %v1908
    %v1911 = vmul.f32 %v1909, %v1909
    %v1912 = vmul.f32 %v1910, %v1910
    %v1913 = vsel %vm143, %v1911, 0.0
    %1914 = vadd.xlane.f32.xlu0 %v1913
    %v1915 = vpop.xlane.xlu0 %1914
    %v1916 = vsel %vm143, %v1912, 0.0
    %1917 = vadd.xlane.f32.xlu0 %v1916
    %v1918 = vpop.xlane.xlu0 %1917
    %v1919 = vmul.f32 %v1915, %v150
    %v1920 = vmul.f32 %v1918, %v150
    %v1921 = vadd.f32 %v1919, 1e-05
    %v1922 = vadd.f32 %v1920, 1e-05
    %v1923 = vrsqrt.pop %v1921
    %v1924 = vrsqrt.pop %v1922
    %v1925 = vmul.f32 %v1909, %v1923
    %v1926 = vmul.f32 %v1910, %v1924
    %s1927 = scalar_lea.vmem %s2, 48
    %v1928 = vld [vmem:[%s1927] sm:$0xff]
    %v1929 = vld [vmem:[%s1927 + $0x8] sm:$0xff]
    %v1930 = vmul.f32 %v1925, %v1928
    %v1931 = vmul.f32 %v1926, %v1929
    %s1932 = scalar_lea.vmem %s3, 48
    %v1933 = vld [vmem:[%s1932] sm:$0xff]
    %v1934 = vld [vmem:[%s1932 + $0x8] sm:$0xff]
    %v1935 = vadd.f32 %v1930, %v1933
    %v1936 = vadd.f32 %v1931, %v1934
    %v1937 = vld [vmem:[%s6 + $0xa4] sm:$0xf]
    %v1938 = vld [vmem:[%s6 + $0xa8] sm:$0xf]
    %v1939 = vld [vmem:[%s6 + $0xac] sm:$0xf]
    %v1940 = vld [vmem:[%s6 + $0xb0] sm:$0xf]
    %v1941 = vpack.c.bf16 %v1936, %v1935
    %s1942 = scalar_lea.vmem %s8, 16
    %v1943 = vld [vmem:[%s1942] sm:$0x3]
    %v1945 = vlaneseq
    %v1946 = vshrl.u32 %v1945, 7
    %v1947 = vsub.s32 0, %v1946
    %v1948 = vrot.slane %v1943, %v1947
    %v1954 = vunpack.c.l.b16 %v1937
    %v1955 = vunpack.c.l.b16 %v1938
    %v1956 = vunpack.c.l.b16 %v1939
    %v1957 = vunpack.c.l.b16 %v1940
    %v1958 = vpack.c.b16 %v1955, %v1954
    %v1959 = vpack.c.b16 %v1957, %v1956
    %v1963 = vsel %vm143, %v1941, 0
    %1965 = vmatprep.subr.bf16.mxu0 0
    %1966 = vmatpush1.bf16.msra.mxu0 %v1958
    %1967 = vmatprep.subr.bf16.mxu0 0
    %1968 = vmatpush1.bf16.msra.mxu0 %v1959
    %1969 = vmatprep.subr.bf16.mxu0 0
    %1970 = vmatpush1.bf16.msra.mxu0 0
    %1971 = vmatprep.subr.bf16.mxu0 0
    %1972 = vmatpush1.bf16.msra.mxu0 0
    %1973 = vmatprep.subr.bf16.mxu0 0
    %1974 = vmatpush1.bf16.msra.mxu0 0
    %1975 = vmatprep.subr.bf16.mxu0 0
    %1976 = vmatpush1.bf16.msra.mxu0 0
    %1977 = vmatprep.subr.bf16.mxu0 0
    %1978 = vmatpush1.bf16.msra.mxu0 0
    %1979 = vmatprep.subr.bf16.mxu0 0
    %1980 = vmatpush1.bf16.msra.mxu0 0
    %1981 = vmatprep.subr.bf16.mxu0 0
    %1982 = vmatpush1.bf16.msra.mxu0 0
    %1983 = vmatprep.subr.bf16.mxu0 0
    %1984 = vmatpush1.bf16.msra.mxu0 0
    %1985 = vmatprep.subr.bf16.mxu0 0
    %1986 = vmatpush1.bf16.msra.mxu0 0
    %1987 = vmatprep.subr.bf16.mxu0 0
    %1988 = vmatpush1.bf16.msra.mxu0 0
    %1989 = vmatprep.subr.bf16.mxu0 0
    %1990 = vmatpush1.bf16.msra.mxu0 0
    %1991 = vmatprep.subr.bf16.mxu0 0
    %1992 = vmatpush1.bf16.msra.mxu0 0
    %1993 = vmatprep.subr.bf16.mxu0 0
    %1994 = vmatpush1.bf16.msra.mxu0 0
    %1995 = vmatprep.subr.bf16.mxu0 0
    %1996 = vmatpush1.bf16.msra.mxu0 0
    %1997 = vmatprep.mubr.bf16.mxu0 0
    %1998 = vmatmul.mubr.bf16.gmra.mrb[0].mxu0 %v1963
    %v1999 = vpop.f32.mrb[0].mxu0
    %v2000 = vadd.f32 %v1948, %v1999
    %v2001 = vpop.f32.mrb[0].mxu0
    %v2002 = vpop.f32.mrb[0].mxu0
    %v2003 = vadd.f32 %v1948, %v2002
    %v2004 = vpop.f32.mrb[0].mxu0
    %2005 = vdwg.mxu0
    %v2006 = vpack.c.bf16 %v2003, %v2000
    %v2007 = vmul.f32 %v2000, %v44
    %v2008 = vmul.f32 %v2003, %v44
    %v2009 = vpack.c.bf16 %v2008, %v2007
    %2011 = vrot.lane.b32.xlu0 %v2006, 96
    %v2012 = vpop.permute.xlu0 %2011
    %v2014 = vsel %vm143, %v2009, 0
    %v2017 = vsel %vm143, %v2012, 0
    %2019 = vmatprep.subr.bf16.mxu0 0
    %2020 = vmatpush1.bf16.xpose.msra.mxu0 %v2017
    %2021 = vmatprep.subr.bf16.mxu0 0
    %2022 = vmatpush1.bf16.xpose.msra.mxu0 0
    %2023 = vmatprep.subr.bf16.mxu0 0
    %2024 = vmatpush1.bf16.xpose.msra.mxu0 0
    %2025 = vmatprep.subr.bf16.mxu0 0
    %2026 = vmatpush1.bf16.xpose.msra.mxu0 0
    %2027 = vmatprep.subr.bf16.mxu0 0
    %2028 = vmatpush1.bf16.xpose.msra.mxu0 0
    %2029 = vmatprep.subr.bf16.mxu0 0
    %2030 = vmatpush1.bf16.xpose.msra.mxu0 0
    %2031 = vmatprep.subr.bf16.mxu0 0
    %2032 = vmatpush1.bf16.xpose.msra.mxu0 0
    %2033 = vmatprep.subr.bf16.mxu0 0
    %2034 = vmatpush1.bf16.xpose.msra.mxu0 0
    %2035 = vmatprep.subr.bf16.mxu0 0
    %2036 = vmatpush1.bf16.xpose.msra.mxu0 0
    %2037 = vmatprep.subr.bf16.mxu0 0
    %2038 = vmatpush1.bf16.xpose.msra.mxu0 0
    %2039 = vmatprep.subr.bf16.mxu0 0
    %2040 = vmatpush1.bf16.xpose.msra.mxu0 0
    %2041 = vmatprep.subr.bf16.mxu0 0
    %2042 = vmatpush1.bf16.xpose.msra.mxu0 0
    %2043 = vmatprep.subr.bf16.mxu0 0
    %2044 = vmatpush1.bf16.xpose.msra.mxu0 0
    %2045 = vmatprep.subr.bf16.mxu0 0
    %2046 = vmatpush1.bf16.xpose.msra.mxu0 0
    %2047 = vmatprep.subr.bf16.mxu0 0
    %2048 = vmatpush1.bf16.xpose.msra.mxu0 0
    %2049 = vmatprep.subr.bf16.mxu0 0
    %2050 = vmatpush1.bf16.xpose.msra.mxu0 0
    %2051 = vmatprep.mubr.bf16.mxu0 0
    %2052 = vmatmul.mubr.bf16.gmra.mrb[0].mxu0 %v2014
    %v2053 = vpop.f32.mrb[0].mxu0
    %v2054 = vadd.f32 0.0, %v2053
    %v2055 = vpop.f32.mrb[0].mxu0
    %v2056 = vpop.f32.mrb[0].mxu0
    %v2057 = vadd.f32 0.0, %v2056
    %v2058 = vpop.f32.mrb[0].mxu0
    %2059 = vdwg.mxu0
    %v2060 = vmul.f32 %v2054, 0.35355338
    %v2061 = vmul.f32 %v2057, 0.35355338
    %v2062 = vadd.f32 %v2060, %v36
    %v2063 = vadd.f32 %v2061, %v37
    %v2064 = vsel %vm306, %v2062, -inf
    %2065 = vmax.xlane.f32.xlu0 %v2064
    %v2066 = vpop.xlane.xlu0 %2065
    %v2067 = vsel %vm306, %v2063, -inf
    %2068 = vmax.xlane.f32.xlu0 %v2067
    %v2069 = vpop.xlane.xlu0 %2068
    %v2070 = vsub.f32 %v2062, %v2066
    %v2071 = vsub.f32 %v2063, %v2069
    %v2072 = vmul.f32 %v2070, 1.442695
    %v2073 = vpow.pop %v2072
    %v2074 = vmul.f32 %v2071, 1.442695
    %v2075 = vpow.pop %v2074
    %v2076 = vsel %vm306, %v2073, 0.0
    %2077 = vadd.xlane.f32.xlu0 %v2076
    %v2078 = vpop.xlane.xlu0 %2077
    %v2079 = vsel %vm306, %v2075, 0.0
    %2080 = vadd.xlane.f32.xlu0 %v2079
    %v2081 = vpop.xlane.xlu0 %2080
    %v2082 = vrcp.pop %v2078
    %v2083 = vrcp.pop %v2081
    %v2084 = vmul.f32 %v2073, %v2082
    %v2085 = vmul.f32 %v2075, %v2083
    %v2086 = vmul.f32 %v2000, %v331
    %v2087 = vmul.f32 %v2003, %v331
    %v2088 = vpack.c.bf16 %v2087, %v2086
    %v2089 = vpack.c.bf16 %v2085, %v2084
    %v2090 = vmul.f32 %v2000, %v49
    %v2091 = vmul.f32 %v2003, %v49
    %v2092 = vpack.c.bf16 %v2091, %v2090
    %v2094 = vsel %vm143, %v2092, 0
    %2096 = vmatprep.subr.bf16.mxu0 0
    %2097 = vmatpush1.bf16.xpose.msra.mxu0 %v2017
    %2098 = vmatprep.subr.bf16.mxu0 0
    %2099 = vmatpush1.bf16.xpose.msra.mxu0 0
    %2100 = vmatprep.subr.bf16.mxu0 0
    %2101 = vmatpush1.bf16.xpose.msra.mxu0 0
    %2102 = vmatprep.subr.bf16.mxu0 0
    %2103 = vmatpush1.bf16.xpose.msra.mxu0 0
    %2104 = vmatprep.subr.bf16.mxu0 0
    %2105 = vmatpush1.bf16.xpose.msra.mxu0 0
    %2106 = vmatprep.subr.bf16.mxu0 0
    %2107 = vmatpush1.bf16.xpose.msra.mxu0 0
    %2108 = vmatprep.subr.bf16.mxu0 0
    %2109 = vmatpush1.bf16.xpose.msra.mxu0 0
    %2110 = vmatprep.subr.bf16.mxu0 0
    %2111 = vmatpush1.bf16.xpose.msra.mxu0 0
    %2112 = vmatprep.subr.bf16.mxu0 0
    %2113 = vmatpush1.bf16.xpose.msra.mxu0 0
    %2114 = vmatprep.subr.bf16.mxu0 0
    %2115 = vmatpush1.bf16.xpose.msra.mxu0 0
    %2116 = vmatprep.subr.bf16.mxu0 0
    %2117 = vmatpush1.bf16.xpose.msra.mxu0 0
    %2118 = vmatprep.subr.bf16.mxu0 0
    %2119 = vmatpush1.bf16.xpose.msra.mxu0 0
    %2120 = vmatprep.subr.bf16.mxu0 0
    %2121 = vmatpush1.bf16.xpose.msra.mxu0 0
    %2122 = vmatprep.subr.bf16.mxu0 0
    %2123 = vmatpush1.bf16.xpose.msra.mxu0 0
    %2124 = vmatprep.subr.bf16.mxu0 0
    %2125 = vmatpush1.bf16.xpose.msra.mxu0 0
    %2126 = vmatprep.subr.bf16.mxu0 0
    %2127 = vmatpush1.bf16.xpose.msra.mxu0 0
    %2128 = vmatprep.mubr.bf16.mxu0 0
    %2129 = vmatmul.mubr.bf16.gmra.mrb[0].mxu0 %v2094
    %v2130 = vpop.f32.mrb[0].mxu0
    %v2131 = vadd.f32 0.0, %v2130
    %v2132 = vpop.f32.mrb[0].mxu0
    %v2133 = vpop.f32.mrb[0].mxu0
    %v2134 = vadd.f32 0.0, %v2133
    %v2135 = vpop.f32.mrb[0].mxu0
    %2136 = vdwg.mxu0
    %v2137 = vmul.f32 %v2131, 0.35355338
    %v2138 = vmul.f32 %v2134, 0.35355338
    %v2139 = vadd.f32 %v2137, %v36
    %v2140 = vadd.f32 %v2138, %v37
    %v2141 = vsel %vm306, %v2139, -inf
    %2142 = vmax.xlane.f32.xlu0 %v2141
    %v2143 = vpop.xlane.xlu0 %2142
    %v2144 = vsel %vm306, %v2140, -inf
    %2145 = vmax.xlane.f32.xlu0 %v2144
    %v2146 = vpop.xlane.xlu0 %2145
    %v2147 = vsub.f32 %v2139, %v2143
    %v2148 = vsub.f32 %v2140, %v2146
    %v2149 = vmul.f32 %v2147, 1.442695
    %v2150 = vpow.pop %v2149
    %v2151 = vmul.f32 %v2148, 1.442695
    %v2152 = vpow.pop %v2151
    %v2153 = vsel %vm306, %v2150, 0.0
    %2154 = vadd.xlane.f32.xlu0 %v2153
    %v2155 = vpop.xlane.xlu0 %2154
    %v2156 = vsel %vm306, %v2152, 0.0
    %2157 = vadd.xlane.f32.xlu0 %v2156
    %v2158 = vpop.xlane.xlu0 %2157
    %v2159 = vrcp.pop %v2155
    %v2160 = vrcp.pop %v2158
    %v2161 = vmul.f32 %v2150, %v2159
    %v2162 = vmul.f32 %v2152, %v2160
    %v2163 = vmul.f32 %v2000, %v412
    %v2164 = vmul.f32 %v2003, %v412
    %v2165 = vpack.c.bf16 %v2164, %v2163
    %v2166 = vpack.c.bf16 %v2162, %v2161
    %2168 = vrot.lane.b32.xlu0 %v2165, 64
    %v2169 = vpop.permute.xlu0 %2168
    %v2172 = vsel %vm306, %v2166, 0
    %2174 = vmatprep.subr.bf16.mxu0 0
    %2175 = vmatpush1.bf16.msra.mxu0 %v2169
    %2176 = vmatprep.subr.bf16.mxu0 0
    %2177 = vmatpush1.bf16.msra.mxu0 0
    %2178 = vmatprep.subr.bf16.mxu0 0
    %2179 = vmatpush1.bf16.msra.mxu0 0
    %2180 = vmatprep.subr.bf16.mxu0 0
    %2181 = vmatpush1.bf16.msra.mxu0 0
    %2182 = vmatprep.subr.bf16.mxu0 0
    %2183 = vmatpush1.bf16.msra.mxu0 0
    %2184 = vmatprep.subr.bf16.mxu0 0
    %2185 = vmatpush1.bf16.msra.mxu0 0
    %2186 = vmatprep.subr.bf16.mxu0 0
    %2187 = vmatpush1.bf16.msra.mxu0 0
    %2188 = vmatprep.subr.bf16.mxu0 0
    %2189 = vmatpush1.bf16.msra.mxu0 0
    %2190 = vmatprep.subr.bf16.mxu0 0
    %2191 = vmatpush1.bf16.msra.mxu0 0
    %2192 = vmatprep.subr.bf16.mxu0 0
    %2193 = vmatpush1.bf16.msra.mxu0 0
    %2194 = vmatprep.subr.bf16.mxu0 0
    %2195 = vmatpush1.bf16.msra.mxu0 0
    %2196 = vmatprep.subr.bf16.mxu0 0
    %2197 = vmatpush1.bf16.msra.mxu0 0
    %2198 = vmatprep.subr.bf16.mxu0 0
    %2199 = vmatpush1.bf16.msra.mxu0 0
    %2200 = vmatprep.subr.bf16.mxu0 0
    %2201 = vmatpush1.bf16.msra.mxu0 0
    %2202 = vmatprep.subr.bf16.mxu0 0
    %2203 = vmatpush1.bf16.msra.mxu0 0
    %2204 = vmatprep.subr.bf16.mxu0 0
    %2205 = vmatpush1.bf16.msra.mxu0 0
    %2206 = vmatprep.mubr.bf16.mxu0 0
    %2207 = vmatmul.mubr.bf16.gmra.mrb[0].mxu0 %v2172
    %v2208 = vpop.f32.mrb[0].mxu0
    %v2209 = vadd.f32 0.0, %v2208
    %v2210 = vpop.f32.mrb[0].mxu0
    %v2211 = vpop.f32.mrb[0].mxu0
    %v2212 = vadd.f32 0.0, %v2211
    %v2213 = vpop.f32.mrb[0].mxu0
    %2214 = vdwg.mxu0
    %2216 = vrot.lane.b32.xlu0 %v2088, 64
    %v2217 = vpop.permute.xlu0 %2216
    %v2220 = vsel %vm306, %v2089, 0
    %2222 = vmatprep.subr.bf16.mxu0 0
    %2223 = vmatpush1.bf16.msra.mxu0 %v2217
    %2224 = vmatprep.subr.bf16.mxu0 0
    %2225 = vmatpush1.bf16.msra.mxu0 0
    %2226 = vmatprep.subr.bf16.mxu0 0
    %2227 = vmatpush1.bf16.msra.mxu0 0
    %2228 = vmatprep.subr.bf16.mxu0 0
    %2229 = vmatpush1.bf16.msra.mxu0 0
    %2230 = vmatprep.subr.bf16.mxu0 0
    %2231 = vmatpush1.bf16.msra.mxu0 0
    %2232 = vmatprep.subr.bf16.mxu0 0
    %2233 = vmatpush1.bf16.msra.mxu0 0
    %2234 = vmatprep.subr.bf16.mxu0 0
    %2235 = vmatpush1.bf16.msra.mxu0 0
    %2236 = vmatprep.subr.bf16.mxu0 0
    %2237 = vmatpush1.bf16.msra.mxu0 0
    %2238 = vmatprep.subr.bf16.mxu0 0
    %2239 = vmatpush1.bf16.msra.mxu0 0
    %2240 = vmatprep.subr.bf16.mxu0 0
    %2241 = vmatpush1.bf16.msra.mxu0 0
    %2242 = vmatprep.subr.bf16.mxu0 0
    %2243 = vmatpush1.bf16.msra.mxu0 0
    %2244 = vmatprep.subr.bf16.mxu0 0
    %2245 = vmatpush1.bf16.msra.mxu0 0
    %2246 = vmatprep.subr.bf16.mxu0 0
    %2247 = vmatpush1.bf16.msra.mxu0 0
    %2248 = vmatprep.subr.bf16.mxu0 0
    %2249 = vmatpush1.bf16.msra.mxu0 0
    %2250 = vmatprep.subr.bf16.mxu0 0
    %2251 = vmatpush1.bf16.msra.mxu0 0
    %2252 = vmatprep.subr.bf16.mxu0 0
    %2253 = vmatpush1.bf16.msra.mxu0 0
    %2254 = vmatprep.mubr.bf16.mxu0 0
    %2255 = vmatmul.mubr.bf16.gmra.mrb[0].mxu0 %v2220
    %v2256 = vpop.f32.mrb[0].mxu0
    %v2257 = vadd.f32 %v2209, %v2256
    %v2258 = vpop.f32.mrb[0].mxu0
    %v2259 = vpop.f32.mrb[0].mxu0
    %v2260 = vadd.f32 %v2212, %v2259
    %v2261 = vpop.f32.mrb[0].mxu0
    %2262 = vdwg.mxu0
    %v2263 = vmul.f32 %v2000, %v54
    %v2264 = vmul.f32 %v2003, %v54
    %v2265 = vpack.c.bf16 %v2264, %v2263
    %v2267 = vsel %vm143, %v2265, 0
    %2269 = vmatprep.subr.bf16.mxu0 0
    %2270 = vmatpush1.bf16.xpose.msra.mxu0 %v2017
    %2271 = vmatprep.subr.bf16.mxu0 0
    %2272 = vmatpush1.bf16.xpose.msra.mxu0 0
    %2273 = vmatprep.subr.bf16.mxu0 0
    %2274 = vmatpush1.bf16.xpose.msra.mxu0 0
    %2275 = vmatprep.subr.bf16.mxu0 0
    %2276 = vmatpush1.bf16.xpose.msra.mxu0 0
    %2277 = vmatprep.subr.bf16.mxu0 0
    %2278 = vmatpush1.bf16.xpose.msra.mxu0 0
    %2279 = vmatprep.subr.bf16.mxu0 0
    %2280 = vmatpush1.bf16.xpose.msra.mxu0 0
    %2281 = vmatprep.subr.bf16.mxu0 0
    %2282 = vmatpush1.bf16.xpose.msra.mxu0 0
    %2283 = vmatprep.subr.bf16.mxu0 0
    %2284 = vmatpush1.bf16.xpose.msra.mxu0 0
    %2285 = vmatprep.subr.bf16.mxu0 0
    %2286 = vmatpush1.bf16.xpose.msra.mxu0 0
    %2287 = vmatprep.subr.bf16.mxu0 0
    %2288 = vmatpush1.bf16.xpose.msra.mxu0 0
    %2289 = vmatprep.subr.bf16.mxu0 0
    %2290 = vmatpush1.bf16.xpose.msra.mxu0 0
    %2291 = vmatprep.subr.bf16.mxu0 0
    %2292 = vmatpush1.bf16.xpose.msra.mxu0 0
    %2293 = vmatprep.subr.bf16.mxu0 0
    %2294 = vmatpush1.bf16.xpose.msra.mxu0 0
    %2295 = vmatprep.subr.bf16.mxu0 0
    %2296 = vmatpush1.bf16.xpose.msra.mxu0 0
    %2297 = vmatprep.subr.bf16.mxu0 0
    %2298 = vmatpush1.bf16.xpose.msra.mxu0 0
    %2299 = vmatprep.subr.bf16.mxu0 0
    %2300 = vmatpush1.bf16.xpose.msra.mxu0 0
    %2301 = vmatprep.mubr.bf16.mxu0 0
    %2302 = vmatmul.mubr.bf16.gmra.mrb[0].mxu0 %v2267
    %v2303 = vpop.f32.mrb[0].mxu0
    %v2304 = vadd.f32 0.0, %v2303
    %v2305 = vpop.f32.mrb[0].mxu0
    %v2306 = vpop.f32.mrb[0].mxu0
    %v2307 = vadd.f32 0.0, %v2306
    %v2308 = vpop.f32.mrb[0].mxu0
    %2309 = vdwg.mxu0
    %v2310 = vmul.f32 %v2304, 0.35355338
    %v2311 = vmul.f32 %v2307, 0.35355338
    %v2312 = vadd.f32 %v2310, %v36
    %v2313 = vadd.f32 %v2311, %v37
    %v2314 = vsel %vm306, %v2312, -inf
    %2315 = vmax.xlane.f32.xlu0 %v2314
    %v2316 = vpop.xlane.xlu0 %2315
    %v2317 = vsel %vm306, %v2313, -inf
    %2318 = vmax.xlane.f32.xlu0 %v2317
    %v2319 = vpop.xlane.xlu0 %2318
    %v2320 = vsub.f32 %v2312, %v2316
    %v2321 = vsub.f32 %v2313, %v2319
    %v2322 = vmul.f32 %v2320, 1.442695
    %v2323 = vpow.pop %v2322
    %v2324 = vmul.f32 %v2321, 1.442695
    %v2325 = vpow.pop %v2324
    %v2326 = vsel %vm306, %v2323, 0.0
    %2327 = vadd.xlane.f32.xlu0 %v2326
    %v2328 = vpop.xlane.xlu0 %2327
    %v2329 = vsel %vm306, %v2325, 0.0
    %2330 = vadd.xlane.f32.xlu0 %v2329
    %v2331 = vpop.xlane.xlu0 %2330
    %v2332 = vrcp.pop %v2328
    %v2333 = vrcp.pop %v2331
    %v2334 = vmul.f32 %v2323, %v2332
    %v2335 = vmul.f32 %v2325, %v2333
    %v2336 = vmul.f32 %v2000, %v589
    %v2337 = vmul.f32 %v2003, %v589
    %v2338 = vpack.c.bf16 %v2337, %v2336
    %v2339 = vpack.c.bf16 %v2335, %v2334
    %2341 = vrot.lane.b32.xlu0 %v2338, 64
    %v2342 = vpop.permute.xlu0 %2341
    %v2345 = vsel %vm306, %v2339, 0
    %2347 = vmatprep.subr.bf16.mxu0 0
    %2348 = vmatpush1.bf16.msra.mxu0 %v2342
    %2349 = vmatprep.subr.bf16.mxu0 0
    %2350 = vmatpush1.bf16.msra.mxu0 0
    %2351 = vmatprep.subr.bf16.mxu0 0
    %2352 = vmatpush1.bf16.msra.mxu0 0
    %2353 = vmatprep.subr.bf16.mxu0 0
    %2354 = vmatpush1.bf16.msra.mxu0 0
    %2355 = vmatprep.subr.bf16.mxu0 0
    %2356 = vmatpush1.bf16.msra.mxu0 0
    %2357 = vmatprep.subr.bf16.mxu0 0
    %2358 = vmatpush1.bf16.msra.mxu0 0
    %2359 = vmatprep.subr.bf16.mxu0 0
    %2360 = vmatpush1.bf16.msra.mxu0 0
    %2361 = vmatprep.subr.bf16.mxu0 0
    %2362 = vmatpush1.bf16.msra.mxu0 0
    %2363 = vmatprep.subr.bf16.mxu0 0
    %2364 = vmatpush1.bf16.msra.mxu0 0
    %2365 = vmatprep.subr.bf16.mxu0 0
    %2366 = vmatpush1.bf16.msra.mxu0 0
    %2367 = vmatprep.subr.bf16.mxu0 0
    %2368 = vmatpush1.bf16.msra.mxu0 0
    %2369 = vmatprep.subr.bf16.mxu0 0
    %2370 = vmatpush1.bf16.msra.mxu0 0
    %2371 = vmatprep.subr.bf16.mxu0 0
    %2372 = vmatpush1.bf16.msra.mxu0 0
    %2373 = vmatprep.subr.bf16.mxu0 0
    %2374 = vmatpush1.bf16.msra.mxu0 0
    %2375 = vmatprep.subr.bf16.mxu0 0
    %2376 = vmatpush1.bf16.msra.mxu0 0
    %2377 = vmatprep.subr.bf16.mxu0 0
    %2378 = vmatpush1.bf16.msra.mxu0 0
    %2379 = vmatprep.mubr.bf16.mxu0 0
    %2380 = vmatmul.mubr.bf16.gmra.mrb[0].mxu0 %v2345
    %v2381 = vpop.f32.mrb[0].mxu0
    %v2382 = vadd.f32 0.0, %v2381
    %v2383 = vpop.f32.mrb[0].mxu0
    %v2384 = vpop.f32.mrb[0].mxu0
    %v2385 = vadd.f32 0.0, %v2384
    %v2386 = vpop.f32.mrb[0].mxu0
    %2387 = vdwg.mxu0
    %v2388 = vadd.f32 %v2257, %v2382
    %v2389 = vadd.f32 %v2260, %v2385
    %v2390 = vmul.f32 %v2000, %v59
    %v2391 = vmul.f32 %v2003, %v59
    %v2392 = vpack.c.bf16 %v2391, %v2390
    %v2394 = vsel %vm143, %v2392, 0
    %2396 = vmatprep.subr.bf16.mxu0 0
    %2397 = vmatpush1.bf16.xpose.msra.mxu0 %v2017
    %2398 = vmatprep.subr.bf16.mxu0 0
    %2399 = vmatpush1.bf16.xpose.msra.mxu0 0
    %2400 = vmatprep.subr.bf16.mxu0 0
    %2401 = vmatpush1.bf16.xpose.msra.mxu0 0
    %2402 = vmatprep.subr.bf16.mxu0 0
    %2403 = vmatpush1.bf16.xpose.msra.mxu0 0
    %2404 = vmatprep.subr.bf16.mxu0 0
    %2405 = vmatpush1.bf16.xpose.msra.mxu0 0
    %2406 = vmatprep.subr.bf16.mxu0 0
    %2407 = vmatpush1.bf16.xpose.msra.mxu0 0
    %2408 = vmatprep.subr.bf16.mxu0 0
    %2409 = vmatpush1.bf16.xpose.msra.mxu0 0
    %2410 = vmatprep.subr.bf16.mxu0 0
    %2411 = vmatpush1.bf16.xpose.msra.mxu0 0
    %2412 = vmatprep.subr.bf16.mxu0 0
    %2413 = vmatpush1.bf16.xpose.msra.mxu0 0
    %2414 = vmatprep.subr.bf16.mxu0 0
    %2415 = vmatpush1.bf16.xpose.msra.mxu0 0
    %2416 = vmatprep.subr.bf16.mxu0 0
    %2417 = vmatpush1.bf16.xpose.msra.mxu0 0
    %2418 = vmatprep.subr.bf16.mxu0 0
    %2419 = vmatpush1.bf16.xpose.msra.mxu0 0
    %2420 = vmatprep.subr.bf16.mxu0 0
    %2421 = vmatpush1.bf16.xpose.msra.mxu0 0
    %2422 = vmatprep.subr.bf16.mxu0 0
    %2423 = vmatpush1.bf16.xpose.msra.mxu0 0
    %2424 = vmatprep.subr.bf16.mxu0 0
    %2425 = vmatpush1.bf16.xpose.msra.mxu0 0
    %2426 = vmatprep.subr.bf16.mxu0 0
    %2427 = vmatpush1.bf16.xpose.msra.mxu0 0
    %2428 = vmatprep.mubr.bf16.mxu0 0
    %2429 = vmatmul.mubr.bf16.gmra.mrb[0].mxu0 %v2394
    %v2430 = vpop.f32.mrb[0].mxu0
    %v2431 = vadd.f32 0.0, %v2430
    %v2432 = vpop.f32.mrb[0].mxu0
    %v2433 = vpop.f32.mrb[0].mxu0
    %v2434 = vadd.f32 0.0, %v2433
    %v2435 = vpop.f32.mrb[0].mxu0
    %2436 = vdwg.mxu0
    %v2437 = vmul.f32 %v2431, 0.35355338
    %v2438 = vmul.f32 %v2434, 0.35355338
    %v2439 = vadd.f32 %v2437, %v36
    %v2440 = vadd.f32 %v2438, %v37
    %v2441 = vsel %vm306, %v2439, -inf
    %2442 = vmax.xlane.f32.xlu0 %v2441
    %v2443 = vpop.xlane.xlu0 %2442
    %v2444 = vsel %vm306, %v2440, -inf
    %2445 = vmax.xlane.f32.xlu0 %v2444
    %v2446 = vpop.xlane.xlu0 %2445
    %v2447 = vsub.f32 %v2439, %v2443
    %v2448 = vsub.f32 %v2440, %v2446
    %v2449 = vmul.f32 %v2447, 1.442695
    %v2450 = vpow.pop %v2449
    %v2451 = vmul.f32 %v2448, 1.442695
    %v2452 = vpow.pop %v2451
    %v2453 = vsel %vm306, %v2450, 0.0
    %2454 = vadd.xlane.f32.xlu0 %v2453
    %v2455 = vpop.xlane.xlu0 %2454
    %v2456 = vsel %vm306, %v2452, 0.0
    %2457 = vadd.xlane.f32.xlu0 %v2456
    %v2458 = vpop.xlane.xlu0 %2457
    %v2459 = vrcp.pop %v2455
    %v2460 = vrcp.pop %v2458
    %v2461 = vmul.f32 %v2450, %v2459
    %v2462 = vmul.f32 %v2452, %v2460
    %v2463 = vmul.f32 %v2000, %v720
    %v2464 = vmul.f32 %v2003, %v720
    %v2465 = vpack.c.bf16 %v2464, %v2463
    %v2466 = vpack.c.bf16 %v2462, %v2461
    %2468 = vrot.lane.b32.xlu0 %v2465, 64
    %v2469 = vpop.permute.xlu0 %2468
    %v2472 = vsel %vm306, %v2466, 0
    %2474 = vmatprep.subr.bf16.mxu0 0
    %2475 = vmatpush1.bf16.msra.mxu0 %v2469
    %2476 = vmatprep.subr.bf16.mxu0 0
    %2477 = vmatpush1.bf16.msra.mxu0 0
    %2478 = vmatprep.subr.bf16.mxu0 0
    %2479 = vmatpush1.bf16.msra.mxu0 0
    %2480 = vmatprep.subr.bf16.mxu0 0
    %2481 = vmatpush1.bf16.msra.mxu0 0
    %2482 = vmatprep.subr.bf16.mxu0 0
    %2483 = vmatpush1.bf16.msra.mxu0 0
    %2484 = vmatprep.subr.bf16.mxu0 0
    %2485 = vmatpush1.bf16.msra.mxu0 0
    %2486 = vmatprep.subr.bf16.mxu0 0
    %2487 = vmatpush1.bf16.msra.mxu0 0
    %2488 = vmatprep.subr.bf16.mxu0 0
    %2489 = vmatpush1.bf16.msra.mxu0 0
    %2490 = vmatprep.subr.bf16.mxu0 0
    %2491 = vmatpush1.bf16.msra.mxu0 0
    %2492 = vmatprep.subr.bf16.mxu0 0
    %2493 = vmatpush1.bf16.msra.mxu0 0
    %2494 = vmatprep.subr.bf16.mxu0 0
    %2495 = vmatpush1.bf16.msra.mxu0 0
    %2496 = vmatprep.subr.bf16.mxu0 0
    %2497 = vmatpush1.bf16.msra.mxu0 0
    %2498 = vmatprep.subr.bf16.mxu0 0
    %2499 = vmatpush1.bf16.msra.mxu0 0
    %2500 = vmatprep.subr.bf16.mxu0 0
    %2501 = vmatpush1.bf16.msra.mxu0 0
    %2502 = vmatprep.subr.bf16.mxu0 0
    %2503 = vmatpush1.bf16.msra.mxu0 0
    %2504 = vmatprep.subr.bf16.mxu0 0
    %2505 = vmatpush1.bf16.msra.mxu0 0
    %2506 = vmatprep.mubr.bf16.mxu0 0
    %2507 = vmatmul.mubr.bf16.gmra.mrb[0].mxu0 %v2472
    %v2508 = vpop.f32.mrb[0].mxu0
    %v2509 = vadd.f32 0.0, %v2508
    %v2510 = vpop.f32.mrb[0].mxu0
    %v2511 = vpop.f32.mrb[0].mxu0
    %v2512 = vadd.f32 0.0, %v2511
    %v2513 = vpop.f32.mrb[0].mxu0
    %2514 = vdwg.mxu0
    %v2515 = vadd.f32 %v2388, %v2509
    %v2516 = vadd.f32 %v2389, %v2512
    %v2517 = vld [vmem:[%s6 + $0xb4] sm:$0xf]
    %v2518 = vld [vmem:[%s6 + $0xb8] sm:$0xf]
    %v2519 = vld [vmem:[%s6 + $0xbc] sm:$0xf]
    %v2520 = vld [vmem:[%s6 + $0xc0] sm:$0xf]
    %v2521 = vpack.c.bf16 %v2516, %v2515
    %s2522 = scalar_lea.vmem %s8, 18
    %v2523 = vld [vmem:[%s2522] sm:$0x3]
    %v2525 = vlaneseq
    %v2526 = vshrl.u32 %v2525, 7
    %v2527 = vsub.s32 0, %v2526
    %v2528 = vrot.slane %v2523, %v2527
    %v2534 = vunpack.c.l.b16 %v2517
    %v2535 = vunpack.c.l.b16 %v2518
    %v2536 = vunpack.c.l.b16 %v2519
    %v2537 = vunpack.c.l.b16 %v2520
    %v2538 = vpack.c.b16 %v2535, %v2534
    %v2539 = vpack.c.b16 %v2537, %v2536
    %v2543 = vsel %vm143, %v2521, 0
    %2545 = vmatprep.subr.bf16.mxu0 0
    %2546 = vmatpush1.bf16.msra.mxu0 %v2538
    %2547 = vmatprep.subr.bf16.mxu0 0
    %2548 = vmatpush1.bf16.msra.mxu0 %v2539
    %2549 = vmatprep.subr.bf16.mxu0 0
    %2550 = vmatpush1.bf16.msra.mxu0 0
    %2551 = vmatprep.subr.bf16.mxu0 0
    %2552 = vmatpush1.bf16.msra.mxu0 0
    %2553 = vmatprep.subr.bf16.mxu0 0
    %2554 = vmatpush1.bf16.msra.mxu0 0
    %2555 = vmatprep.subr.bf16.mxu0 0
    %2556 = vmatpush1.bf16.msra.mxu0 0
    %2557 = vmatprep.subr.bf16.mxu0 0
    %2558 = vmatpush1.bf16.msra.mxu0 0
    %2559 = vmatprep.subr.bf16.mxu0 0
    %2560 = vmatpush1.bf16.msra.mxu0 0
    %2561 = vmatprep.subr.bf16.mxu0 0
    %2562 = vmatpush1.bf16.msra.mxu0 0
    %2563 = vmatprep.subr.bf16.mxu0 0
    %2564 = vmatpush1.bf16.msra.mxu0 0
    %2565 = vmatprep.subr.bf16.mxu0 0
    %2566 = vmatpush1.bf16.msra.mxu0 0
    %2567 = vmatprep.subr.bf16.mxu0 0
    %2568 = vmatpush1.bf16.msra.mxu0 0
    %2569 = vmatprep.subr.bf16.mxu0 0
    %2570 = vmatpush1.bf16.msra.mxu0 0
    %2571 = vmatprep.subr.bf16.mxu0 0
    %2572 = vmatpush1.bf16.msra.mxu0 0
    %2573 = vmatprep.subr.bf16.mxu0 0
    %2574 = vmatpush1.bf16.msra.mxu0 0
    %2575 = vmatprep.subr.bf16.mxu0 0
    %2576 = vmatpush1.bf16.msra.mxu0 0
    %2577 = vmatprep.mubr.bf16.mxu0 0
    %2578 = vmatmul.mubr.bf16.gmra.mrb[0].mxu0 %v2543
    %v2579 = vpop.f32.mrb[0].mxu0
    %v2580 = vadd.f32 %v2528, %v2579
    %v2581 = vpop.f32.mrb[0].mxu0
    %v2582 = vpop.f32.mrb[0].mxu0
    %v2583 = vadd.f32 %v2528, %v2582
    %v2584 = vpop.f32.mrb[0].mxu0
    %2585 = vdwg.mxu0
    %v2586 = vadd.f32 %v2580, %v1899
    %v2587 = vadd.f32 %v2583, %v1900
    %v2588 = vsel %vm143, %v2586, 0.0
    %2589 = vadd.xlane.f32.xlu0 %v2588
    %v2590 = vpop.xlane.xlu0 %2589
    %v2591 = vsel %vm143, %v2587, 0.0
    %2592 = vadd.xlane.f32.xlu0 %v2591
    %v2593 = vpop.xlane.xlu0 %2592
    %v2594 = vmul.f32 %v2590, %v150
    %v2595 = vmul.f32 %v2593, %v150
    %v2596 = vsub.f32 %v2586, %v2594
    %v2597 = vsub.f32 %v2587, %v2595
    %v2598 = vmul.f32 %v2596, %v2596
    %v2599 = vmul.f32 %v2597, %v2597
    %v2600 = vsel %vm143, %v2598, 0.0
    %2601 = vadd.xlane.f32.xlu0 %v2600
    %v2602 = vpop.xlane.xlu0 %2601
    %v2603 = vsel %vm143, %v2599, 0.0
    %2604 = vadd.xlane.f32.xlu0 %v2603
    %v2605 = vpop.xlane.xlu0 %2604
    %v2606 = vmul.f32 %v2602, %v150
    %v2607 = vmul.f32 %v2605, %v150
    %v2608 = vadd.f32 %v2606, 1e-05
    %v2609 = vadd.f32 %v2607, 1e-05
    %v2610 = vrsqrt.pop %v2608
    %v2611 = vrsqrt.pop %v2609
    %v2612 = vmul.f32 %v2596, %v2610
    %v2613 = vmul.f32 %v2597, %v2611
    %s2614 = scalar_lea.vmem %s2, 64
    %v2615 = vld [vmem:[%s2614] sm:$0xff]
    %v2616 = vld [vmem:[%s2614 + $0x8] sm:$0xff]
    %v2617 = vmul.f32 %v2612, %v2615
    %v2618 = vmul.f32 %v2613, %v2616
    %s2619 = scalar_lea.vmem %s3, 64
    %v2620 = vld [vmem:[%s2619] sm:$0xff]
    %v2621 = vld [vmem:[%s2619 + $0x8] sm:$0xff]
    %v2622 = vadd.f32 %v2617, %v2620
    %v2623 = vadd.f32 %v2618, %v2621
    %v2624 = vld [vmem:[%s6 + $0xc4] sm:$0xf]
    %v2625 = vld [vmem:[%s6 + $0xc8] sm:$0xf]
    %v2626 = vld [vmem:[%s6 + $0xcc] sm:$0xf]
    %v2627 = vld [vmem:[%s6 + $0xd0] sm:$0xf]
    %v2628 = vpack.c.bf16 %v2623, %v2622
    %s2629 = scalar_lea.vmem %s8, 20
    %v2630 = vld [vmem:[%s2629] sm:$0x3]
    %v2632 = vlaneseq
    %v2633 = vshrl.u32 %v2632, 7
    %v2634 = vsub.s32 0, %v2633
    %v2635 = vrot.slane %v2630, %v2634
    %v2641 = vunpack.c.l.b16 %v2624
    %v2642 = vunpack.c.l.b16 %v2625
    %v2643 = vunpack.c.l.b16 %v2626
    %v2644 = vunpack.c.l.b16 %v2627
    %v2645 = vpack.c.b16 %v2642, %v2641
    %v2646 = vpack.c.b16 %v2644, %v2643
    %v2650 = vsel %vm143, %v2628, 0
    %2652 = vmatprep.subr.bf16.mxu0 0
    %2653 = vmatpush1.bf16.msra.mxu0 %v2645
    %2654 = vmatprep.subr.bf16.mxu0 0
    %2655 = vmatpush1.bf16.msra.mxu0 %v2646
    %2656 = vmatprep.subr.bf16.mxu0 0
    %2657 = vmatpush1.bf16.msra.mxu0 0
    %2658 = vmatprep.subr.bf16.mxu0 0
    %2659 = vmatpush1.bf16.msra.mxu0 0
    %2660 = vmatprep.subr.bf16.mxu0 0
    %2661 = vmatpush1.bf16.msra.mxu0 0
    %2662 = vmatprep.subr.bf16.mxu0 0
    %2663 = vmatpush1.bf16.msra.mxu0 0
    %2664 = vmatprep.subr.bf16.mxu0 0
    %2665 = vmatpush1.bf16.msra.mxu0 0
    %2666 = vmatprep.subr.bf16.mxu0 0
    %2667 = vmatpush1.bf16.msra.mxu0 0
    %2668 = vmatprep.subr.bf16.mxu0 0
    %2669 = vmatpush1.bf16.msra.mxu0 0
    %2670 = vmatprep.subr.bf16.mxu0 0
    %2671 = vmatpush1.bf16.msra.mxu0 0
    %2672 = vmatprep.subr.bf16.mxu0 0
    %2673 = vmatpush1.bf16.msra.mxu0 0
    %2674 = vmatprep.subr.bf16.mxu0 0
    %2675 = vmatpush1.bf16.msra.mxu0 0
    %2676 = vmatprep.subr.bf16.mxu0 0
    %2677 = vmatpush1.bf16.msra.mxu0 0
    %2678 = vmatprep.subr.bf16.mxu0 0
    %2679 = vmatpush1.bf16.msra.mxu0 0
    %2680 = vmatprep.subr.bf16.mxu0 0
    %2681 = vmatpush1.bf16.msra.mxu0 0
    %2682 = vmatprep.subr.bf16.mxu0 0
    %2683 = vmatpush1.bf16.msra.mxu0 0
    %2684 = vmatprep.mubr.bf16.mxu0 0
    %2685 = vmatmul.mubr.bf16.gmra.mrb[0].mxu0 %v2650
    %v2686 = vpop.f32.mrb[0].mxu0
    %v2687 = vadd.f32 %v2635, %v2686
    %v2688 = vpop.f32.mrb[0].mxu0
    %v2689 = vpop.f32.mrb[0].mxu0
    %v2690 = vadd.f32 %v2635, %v2689
    %v2691 = vpop.f32.mrb[0].mxu0
    %2692 = vdwg.mxu0
    %v2693 = vld [vmem:[%s6 + $0xd4] sm:$0xf]
    %v2694 = vld [vmem:[%s6 + $0xd8] sm:$0xf]
    %v2695 = vld [vmem:[%s6 + $0xdc] sm:$0xf]
    %v2696 = vld [vmem:[%s6 + $0xe0] sm:$0xf]
    %s2697 = scalar_lea.vmem %s8, 22
    %v2698 = vld [vmem:[%s2697] sm:$0x3]
    %v2700 = vlaneseq
    %v2701 = vshrl.u32 %v2700, 7
    %v2702 = vsub.s32 0, %v2701
    %v2703 = vrot.slane %v2698, %v2702
    %v2709 = vunpack.c.l.b16 %v2693
    %v2710 = vunpack.c.l.b16 %v2694
    %v2711 = vunpack.c.l.b16 %v2695
    %v2712 = vunpack.c.l.b16 %v2696
    %v2713 = vpack.c.b16 %v2710, %v2709
    %v2714 = vpack.c.b16 %v2712, %v2711
    %2717 = vmatprep.subr.bf16.mxu0 0
    %2718 = vmatpush1.bf16.msra.mxu0 %v2713
    %2719 = vmatprep.subr.bf16.mxu0 0
    %2720 = vmatpush1.bf16.msra.mxu0 %v2714
    %2721 = vmatprep.subr.bf16.mxu0 0
    %2722 = vmatpush1.bf16.msra.mxu0 0
    %2723 = vmatprep.subr.bf16.mxu0 0
    %2724 = vmatpush1.bf16.msra.mxu0 0
    %2725 = vmatprep.subr.bf16.mxu0 0
    %2726 = vmatpush1.bf16.msra.mxu0 0
    %2727 = vmatprep.subr.bf16.mxu0 0
    %2728 = vmatpush1.bf16.msra.mxu0 0
    %2729 = vmatprep.subr.bf16.mxu0 0
    %2730 = vmatpush1.bf16.msra.mxu0 0
    %2731 = vmatprep.subr.bf16.mxu0 0
    %2732 = vmatpush1.bf16.msra.mxu0 0
    %2733 = vmatprep.subr.bf16.mxu0 0
    %2734 = vmatpush1.bf16.msra.mxu0 0
    %2735 = vmatprep.subr.bf16.mxu0 0
    %2736 = vmatpush1.bf16.msra.mxu0 0
    %2737 = vmatprep.subr.bf16.mxu0 0
    %2738 = vmatpush1.bf16.msra.mxu0 0
    %2739 = vmatprep.subr.bf16.mxu0 0
    %2740 = vmatpush1.bf16.msra.mxu0 0
    %2741 = vmatprep.subr.bf16.mxu0 0
    %2742 = vmatpush1.bf16.msra.mxu0 0
    %2743 = vmatprep.subr.bf16.mxu0 0
    %2744 = vmatpush1.bf16.msra.mxu0 0
    %2745 = vmatprep.subr.bf16.mxu0 0
    %2746 = vmatpush1.bf16.msra.mxu0 0
    %2747 = vmatprep.subr.bf16.mxu0 0
    %2748 = vmatpush1.bf16.msra.mxu0 0
    %2749 = vmatprep.mubr.bf16.mxu0 0
    %2750 = vmatmul.mubr.bf16.gmra.mrb[0].mxu0 %v981
    %v2751 = vpop.f32.mrb[0].mxu0
    %v2752 = vadd.f32 %v2703, %v2751
    %v2753 = vpop.f32.mrb[0].mxu0
    %v2754 = vpop.f32.mrb[0].mxu0
    %v2755 = vadd.f32 %v2703, %v2754
    %v2756 = vpop.f32.mrb[0].mxu0
    %2757 = vdwg.mxu0
    %v2758 = vpack.c.bf16 %v2755, %v2752
    %v2759 = vmul.f32 %v2687, %v44
    %v2760 = vmul.f32 %v2690, %v44
    %v2761 = vpack.c.bf16 %v2760, %v2759
    %v2763 = vsel %vm143, %v2761, 0
    %v2766 = vsel %vm143, %v2758, 0
    %2768 = vmatprep.subr.bf16.mxu0 0
    %2769 = vmatpush1.bf16.xpose.msra.mxu0 %v2766
    %2770 = vmatprep.subr.bf16.mxu0 0
    %2771 = vmatpush1.bf16.xpose.msra.mxu0 0
    %2772 = vmatprep.subr.bf16.mxu0 0
    %2773 = vmatpush1.bf16.xpose.msra.mxu0 0
    %2774 = vmatprep.subr.bf16.mxu0 0
    %2775 = vmatpush1.bf16.xpose.msra.mxu0 0
    %2776 = vmatprep.subr.bf16.mxu0 0
    %2777 = vmatpush1.bf16.xpose.msra.mxu0 0
    %2778 = vmatprep.subr.bf16.mxu0 0
    %2779 = vmatpush1.bf16.xpose.msra.mxu0 0
    %2780 = vmatprep.subr.bf16.mxu0 0
    %2781 = vmatpush1.bf16.xpose.msra.mxu0 0
    %2782 = vmatprep.subr.bf16.mxu0 0
    %2783 = vmatpush1.bf16.xpose.msra.mxu0 0
    %2784 = vmatprep.subr.bf16.mxu0 0
    %2785 = vmatpush1.bf16.xpose.msra.mxu0 0
    %2786 = vmatprep.subr.bf16.mxu0 0
    %2787 = vmatpush1.bf16.xpose.msra.mxu0 0
    %2788 = vmatprep.subr.bf16.mxu0 0
    %2789 = vmatpush1.bf16.xpose.msra.mxu0 0
    %2790 = vmatprep.subr.bf16.mxu0 0
    %2791 = vmatpush1.bf16.xpose.msra.mxu0 0
    %2792 = vmatprep.subr.bf16.mxu0 0
    %2793 = vmatpush1.bf16.xpose.msra.mxu0 0
    %2794 = vmatprep.subr.bf16.mxu0 0
    %2795 = vmatpush1.bf16.xpose.msra.mxu0 0
    %2796 = vmatprep.subr.bf16.mxu0 0
    %2797 = vmatpush1.bf16.xpose.msra.mxu0 0
    %2798 = vmatprep.subr.bf16.mxu0 0
    %2799 = vmatpush1.bf16.xpose.msra.mxu0 0
    %2800 = vmatprep.mubr.bf16.mxu0 0
    %2801 = vmatmul.mubr.bf16.gmra.mrb[0].mxu0 %v2763
    %v2802 = vpop.f32.mrb[0].mxu0
    %v2803 = vadd.f32 0.0, %v2802
    %v2804 = vpop.f32.mrb[0].mxu0
    %v2805 = vpop.f32.mrb[0].mxu0
    %v2806 = vadd.f32 0.0, %v2805
    %v2807 = vpop.f32.mrb[0].mxu0
    %2808 = vdwg.mxu0
    %v2809 = vmul.f32 %v2803, 0.35355338
    %v2810 = vmul.f32 %v2806, 0.35355338
    %v2811 = vadd.f32 %v2809, %v36
    %v2812 = vadd.f32 %v2810, %v37
    %v2813 = vsel %vm306, %v2811, -inf
    %2814 = vmax.xlane.f32.xlu0 %v2813
    %v2815 = vpop.xlane.xlu0 %2814
    %v2816 = vsel %vm306, %v2812, -inf
    %2817 = vmax.xlane.f32.xlu0 %v2816
    %v2818 = vpop.xlane.xlu0 %2817
    %v2819 = vsub.f32 %v2811, %v2815
    %v2820 = vsub.f32 %v2812, %v2818
    %v2821 = vmul.f32 %v2819, 1.442695
    %v2822 = vpow.pop %v2821
    %v2823 = vmul.f32 %v2820, 1.442695
    %v2824 = vpow.pop %v2823
    %v2825 = vsel %vm306, %v2822, 0.0
    %2826 = vadd.xlane.f32.xlu0 %v2825
    %v2827 = vpop.xlane.xlu0 %2826
    %v2828 = vsel %vm306, %v2824, 0.0
    %2829 = vadd.xlane.f32.xlu0 %v2828
    %v2830 = vpop.xlane.xlu0 %2829
    %v2831 = vrcp.pop %v2827
    %v2832 = vmul.f32 %v2822, %v2831
    %v2833 = vrcp.pop %v2830
    %v2834 = vmul.f32 %v2824, %v2833
    %v2835 = vmul.f32 %v2752, %v1102
    %v2836 = vmul.f32 %v2755, %v1102
    %v2837 = vpack.c.bf16 %v2836, %v2835
    %v2838 = vpack.c.bf16 %v2834, %v2832
    %v2839 = vmul.f32 %v2687, %v49
    %v2840 = vmul.f32 %v2690, %v49
    %v2841 = vpack.c.bf16 %v2840, %v2839
    %v2843 = vsel %vm143, %v2841, 0
    %2845 = vmatprep.subr.bf16.mxu0 0
    %2846 = vmatpush1.bf16.xpose.msra.mxu0 %v2766
    %2847 = vmatprep.subr.bf16.mxu0 0
    %2848 = vmatpush1.bf16.xpose.msra.mxu0 0
    %2849 = vmatprep.subr.bf16.mxu0 0
    %2850 = vmatpush1.bf16.xpose.msra.mxu0 0
    %2851 = vmatprep.subr.bf16.mxu0 0
    %2852 = vmatpush1.bf16.xpose.msra.mxu0 0
    %2853 = vmatprep.subr.bf16.mxu0 0
    %2854 = vmatpush1.bf16.xpose.msra.mxu0 0
    %2855 = vmatprep.subr.bf16.mxu0 0
    %2856 = vmatpush1.bf16.xpose.msra.mxu0 0
    %2857 = vmatprep.subr.bf16.mxu0 0
    %2858 = vmatpush1.bf16.xpose.msra.mxu0 0
    %2859 = vmatprep.subr.bf16.mxu0 0
    %2860 = vmatpush1.bf16.xpose.msra.mxu0 0
    %2861 = vmatprep.subr.bf16.mxu0 0
    %2862 = vmatpush1.bf16.xpose.msra.mxu0 0
    %2863 = vmatprep.subr.bf16.mxu0 0
    %2864 = vmatpush1.bf16.xpose.msra.mxu0 0
    %2865 = vmatprep.subr.bf16.mxu0 0
    %2866 = vmatpush1.bf16.xpose.msra.mxu0 0
    %2867 = vmatprep.subr.bf16.mxu0 0
    %2868 = vmatpush1.bf16.xpose.msra.mxu0 0
    %2869 = vmatprep.subr.bf16.mxu0 0
    %2870 = vmatpush1.bf16.xpose.msra.mxu0 0
    %2871 = vmatprep.subr.bf16.mxu0 0
    %2872 = vmatpush1.bf16.xpose.msra.mxu0 0
    %2873 = vmatprep.subr.bf16.mxu0 0
    %2874 = vmatpush1.bf16.xpose.msra.mxu0 0
    %2875 = vmatprep.subr.bf16.mxu0 0
    %2876 = vmatpush1.bf16.xpose.msra.mxu0 0
    %2877 = vmatprep.mubr.bf16.mxu0 0
    %2878 = vmatmul.mubr.bf16.gmra.mrb[0].mxu0 %v2843
    %v2879 = vpop.f32.mrb[0].mxu0
    %v2880 = vadd.f32 0.0, %v2879
    %v2881 = vpop.f32.mrb[0].mxu0
    %v2882 = vpop.f32.mrb[0].mxu0
    %v2883 = vadd.f32 0.0, %v2882
    %v2884 = vpop.f32.mrb[0].mxu0
    %2885 = vdwg.mxu0
    %v2886 = vmul.f32 %v2880, 0.35355338
    %v2887 = vmul.f32 %v2883, 0.35355338
    %v2888 = vadd.f32 %v2886, %v36
    %v2889 = vadd.f32 %v2887, %v37
    %v2890 = vsel %vm306, %v2888, -inf
    %2891 = vmax.xlane.f32.xlu0 %v2890
    %v2892 = vpop.xlane.xlu0 %2891
    %v2893 = vsel %vm306, %v2889, -inf
    %2894 = vmax.xlane.f32.xlu0 %v2893
    %v2895 = vpop.xlane.xlu0 %2894
    %v2896 = vsub.f32 %v2888, %v2892
    %v2897 = vsub.f32 %v2889, %v2895
    %v2898 = vmul.f32 %v2896, 1.442695
    %v2899 = vpow.pop %v2898
    %v2900 = vmul.f32 %v2897, 1.442695
    %v2901 = vpow.pop %v2900
    %v2902 = vsel %vm306, %v2899, 0.0
    %2903 = vadd.xlane.f32.xlu0 %v2902
    %v2904 = vpop.xlane.xlu0 %2903
    %v2905 = vsel %vm306, %v2901, 0.0
    %2906 = vadd.xlane.f32.xlu0 %v2905
    %v2907 = vpop.xlane.xlu0 %2906
    %v2908 = vrcp.pop %v2904
    %v2909 = vmul.f32 %v2899, %v2908
    %v2910 = vrcp.pop %v2907
    %v2911 = vmul.f32 %v2901, %v2910
    %v2912 = vmul.f32 %v2752, %v1182
    %v2913 = vmul.f32 %v2755, %v1182
    %v2914 = vpack.c.bf16 %v2913, %v2912
    %v2915 = vpack.c.bf16 %v2911, %v2909
    %2917 = vrot.lane.b32.xlu0 %v2914, 96
    %v2918 = vpop.permute.xlu0 %2917
    %v2921 = vsel %vm306, %v2915, 0
    %2923 = vmatprep.subr.bf16.mxu0 0
    %2924 = vmatpush1.bf16.msra.mxu0 %v2918
    %2925 = vmatprep.subr.bf16.mxu0 0
    %2926 = vmatpush1.bf16.msra.mxu0 0
    %2927 = vmatprep.subr.bf16.mxu0 0
    %2928 = vmatpush1.bf16.msra.mxu0 0
    %2929 = vmatprep.subr.bf16.mxu0 0
    %2930 = vmatpush1.bf16.msra.mxu0 0
    %2931 = vmatprep.subr.bf16.mxu0 0
    %2932 = vmatpush1.bf16.msra.mxu0 0
    %2933 = vmatprep.subr.bf16.mxu0 0
    %2934 = vmatpush1.bf16.msra.mxu0 0
    %2935 = vmatprep.subr.bf16.mxu0 0
    %2936 = vmatpush1.bf16.msra.mxu0 0
    %2937 = vmatprep.subr.bf16.mxu0 0
    %2938 = vmatpush1.bf16.msra.mxu0 0
    %2939 = vmatprep.subr.bf16.mxu0 0
    %2940 = vmatpush1.bf16.msra.mxu0 0
    %2941 = vmatprep.subr.bf16.mxu0 0
    %2942 = vmatpush1.bf16.msra.mxu0 0
    %2943 = vmatprep.subr.bf16.mxu0 0
    %2944 = vmatpush1.bf16.msra.mxu0 0
    %2945 = vmatprep.subr.bf16.mxu0 0
    %2946 = vmatpush1.bf16.msra.mxu0 0
    %2947 = vmatprep.subr.bf16.mxu0 0
    %2948 = vmatpush1.bf16.msra.mxu0 0
    %2949 = vmatprep.subr.bf16.mxu0 0
    %2950 = vmatpush1.bf16.msra.mxu0 0
    %2951 = vmatprep.subr.bf16.mxu0 0
    %2952 = vmatpush1.bf16.msra.mxu0 0
    %2953 = vmatprep.subr.bf16.mxu0 0
    %2954 = vmatpush1.bf16.msra.mxu0 0
    %2955 = vmatprep.mubr.bf16.mxu0 0
    %2956 = vmatmul.mubr.bf16.gmra.mrb[0].mxu0 %v2921
    %v2957 = vpop.f32.mrb[0].mxu0
    %v2958 = vadd.f32 0.0, %v2957
    %v2959 = vpop.f32.mrb[0].mxu0
    %v2960 = vpop.f32.mrb[0].mxu0
    %v2961 = vadd.f32 0.0, %v2960
    %v2962 = vpop.f32.mrb[0].mxu0
    %2963 = vdwg.mxu0
    %2965 = vrot.lane.b32.xlu0 %v2837, 96
    %v2966 = vpop.permute.xlu0 %2965
    %v2969 = vsel %vm306, %v2838, 0
    %2971 = vmatprep.subr.bf16.mxu0 0
    %2972 = vmatpush1.bf16.msra.mxu0 %v2966
    %2973 = vmatprep.subr.bf16.mxu0 0
    %2974 = vmatpush1.bf16.msra.mxu0 0
    %2975 = vmatprep.subr.bf16.mxu0 0
    %2976 = vmatpush1.bf16.msra.mxu0 0
    %2977 = vmatprep.subr.bf16.mxu0 0
    %2978 = vmatpush1.bf16.msra.mxu0 0
    %2979 = vmatprep.subr.bf16.mxu0 0
    %2980 = vmatpush1.bf16.msra.mxu0 0
    %2981 = vmatprep.subr.bf16.mxu0 0
    %2982 = vmatpush1.bf16.msra.mxu0 0
    %2983 = vmatprep.subr.bf16.mxu0 0
    %2984 = vmatpush1.bf16.msra.mxu0 0
    %2985 = vmatprep.subr.bf16.mxu0 0
    %2986 = vmatpush1.bf16.msra.mxu0 0
    %2987 = vmatprep.subr.bf16.mxu0 0
    %2988 = vmatpush1.bf16.msra.mxu0 0
    %2989 = vmatprep.subr.bf16.mxu0 0
    %2990 = vmatpush1.bf16.msra.mxu0 0
    %2991 = vmatprep.subr.bf16.mxu0 0
    %2992 = vmatpush1.bf16.msra.mxu0 0
    %2993 = vmatprep.subr.bf16.mxu0 0
    %2994 = vmatpush1.bf16.msra.mxu0 0
    %2995 = vmatprep.subr.bf16.mxu0 0
    %2996 = vmatpush1.bf16.msra.mxu0 0
    %2997 = vmatprep.subr.bf16.mxu0 0
    %2998 = vmatpush1.bf16.msra.mxu0 0
    %2999 = vmatprep.subr.bf16.mxu0 0
    %3000 = vmatpush1.bf16.msra.mxu0 0
    %3001 = vmatprep.subr.bf16.mxu0 0
    %3002 = vmatpush1.bf16.msra.mxu0 0
    %3003 = vmatprep.mubr.bf16.mxu0 0
    %3004 = vmatmul.mubr.bf16.gmra.mrb[0].mxu0 %v2969
    %v3005 = vpop.f32.mrb[0].mxu0
    %v3006 = vadd.f32 %v2958, %v3005
    %v3007 = vpop.f32.mrb[0].mxu0
    %v3008 = vpop.f32.mrb[0].mxu0
    %v3009 = vadd.f32 %v2961, %v3008
    %v3010 = vpop.f32.mrb[0].mxu0
    %3011 = vdwg.mxu0
    %v3012 = vmul.f32 %v2687, %v54
    %v3013 = vmul.f32 %v2690, %v54
    %v3014 = vpack.c.bf16 %v3013, %v3012
    %v3016 = vsel %vm143, %v3014, 0
    %3018 = vmatprep.subr.bf16.mxu0 0
    %3019 = vmatpush1.bf16.xpose.msra.mxu0 %v2766
    %3020 = vmatprep.subr.bf16.mxu0 0
    %3021 = vmatpush1.bf16.xpose.msra.mxu0 0
    %3022 = vmatprep.subr.bf16.mxu0 0
    %3023 = vmatpush1.bf16.xpose.msra.mxu0 0
    %3024 = vmatprep.subr.bf16.mxu0 0
    %3025 = vmatpush1.bf16.xpose.msra.mxu0 0
    %3026 = vmatprep.subr.bf16.mxu0 0
    %3027 = vmatpush1.bf16.xpose.msra.mxu0 0
    %3028 = vmatprep.subr.bf16.mxu0 0
    %3029 = vmatpush1.bf16.xpose.msra.mxu0 0
    %3030 = vmatprep.subr.bf16.mxu0 0
    %3031 = vmatpush1.bf16.xpose.msra.mxu0 0
    %3032 = vmatprep.subr.bf16.mxu0 0
    %3033 = vmatpush1.bf16.xpose.msra.mxu0 0
    %3034 = vmatprep.subr.bf16.mxu0 0
    %3035 = vmatpush1.bf16.xpose.msra.mxu0 0
    %3036 = vmatprep.subr.bf16.mxu0 0
    %3037 = vmatpush1.bf16.xpose.msra.mxu0 0
    %3038 = vmatprep.subr.bf16.mxu0 0
    %3039 = vmatpush1.bf16.xpose.msra.mxu0 0
    %3040 = vmatprep.subr.bf16.mxu0 0
    %3041 = vmatpush1.bf16.xpose.msra.mxu0 0
    %3042 = vmatprep.subr.bf16.mxu0 0
    %3043 = vmatpush1.bf16.xpose.msra.mxu0 0
    %3044 = vmatprep.subr.bf16.mxu0 0
    %3045 = vmatpush1.bf16.xpose.msra.mxu0 0
    %3046 = vmatprep.subr.bf16.mxu0 0
    %3047 = vmatpush1.bf16.xpose.msra.mxu0 0
    %3048 = vmatprep.subr.bf16.mxu0 0
    %3049 = vmatpush1.bf16.xpose.msra.mxu0 0
    %3050 = vmatprep.mubr.bf16.mxu0 0
    %3051 = vmatmul.mubr.bf16.gmra.mrb[0].mxu0 %v3016
    %v3052 = vpop.f32.mrb[0].mxu0
    %v3053 = vadd.f32 0.0, %v3052
    %v3054 = vpop.f32.mrb[0].mxu0
    %v3055 = vpop.f32.mrb[0].mxu0
    %v3056 = vadd.f32 0.0, %v3055
    %v3057 = vpop.f32.mrb[0].mxu0
    %3058 = vdwg.mxu0
    %v3059 = vmul.f32 %v3053, 0.35355338
    %v3060 = vmul.f32 %v3056, 0.35355338
    %v3061 = vadd.f32 %v3059, %v36
    %v3062 = vadd.f32 %v3060, %v37
    %v3063 = vsel %vm306, %v3061, -inf
    %3064 = vmax.xlane.f32.xlu0 %v3063
    %v3065 = vpop.xlane.xlu0 %3064
    %v3066 = vsel %vm306, %v3062, -inf
    %3067 = vmax.xlane.f32.xlu0 %v3066
    %v3068 = vpop.xlane.xlu0 %3067
    %v3069 = vsub.f32 %v3061, %v3065
    %v3070 = vsub.f32 %v3062, %v3068
    %v3071 = vmul.f32 %v3069, 1.442695
    %v3072 = vpow.pop %v3071
    %v3073 = vmul.f32 %v3070, 1.442695
    %v3074 = vpow.pop %v3073
    %v3075 = vsel %vm306, %v3072, 0.0
    %3076 = vadd.xlane.f32.xlu0 %v3075
    %v3077 = vpop.xlane.xlu0 %3076
    %v3078 = vsel %vm306, %v3074, 0.0
    %3079 = vadd.xlane.f32.xlu0 %v3078
    %v3080 = vpop.xlane.xlu0 %3079
    %v3081 = vrcp.pop %v3077
    %v3082 = vmul.f32 %v3072, %v3081
    %v3083 = vrcp.pop %v3080
    %v3084 = vmul.f32 %v3074, %v3083
    %v3085 = vmul.f32 %v2752, %v1358
    %v3086 = vmul.f32 %v2755, %v1358
    %v3087 = vpack.c.bf16 %v3086, %v3085
    %v3088 = vpack.c.bf16 %v3084, %v3082
    %3090 = vrot.lane.b32.xlu0 %v3087, 96
    %v3091 = vpop.permute.xlu0 %3090
    %v3094 = vsel %vm306, %v3088, 0
    %3096 = vmatprep.subr.bf16.mxu0 0
    %3097 = vmatpush1.bf16.msra.mxu0 %v3091
    %3098 = vmatprep.subr.bf16.mxu0 0
    %3099 = vmatpush1.bf16.msra.mxu0 0
    %3100 = vmatprep.subr.bf16.mxu0 0
    %3101 = vmatpush1.bf16.msra.mxu0 0
    %3102 = vmatprep.subr.bf16.mxu0 0
    %3103 = vmatpush1.bf16.msra.mxu0 0
    %3104 = vmatprep.subr.bf16.mxu0 0
    %3105 = vmatpush1.bf16.msra.mxu0 0
    %3106 = vmatprep.subr.bf16.mxu0 0
    %3107 = vmatpush1.bf16.msra.mxu0 0
    %3108 = vmatprep.subr.bf16.mxu0 0
    %3109 = vmatpush1.bf16.msra.mxu0 0
    %3110 = vmatprep.subr.bf16.mxu0 0
    %3111 = vmatpush1.bf16.msra.mxu0 0
    %3112 = vmatprep.subr.bf16.mxu0 0
    %3113 = vmatpush1.bf16.msra.mxu0 0
    %3114 = vmatprep.subr.bf16.mxu0 0
    %3115 = vmatpush1.bf16.msra.mxu0 0
    %3116 = vmatprep.subr.bf16.mxu0 0
    %3117 = vmatpush1.bf16.msra.mxu0 0
    %3118 = vmatprep.subr.bf16.mxu0 0
    %3119 = vmatpush1.bf16.msra.mxu0 0
    %3120 = vmatprep.subr.bf16.mxu0 0
    %3121 = vmatpush1.bf16.msra.mxu0 0
    %3122 = vmatprep.subr.bf16.mxu0 0
    %3123 = vmatpush1.bf16.msra.mxu0 0
    %3124 = vmatprep.subr.bf16.mxu0 0
    %3125 = vmatpush1.bf16.msra.mxu0 0
    %3126 = vmatprep.subr.bf16.mxu0 0
    %3127 = vmatpush1.bf16.msra.mxu0 0
    %3128 = vmatprep.mubr.bf16.mxu0 0
    %3129 = vmatmul.mubr.bf16.gmra.mrb[0].mxu0 %v3094
    %v3130 = vpop.f32.mrb[0].mxu0
    %v3131 = vadd.f32 0.0, %v3130
    %v3132 = vpop.f32.mrb[0].mxu0
    %v3133 = vpop.f32.mrb[0].mxu0
    %v3134 = vadd.f32 0.0, %v3133
    %v3135 = vpop.f32.mrb[0].mxu0
    %3136 = vdwg.mxu0
    %v3137 = vadd.f32 %v3006, %v3131
    %v3138 = vadd.f32 %v3009, %v3134
    %v3139 = vmul.f32 %v2687, %v59
    %v3140 = vmul.f32 %v2690, %v59
    %v3141 = vpack.c.bf16 %v3140, %v3139
    %v3143 = vsel %vm143, %v3141, 0
    %3145 = vmatprep.subr.bf16.mxu0 0
    %3146 = vmatpush1.bf16.xpose.msra.mxu0 %v2766
    %3147 = vmatprep.subr.bf16.mxu0 0
    %3148 = vmatpush1.bf16.xpose.msra.mxu0 0
    %3149 = vmatprep.subr.bf16.mxu0 0
    %3150 = vmatpush1.bf16.xpose.msra.mxu0 0
    %3151 = vmatprep.subr.bf16.mxu0 0
    %3152 = vmatpush1.bf16.xpose.msra.mxu0 0
    %3153 = vmatprep.subr.bf16.mxu0 0
    %3154 = vmatpush1.bf16.xpose.msra.mxu0 0
    %3155 = vmatprep.subr.bf16.mxu0 0
    %3156 = vmatpush1.bf16.xpose.msra.mxu0 0
    %3157 = vmatprep.subr.bf16.mxu0 0
    %3158 = vmatpush1.bf16.xpose.msra.mxu0 0
    %3159 = vmatprep.subr.bf16.mxu0 0
    %3160 = vmatpush1.bf16.xpose.msra.mxu0 0
    %3161 = vmatprep.subr.bf16.mxu0 0
    %3162 = vmatpush1.bf16.xpose.msra.mxu0 0
    %3163 = vmatprep.subr.bf16.mxu0 0
    %3164 = vmatpush1.bf16.xpose.msra.mxu0 0
    %3165 = vmatprep.subr.bf16.mxu0 0
    %3166 = vmatpush1.bf16.xpose.msra.mxu0 0
    %3167 = vmatprep.subr.bf16.mxu0 0
    %3168 = vmatpush1.bf16.xpose.msra.mxu0 0
    %3169 = vmatprep.subr.bf16.mxu0 0
    %3170 = vmatpush1.bf16.xpose.msra.mxu0 0
    %3171 = vmatprep.subr.bf16.mxu0 0
    %3172 = vmatpush1.bf16.xpose.msra.mxu0 0
    %3173 = vmatprep.subr.bf16.mxu0 0
    %3174 = vmatpush1.bf16.xpose.msra.mxu0 0
    %3175 = vmatprep.subr.bf16.mxu0 0
    %3176 = vmatpush1.bf16.xpose.msra.mxu0 0
    %3177 = vmatprep.mubr.bf16.mxu0 0
    %3178 = vmatmul.mubr.bf16.gmra.mrb[0].mxu0 %v3143
    %v3179 = vpop.f32.mrb[0].mxu0
    %v3180 = vadd.f32 0.0, %v3179
    %v3181 = vpop.f32.mrb[0].mxu0
    %v3182 = vpop.f32.mrb[0].mxu0
    %v3183 = vadd.f32 0.0, %v3182
    %v3184 = vpop.f32.mrb[0].mxu0
    %3185 = vdwg.mxu0
    %v3186 = vmul.f32 %v3180, 0.35355338
    %v3187 = vmul.f32 %v3183, 0.35355338
    %v3188 = vadd.f32 %v3186, %v36
    %v3189 = vadd.f32 %v3187, %v37
    %v3190 = vsel %vm306, %v3188, -inf
    %3191 = vmax.xlane.f32.xlu0 %v3190
    %v3192 = vpop.xlane.xlu0 %3191
    %v3193 = vsel %vm306, %v3189, -inf
    %3194 = vmax.xlane.f32.xlu0 %v3193
    %v3195 = vpop.xlane.xlu0 %3194
    %v3196 = vsub.f32 %v3188, %v3192
    %v3197 = vsub.f32 %v3189, %v3195
    %v3198 = vmul.f32 %v3196, 1.442695
    %v3199 = vpow.pop %v3198
    %v3200 = vmul.f32 %v3197, 1.442695
    %v3201 = vpow.pop %v3200
    %v3202 = vsel %vm306, %v3199, 0.0
    %3203 = vadd.xlane.f32.xlu0 %v3202
    %v3204 = vpop.xlane.xlu0 %3203
    %v3205 = vsel %vm306, %v3201, 0.0
    %3206 = vadd.xlane.f32.xlu0 %v3205
    %v3207 = vpop.xlane.xlu0 %3206
    %v3208 = vrcp.pop %v3204
    %v3209 = vmul.f32 %v3199, %v3208
    %v3210 = vrcp.pop %v3207
    %v3211 = vmul.f32 %v3201, %v3210
    %v3212 = vmul.f32 %v2752, %v1488
    %v3213 = vmul.f32 %v2755, %v1488
    %v3214 = vpack.c.bf16 %v3213, %v3212
    %v3215 = vpack.c.bf16 %v3211, %v3209
    %3217 = vrot.lane.b32.xlu0 %v3214, 96
    %v3218 = vpop.permute.xlu0 %3217
    %v3221 = vsel %vm306, %v3215, 0
    %3223 = vmatprep.subr.bf16.mxu0 0
    %3224 = vmatpush1.bf16.msra.mxu0 %v3218
    %3225 = vmatprep.subr.bf16.mxu0 0
    %3226 = vmatpush1.bf16.msra.mxu0 0
    %3227 = vmatprep.subr.bf16.mxu0 0
    %3228 = vmatpush1.bf16.msra.mxu0 0
    %3229 = vmatprep.subr.bf16.mxu0 0
    %3230 = vmatpush1.bf16.msra.mxu0 0
    %3231 = vmatprep.subr.bf16.mxu0 0
    %3232 = vmatpush1.bf16.msra.mxu0 0
    %3233 = vmatprep.subr.bf16.mxu0 0
    %3234 = vmatpush1.bf16.msra.mxu0 0
    %3235 = vmatprep.subr.bf16.mxu0 0
    %3236 = vmatpush1.bf16.msra.mxu0 0
    %3237 = vmatprep.subr.bf16.mxu0 0
    %3238 = vmatpush1.bf16.msra.mxu0 0
    %3239 = vmatprep.subr.bf16.mxu0 0
    %3240 = vmatpush1.bf16.msra.mxu0 0
    %3241 = vmatprep.subr.bf16.mxu0 0
    %3242 = vmatpush1.bf16.msra.mxu0 0
    %3243 = vmatprep.subr.bf16.mxu0 0
    %3244 = vmatpush1.bf16.msra.mxu0 0
    %3245 = vmatprep.subr.bf16.mxu0 0
    %3246 = vmatpush1.bf16.msra.mxu0 0
    %3247 = vmatprep.subr.bf16.mxu0 0
    %3248 = vmatpush1.bf16.msra.mxu0 0
    %3249 = vmatprep.subr.bf16.mxu0 0
    %3250 = vmatpush1.bf16.msra.mxu0 0
    %3251 = vmatprep.subr.bf16.mxu0 0
    %3252 = vmatpush1.bf16.msra.mxu0 0
    %3253 = vmatprep.subr.bf16.mxu0 0
    %3254 = vmatpush1.bf16.msra.mxu0 0
    %3255 = vmatprep.mubr.bf16.mxu0 0
    %3256 = vmatmul.mubr.bf16.gmra.mrb[0].mxu0 %v3221
    %v3257 = vpop.f32.mrb[0].mxu0
    %v3258 = vadd.f32 0.0, %v3257
    %v3259 = vpop.f32.mrb[0].mxu0
    %v3260 = vpop.f32.mrb[0].mxu0
    %v3261 = vadd.f32 0.0, %v3260
    %v3262 = vpop.f32.mrb[0].mxu0
    %3263 = vdwg.mxu0
    %v3264 = vadd.f32 %v3137, %v3258
    %v3265 = vadd.f32 %v3138, %v3261
    %3268 = vrot.lane.b32.xlu0 %v2909, 16
    %v3269 = vpop.permute.xlu0 %3268
    %3270 = vrot.lane.b32.xlu0 %v2911, 16
    %v3271 = vpop.permute.xlu0 %3270
    %3276 = vrot.lane.b32.xlu0 %v3082, 32
    %v3277 = vpop.permute.xlu0 %3276
    %3278 = vrot.lane.b32.xlu0 %v3084, 32
    %v3279 = vpop.permute.xlu0 %3278
    %3284 = vrot.lane.b32.xlu0 %v3209, 48
    %v3285 = vpop.permute.xlu0 %3284
    %3286 = vrot.lane.b32.xlu0 %v3211, 48
    %v3287 = vpop.permute.xlu0 %3286
    %v3290 = vsel %vm306, %v2832, %v3269
    %v3291 = vsel %vm306, %v2834, %v3271
    %v3292 = vsel %vm143, %v3290, %v3277
    %v3293 = vsel %vm143, %v3291, %v3279
    %v3294 = vsel %vm1572, %v3292, %v3285
    %v3295 = vsel %vm1572, %v3293, %v3287
    %s3296 = scalar_lea.vmem %s10, 16
    %3297 = vst.msk [vmem:[%s3296] sm:$0xff] %vm1575, %v3294
    %3298 = vst.msk [vmem:[%s3296 + $0x8] sm:$0xff] %vm1575, %v3295
    %v3299 = vld [vmem:[%s6 + $0xe4] sm:$0xf]
    %v3300 = vld [vmem:[%s6 + $0xe8] sm:$0xf]
    %v3301 = vld [vmem:[%s6 + $0xec] sm:$0xf]
    %v3302 = vld [vmem:[%s6 + $0xf0] sm:$0xf]
    %v3303 = vpack.c.bf16 %v3265, %v3264
    %s3304 = scalar_lea.vmem %s8, 24
    %v3305 = vld [vmem:[%s3304] sm:$0x3]
    %v3307 = vlaneseq
    %v3308 = vshrl.u32 %v3307, 7
    %v3309 = vsub.s32 0, %v3308
    %v3310 = vrot.slane %v3305, %v3309
    %v3316 = vunpack.c.l.b16 %v3299
    %v3317 = vunpack.c.l.b16 %v3300
    %v3318 = vunpack.c.l.b16 %v3301
    %v3319 = vunpack.c.l.b16 %v3302
    %v3320 = vpack.c.b16 %v3317, %v3316
    %v3321 = vpack.c.b16 %v3319, %v3318
    %v3325 = vsel %vm143, %v3303, 0
    %3327 = vmatprep.subr.bf16.mxu0 0
    %3328 = vmatpush1.bf16.msra.mxu0 %v3320
    %3329 = vmatprep.subr.bf16.mxu0 0
    %3330 = vmatpush1.bf16.msra.mxu0 %v3321
    %3331 = vmatprep.subr.bf16.mxu0 0
    %3332 = vmatpush1.bf16.msra.mxu0 0
    %3333 = vmatprep.subr.bf16.mxu0 0
    %3334 = vmatpush1.bf16.msra.mxu0 0
    %3335 = vmatprep.subr.bf16.mxu0 0
    %3336 = vmatpush1.bf16.msra.mxu0 0
    %3337 = vmatprep.subr.bf16.mxu0 0
    %3338 = vmatpush1.bf16.msra.mxu0 0
    %3339 = vmatprep.subr.bf16.mxu0 0
    %3340 = vmatpush1.bf16.msra.mxu0 0
    %3341 = vmatprep.subr.bf16.mxu0 0
    %3342 = vmatpush1.bf16.msra.mxu0 0
    %3343 = vmatprep.subr.bf16.mxu0 0
    %3344 = vmatpush1.bf16.msra.mxu0 0
    %3345 = vmatprep.subr.bf16.mxu0 0
    %3346 = vmatpush1.bf16.msra.mxu0 0
    %3347 = vmatprep.subr.bf16.mxu0 0
    %3348 = vmatpush1.bf16.msra.mxu0 0
    %3349 = vmatprep.subr.bf16.mxu0 0
    %3350 = vmatpush1.bf16.msra.mxu0 0
    %3351 = vmatprep.subr.bf16.mxu0 0
    %3352 = vmatpush1.bf16.msra.mxu0 0
    %3353 = vmatprep.subr.bf16.mxu0 0
    %3354 = vmatpush1.bf16.msra.mxu0 0
    %3355 = vmatprep.subr.bf16.mxu0 0
    %3356 = vmatpush1.bf16.msra.mxu0 0
    %3357 = vmatprep.subr.bf16.mxu0 0
    %3358 = vmatpush1.bf16.msra.mxu0 0
    %3359 = vmatprep.mubr.bf16.mxu0 0
    %3360 = vmatmul.mubr.bf16.gmra.mrb[0].mxu0 %v3325
    %v3361 = vpop.f32.mrb[0].mxu0
    %v3362 = vadd.f32 %v3310, %v3361
    %v3363 = vpop.f32.mrb[0].mxu0
    %v3364 = vpop.f32.mrb[0].mxu0
    %v3365 = vadd.f32 %v3310, %v3364
    %v3366 = vpop.f32.mrb[0].mxu0
    %3367 = vdwg.mxu0
    %v3368 = vadd.f32 %v3362, %v2586
    %v3369 = vadd.f32 %v3365, %v2587
    %v3370 = vsel %vm143, %v3368, 0.0
    %3371 = vadd.xlane.f32.xlu0 %v3370
    %v3372 = vpop.xlane.xlu0 %3371
    %v3373 = vsel %vm143, %v3369, 0.0
    %3374 = vadd.xlane.f32.xlu0 %v3373
    %v3375 = vpop.xlane.xlu0 %3374
    %v3376 = vmul.f32 %v3372, %v150
    %v3377 = vmul.f32 %v3375, %v150
    %v3378 = vsub.f32 %v3368, %v3376
    %v3379 = vsub.f32 %v3369, %v3377
    %v3380 = vmul.f32 %v3378, %v3378
    %v3381 = vmul.f32 %v3379, %v3379
    %v3382 = vsel %vm143, %v3380, 0.0
    %3383 = vadd.xlane.f32.xlu0 %v3382
    %v3384 = vpop.xlane.xlu0 %3383
    %v3385 = vsel %vm143, %v3381, 0.0
    %3386 = vadd.xlane.f32.xlu0 %v3385
    %v3387 = vpop.xlane.xlu0 %3386
    %v3388 = vmul.f32 %v3384, %v150
    %v3389 = vmul.f32 %v3387, %v150
    %v3390 = vadd.f32 %v3388, 1e-05
    %v3391 = vadd.f32 %v3389, 1e-05
    %v3392 = vrsqrt.pop %v3390
    %v3393 = vrsqrt.pop %v3391
    %v3394 = vmul.f32 %v3378, %v3392
    %v3395 = vmul.f32 %v3379, %v3393
    %s3396 = scalar_lea.vmem %s2, 80
    %v3397 = vld [vmem:[%s3396] sm:$0xff]
    %v3398 = vld [vmem:[%s3396 + $0x8] sm:$0xff]
    %v3399 = vmul.f32 %v3394, %v3397
    %v3400 = vmul.f32 %v3395, %v3398
    %s3401 = scalar_lea.vmem %s3, 80
    %v3402 = vld [vmem:[%s3401] sm:$0xff]
    %v3403 = vld [vmem:[%s3401 + $0x8] sm:$0xff]
    %v3404 = vadd.f32 %v3399, %v3402
    %v3405 = vadd.f32 %v3400, %v3403
    %v3406 = vld [vmem:[%s7 + $0x20] sm:$0xff]
    %v3407 = vld [vmem:[%s7 + $0x28] sm:$0xff]
    %v3408 = vld [vmem:[%s7 + $0x30] sm:$0xff]
    %v3409 = vld [vmem:[%s7 + $0x38] sm:$0xff]
    %v3410 = vpack.c.bf16 %v3405, %v3404
    %s3411 = scalar_lea.vmem %s8, 26
    %v3412 = vld [vmem:[%s3411] sm:$0x3]
    %v3414 = vlaneseq
    %v3415 = vshrl.u32 %v3414, 7
    %v3416 = vsub.s32 0, %v3415
    %v3417 = vrot.slane %v3412, %v3416
    %v3418 = vlaneseq
    %v3419 = vshrl.u32 %v3418, 7
    %v3420 = vsub.s32 1, %v3419
    %v3421 = vrot.slane %v3412, %v3420
    %v3428 = vunpack.c.l.b16 %v3406
    %v3429 = vunpack.c.h.b16 %v3406
    %v3430 = vunpack.c.l.b16 %v3407
    %v3431 = vunpack.c.h.b16 %v3407
    %v3432 = vunpack.c.l.b16 %v3408
    %v3433 = vunpack.c.h.b16 %v3408
    %v3434 = vunpack.c.l.b16 %v3409
    %v3435 = vunpack.c.h.b16 %v3409
    %v3436 = vpack.c.b16 %v3430, %v3428
    %v3437 = vpack.c.b16 %v3431, %v3429
    %v3438 = vpack.c.b16 %v3434, %v3432
    %v3439 = vpack.c.b16 %v3435, %v3433
    %v3445 = vsel %vm143, %v3410, 0
    %3447 = vmatprep.subr.bf16.mxu0 %v3437
    %3448 = vmatpush1.bf16.msra.mxu0 %v3436
    %3449 = vmatprep.subr.bf16.mxu0 %v3439
    %3450 = vmatpush1.bf16.msra.mxu0 %v3438
    %3451 = vmatprep.subr.bf16.mxu0 0
    %3452 = vmatpush1.bf16.msra.mxu0 0
    %3453 = vmatprep.subr.bf16.mxu0 0
    %3454 = vmatpush1.bf16.msra.mxu0 0
    %3455 = vmatprep.subr.bf16.mxu0 0
    %3456 = vmatpush1.bf16.msra.mxu0 0
    %3457 = vmatprep.subr.bf16.mxu0 0
    %3458 = vmatpush1.bf16.msra.mxu0 0
    %3459 = vmatprep.subr.bf16.mxu0 0
    %3460 = vmatpush1.bf16.msra.mxu0 0
    %3461 = vmatprep.subr.bf16.mxu0 0
    %3462 = vmatpush1.bf16.msra.mxu0 0
    %3463 = vmatprep.subr.bf16.mxu0 0
    %3464 = vmatpush1.bf16.msra.mxu0 0
    %3465 = vmatprep.subr.bf16.mxu0 0
    %3466 = vmatpush1.bf16.msra.mxu0 0
    %3467 = vmatprep.subr.bf16.mxu0 0
    %3468 = vmatpush1.bf16.msra.mxu0 0
    %3469 = vmatprep.subr.bf16.mxu0 0
    %3470 = vmatpush1.bf16.msra.mxu0 0
    %3471 = vmatprep.subr.bf16.mxu0 0
    %3472 = vmatpush1.bf16.msra.mxu0 0
    %3473 = vmatprep.subr.bf16.mxu0 0
    %3474 = vmatpush1.bf16.msra.mxu0 0
    %3475 = vmatprep.subr.bf16.mxu0 0
    %3476 = vmatpush1.bf16.msra.mxu0 0
    %3477 = vmatprep.subr.bf16.mxu0 0
    %3478 = vmatpush1.bf16.msra.mxu0 0
    %3479 = vmatprep.mubr.bf16.mxu0 0
    %3480 = vmatmul.mubr.bf16.gmra.mrb[0].mxu0 %v3445
    %v3481 = vpop.f32.mrb[0].mxu0
    %v3482 = vadd.f32 %v3417, %v3481
    %v3483 = vpop.f32.mrb[0].mxu0
    %v3484 = vadd.f32 %v3421, %v3483
    %v3485 = vpop.f32.mrb[0].mxu0
    %v3486 = vadd.f32 %v3417, %v3485
    %v3487 = vpop.f32.mrb[0].mxu0
    %v3488 = vadd.f32 %v3421, %v3487
    %3489 = vdwg.mxu0
    %v3490 = vxor.u32 %v3482, 2147483648
    %v3491 = vxor.u32 %v3486, 2147483648
    %v3492 = vmul.f32 %v3490, 1.442695
    %v3493 = vpow.pop %v3492
    %v3494 = vmul.f32 %v3491, 1.442695
    %v3495 = vpow.pop %v3494
    %v3496 = vadd.f32 %v3493, 1.0
    %v3497 = vadd.f32 %v3495, 1.0
    %v3498 = vrcp.pop %v3496
    %v3499 = vmul.f32 1.0, %v3498
    %v3500 = vrcp.pop %v3497
    %v3501 = vmul.f32 1.0, %v3500
    %v3502 = vmul.f32 %v3482, %v3499
    %v3503 = vmul.f32 %v3486, %v3501
    %v3504 = vmul.f32 %v3502, %v3484
    %v3505 = vmul.f32 %v3503, %v3488
    %v3506 = vld [vmem:[%s6 + $0xf4] sm:$0xf]
    %v3507 = vld [vmem:[%s6 + $0xf8] sm:$0xf]
    %v3508 = vld [vmem:[%s6 + $0xfc] sm:$0xf]
    %v3509 = vld [vmem:[%s6 + $0x100] sm:$0xf]
    %v3510 = vld [vmem:[%s6 + $0x104] sm:$0xf]
    %v3511 = vld [vmem:[%s6 + $0x108] sm:$0xf]
    %v3512 = vld [vmem:[%s6 + $0x10c] sm:$0xf]
    %v3513 = vld [vmem:[%s6 + $0x110] sm:$0xf]
    %v3514 = vld [vmem:[%s6 + $0x114] sm:$0xf]
    %v3515 = vld [vmem:[%s6 + $0x118] sm:$0xf]
    %v3516 = vld [vmem:[%s6 + $0x11c] sm:$0xf]
    %v3517 = vld [vmem:[%s6 + $0x120] sm:$0xf]
    %v3518 = vld [vmem:[%s6 + $0x124] sm:$0xf]
    %v3519 = vld [vmem:[%s6 + $0x128] sm:$0xf]
    %v3520 = vld [vmem:[%s6 + $0x12c] sm:$0xf]
    %v3521 = vld [vmem:[%s6 + $0x130] sm:$0xf]
    %v3522 = vpack.c.bf16 %v3505, %v3504
    %s3523 = scalar_lea.vmem %s8, 28
    %v3524 = vld [vmem:[%s3523] sm:$0x3]
    %v3526 = vlaneseq
    %v3527 = vshrl.u32 %v3526, 7
    %v3528 = vsub.s32 0, %v3527
    %v3529 = vrot.slane %v3524, %v3528
    %v3547 = vunpack.c.l.b16 %v3506
    %v3548 = vunpack.c.l.b16 %v3507
    %v3549 = vunpack.c.l.b16 %v3508
    %v3550 = vunpack.c.l.b16 %v3509
    %v3551 = vunpack.c.l.b16 %v3510
    %v3552 = vunpack.c.l.b16 %v3511
    %v3553 = vunpack.c.l.b16 %v3512
    %v3554 = vunpack.c.l.b16 %v3513
    %v3555 = vunpack.c.l.b16 %v3514
    %v3556 = vunpack.c.l.b16 %v3515
    %v3557 = vunpack.c.l.b16 %v3516
    %v3558 = vunpack.c.l.b16 %v3517
    %v3559 = vunpack.c.l.b16 %v3518
    %v3560 = vunpack.c.l.b16 %v3519
    %v3561 = vunpack.c.l.b16 %v3520
    %v3562 = vunpack.c.l.b16 %v3521
    %v3563 = vpack.c.b16 %v3548, %v3547
    %v3564 = vpack.c.b16 %v3550, %v3549
    %v3565 = vpack.c.b16 %v3552, %v3551
    %v3566 = vpack.c.b16 %v3554, %v3553
    %v3567 = vpack.c.b16 %v3556, %v3555
    %v3568 = vpack.c.b16 %v3558, %v3557
    %v3569 = vpack.c.b16 %v3560, %v3559
    %v3570 = vpack.c.b16 %v3562, %v3561
    %3579 = vmatprep.subr.bf16.mxu0 0
    %3580 = vmatpush1.bf16.msra.mxu0 %v3563
    %3581 = vmatprep.subr.bf16.mxu0 0
    %3582 = vmatpush1.bf16.msra.mxu0 %v3564
    %3583 = vmatprep.subr.bf16.mxu0 0
    %3584 = vmatpush1.bf16.msra.mxu0 %v3565
    %3585 = vmatprep.subr.bf16.mxu0 0
    %3586 = vmatpush1.bf16.msra.mxu0 %v3566
    %3587 = vmatprep.subr.bf16.mxu0 0
    %3588 = vmatpush1.bf16.msra.mxu0 %v3567
    %3589 = vmatprep.subr.bf16.mxu0 0
    %3590 = vmatpush1.bf16.msra.mxu0 %v3568
    %3591 = vmatprep.subr.bf16.mxu0 0
    %3592 = vmatpush1.bf16.msra.mxu0 %v3569
    %3593 = vmatprep.subr.bf16.mxu0 0
    %3594 = vmatpush1.bf16.msra.mxu0 %v3570
    %3595 = vmatprep.subr.bf16.mxu0 0
    %3596 = vmatpush1.bf16.msra.mxu0 0
    %3597 = vmatprep.subr.bf16.mxu0 0
    %3598 = vmatpush1.bf16.msra.mxu0 0
    %3599 = vmatprep.subr.bf16.mxu0 0
    %3600 = vmatpush1.bf16.msra.mxu0 0
    %3601 = vmatprep.subr.bf16.mxu0 0
    %3602 = vmatpush1.bf16.msra.mxu0 0
    %3603 = vmatprep.subr.bf16.mxu0 0
    %3604 = vmatpush1.bf16.msra.mxu0 0
    %3605 = vmatprep.subr.bf16.mxu0 0
    %3606 = vmatpush1.bf16.msra.mxu0 0
    %3607 = vmatprep.subr.bf16.mxu0 0
    %3608 = vmatpush1.bf16.msra.mxu0 0
    %3609 = vmatprep.subr.bf16.mxu0 0
    %3610 = vmatpush1.bf16.msra.mxu0 0
    %3611 = vmatprep.mubr.bf16.mxu0 0
    %3612 = vmatmul.mubr.bf16.gmra.mrb[0].mxu0 %v3522
    %v3613 = vpop.f32.mrb[0].mxu0
    %v3614 = vadd.f32 %v3529, %v3613
    %v3615 = vpop.f32.mrb[0].mxu0
    %v3616 = vpop.f32.mrb[0].mxu0
    %v3617 = vadd.f32 %v3529, %v3616
    %v3618 = vpop.f32.mrb[0].mxu0
    %3619 = vdwg.mxu0
    %v3620 = vadd.f32 %v3614, %v3368
    %v3621 = vadd.f32 %v3617, %v3369
    %v3622 = vsel %vm143, %v3620, 0.0
    %3623 = vadd.xlane.f32.xlu0 %v3622
    %v3624 = vpop.xlane.xlu0 %3623
    %v3625 = vsel %vm143, %v3621, 0.0
    %3626 = vadd.xlane.f32.xlu0 %v3625
    %v3627 = vpop.xlane.xlu0 %3626
    %v3628 = vmul.f32 %v3624, %v150
    %v3629 = vmul.f32 %v3627, %v150
    %v3630 = vsub.f32 %v3620, %v3628
    %v3631 = vsub.f32 %v3621, %v3629
    %v3632 = vmul.f32 %v3630, %v3630
    %v3633 = vmul.f32 %v3631, %v3631
    %v3634 = vsel %vm143, %v3632, 0.0
    %3635 = vadd.xlane.f32.xlu0 %v3634
    %v3636 = vpop.xlane.xlu0 %3635
    %v3637 = vsel %vm143, %v3633, 0.0
    %3638 = vadd.xlane.f32.xlu0 %v3637
    %v3639 = vpop.xlane.xlu0 %3638
    %v3640 = vmul.f32 %v3636, %v150
    %v3641 = vmul.f32 %v3639, %v150
    %v3642 = vadd.f32 %v3640, 1e-05
    %v3643 = vadd.f32 %v3641, 1e-05
    %v3644 = vrsqrt.pop %v3642
    %v3645 = vrsqrt.pop %v3643
    %v3646 = vmul.f32 %v3630, %v3644
    %v3647 = vmul.f32 %v3631, %v3645
    %s3648 = scalar_lea.vmem %s2, 96
    %v3649 = vld [vmem:[%s3648] sm:$0xff]
    %v3650 = vld [vmem:[%s3648 + $0x8] sm:$0xff]
    %v3651 = vmul.f32 %v3646, %v3649
    %v3652 = vmul.f32 %v3647, %v3650
    %s3653 = scalar_lea.vmem %s3, 96
    %v3654 = vld [vmem:[%s3653] sm:$0xff]
    %v3655 = vld [vmem:[%s3653 + $0x8] sm:$0xff]
    %v3656 = vadd.f32 %v3651, %v3654
    %v3657 = vadd.f32 %v3652, %v3655
    %v3658 = vld [vmem:[%s6 + $0x134] sm:$0xf]
    %v3659 = vld [vmem:[%s6 + $0x138] sm:$0xf]
    %v3660 = vld [vmem:[%s6 + $0x13c] sm:$0xf]
    %v3661 = vld [vmem:[%s6 + $0x140] sm:$0xf]
    %v3662 = vpack.c.bf16 %v3657, %v3656
    %s3663 = scalar_lea.vmem %s8, 30
    %v3664 = vld [vmem:[%s3663] sm:$0x3]
    %v3666 = vlaneseq
    %v3667 = vshrl.u32 %v3666, 7
    %v3668 = vsub.s32 0, %v3667
    %v3669 = vrot.slane %v3664, %v3668
    %v3675 = vunpack.c.l.b16 %v3658
    %v3676 = vunpack.c.l.b16 %v3659
    %v3677 = vunpack.c.l.b16 %v3660
    %v3678 = vunpack.c.l.b16 %v3661
    %v3679 = vpack.c.b16 %v3676, %v3675
    %v3680 = vpack.c.b16 %v3678, %v3677
    %v3684 = vsel %vm143, %v3662, 0
    %3686 = vmatprep.subr.bf16.mxu0 0
    %3687 = vmatpush1.bf16.msra.mxu0 %v3679
    %3688 = vmatprep.subr.bf16.mxu0 0
    %3689 = vmatpush1.bf16.msra.mxu0 %v3680
    %3690 = vmatprep.subr.bf16.mxu0 0
    %3691 = vmatpush1.bf16.msra.mxu0 0
    %3692 = vmatprep.subr.bf16.mxu0 0
    %3693 = vmatpush1.bf16.msra.mxu0 0
    %3694 = vmatprep.subr.bf16.mxu0 0
    %3695 = vmatpush1.bf16.msra.mxu0 0
    %3696 = vmatprep.subr.bf16.mxu0 0
    %3697 = vmatpush1.bf16.msra.mxu0 0
    %3698 = vmatprep.subr.bf16.mxu0 0
    %3699 = vmatpush1.bf16.msra.mxu0 0
    %3700 = vmatprep.subr.bf16.mxu0 0
    %3701 = vmatpush1.bf16.msra.mxu0 0
    %3702 = vmatprep.subr.bf16.mxu0 0
    %3703 = vmatpush1.bf16.msra.mxu0 0
    %3704 = vmatprep.subr.bf16.mxu0 0
    %3705 = vmatpush1.bf16.msra.mxu0 0
    %3706 = vmatprep.subr.bf16.mxu0 0
    %3707 = vmatpush1.bf16.msra.mxu0 0
    %3708 = vmatprep.subr.bf16.mxu0 0
    %3709 = vmatpush1.bf16.msra.mxu0 0
    %3710 = vmatprep.subr.bf16.mxu0 0
    %3711 = vmatpush1.bf16.msra.mxu0 0
    %3712 = vmatprep.subr.bf16.mxu0 0
    %3713 = vmatpush1.bf16.msra.mxu0 0
    %3714 = vmatprep.subr.bf16.mxu0 0
    %3715 = vmatpush1.bf16.msra.mxu0 0
    %3716 = vmatprep.subr.bf16.mxu0 0
    %3717 = vmatpush1.bf16.msra.mxu0 0
    %3718 = vmatprep.mubr.bf16.mxu0 0
    %3719 = vmatmul.mubr.bf16.gmra.mrb[0].mxu0 %v3684
    %v3720 = vpop.f32.mrb[0].mxu0
    %v3721 = vadd.f32 %v3669, %v3720
    %v3722 = vpop.f32.mrb[0].mxu0
    %v3723 = vpop.f32.mrb[0].mxu0
    %v3724 = vadd.f32 %v3669, %v3723
    %v3725 = vpop.f32.mrb[0].mxu0
    %3726 = vdwg.mxu0
    %v3727 = vld [vmem:[%s4] sm:$0xff]
    %v3728 = vld [vmem:[%s4 + $0x8] sm:$0xff]
    %v3729 = vmul.f32 %v3721, %v3727
    %v3730 = vmul.f32 %v3724, %v3728
    %vm3731 = vcmask 195584
    %3732 = vst.msk [vmem:[#allocation2] sm:$0xff] %vm3731, %v3729
    %3733 = vst.msk [vmem:[#allocation2 + $0x8] sm:$0xff] %vm3731, %v3730
    // Predicated region
    $region38: #{_lambda_.1} parent=1 // pred_check
      _
    $region39: #{_lambda_.1} parent=1 // pred_check_branch
      %3735 = sbr.rel (0) target = $region41
    $region40: #{_lambda_.1} parent=1 // pred_region
      %s3737 = ssub.s32 256, 256
      %3738 = vsyncadd [#allocation3], %s3737
      %s3739 = sshll.u32 [#allocation2], 4
      %s3740 = int_to_ptr.vmem [resolvable:$true] %s3739
      %3745 = dma.vmem_to_hbm [thread:$0]  %s3740, 256, %s9, [#allocation3], 128, 128, 8
    $region41: #{_lambda_.1} parent=1 // pred_fallthru
      _
    // Predicated region
    $region42: #{_lambda_.1} parent=1 // pred_check
      _
    $region43: #{_lambda_.1} parent=1 // pred_check_branch
      %3747 = sbr.rel (0) target = $region45
    $region44: #{_lambda_.1} parent=1 // pred_region
      _
    $region45: #{_lambda_.1} parent=1 // pred_fallthru
      _
    // Predicated region
    $region46: #{_lambda_.1} parent=1 // pred_check
      _
    $region47: #{_lambda_.1} parent=1 // pred_check_branch
      %3749 = sbr.rel (0) target = $region49
    $region48: #{_lambda_.1} parent=1 // pred_region
      %3750 = dma.done [#allocation3], 256
    $region49: #{_lambda_.1} parent=1 // pred_fallthru
      _
    // Predicated region
    $region50: #{_lambda_.1} parent=1 // pred_check
      _
    $region51: #{_lambda_.1} parent=1 // pred_check_branch
      %3752 = sbr.rel (0) target = $region53
    $region52: #{_lambda_.1} parent=1 // pred_region
      _
    $region53: #{_lambda_.1} parent=1 // pred_fallthru
      _
    %3753 = vsyncpa [#allocation3], 1

</llo_original>
